<compile_context>
chip_gen: v6e
topology: v6e:2x2x1
jax: 0.10.0
libtpu: 0.0.40
codegen_flags: <defaults>
</compile_context>

<pallas_src>
import functools
import math

import jax
import jax.numpy as jnp
from jax.experimental import pallas as pl
from jax.experimental.pallas import tpu as pltpu


# ----------------------------------------------------------------------------
# helpers
# ----------------------------------------------------------------------------
def _round_up(x, m):
    return ((x + m - 1) // m) * m


def _cdiv(a, b):
    return -(-a // b)


def _vmem_block_bytes(block_shape, itemsize):
    """Real VMEM footprint of a block: last dim padded to 128 lanes, second-to-
    last dim padded to the native sublane tile (8 for f32, 16 for bf16)."""
    shape = tuple(int(d) for d in block_shape)
    if len(shape) == 1:
        shape = (1,) + shape
    *lead, b, c = shape
    lead_n = 1
    for d in lead:
        lead_n *= d
    sub = 8 * (4 // itemsize)
    return lead_n * _round_up(max(b, 1), sub) * _round_up(max(c, 1), 128) * itemsize


def _vmem_capacity_bytes():
    try:
        return int(pltpu.get_tpu_info().vmem_capacity_bytes)
    except Exception:
        return 64 << 20            # conservative (v7x-sized) fallback


def _is_v5e():
    try:
        kind = jax.devices()[0].device_kind.lower()
    except Exception:
        return False
    return ("v5 lite" in kind) or ("v5e" in kind) or ("v5litepod" in kind)


def _chunk_rows(th, wout_pad):
    # ~256 output pixels per MXU dot, but at most ~8 unrolled chunks.
    ch = max(1, min(th, max(1, 256 // max(wout_pad, 1))))
    ch = max(ch, _cdiv(th, 8))
    return min(ch, th)


def _choose_tile_h(hout, n_batch, wp_pad, wout_pad, cin_pad, cout_pad, k,
                   stride, vmem_cap):
    """Largest output-row tile whose (padded, double-buffered) working set fits
    a generation-aware VMEM budget, capped so the grid has >= 4 steps."""
    budget = (80 << 20) if vmem_cap >= (100 << 20) else (24 << 20)
    cands = [t for t in (256, 128, 64, 32, 16, 8, 4, 2, 1) if t <= hout] or [1]

    def working_set(th):
        slab_h = (th - 1) * stride + k
        in_b = _vmem_block_bytes((1, slab_h, wp_pad, cin_pad), 2)
        out_b = _vmem_block_bytes((1, th, wout_pad, cout_pad), 2)
        w_b = _vmem_block_bytes((k * k * cin_pad, cout_pad), 2)
        b_b = _vmem_block_bytes((1, cout_pad), 4)
        ch = _chunk_rows(th, wout_pad)
        scr = (_vmem_block_bytes((ch * wout_pad, k * k * cin_pad), 2)
               + 2 * _vmem_block_bytes((ch * wout_pad, cout_pad), 4))
        return 2 * (in_b + out_b + w_b + b_b) + scr

    th = next((t for t in cands if working_set(t) <= budget), 1)
    # Megacore friendliness (v7x has 2 TensorCores sharing the grid).
    while th > 8 and n_batch * _cdiv(hout, th) < 4:
        th //= 2
    return max(th, 1)


def _reflect_index(idx, size):
    # PyTorch ReflectionPad2d index map (single reflection, padding < size).
    idx = jnp.where(idx < 0, -idx, idx)
    idx = jnp.where(idx > size - 1, 2 * (size - 1) - idx, idx)
    return idx


# ----------------------------------------------------------------------------
# Pallas kernel: per-row-chunk in-VMEM im2col + single deep-K MXU matmul
# ----------------------------------------------------------------------------
def _upsample_conv_kernel(x_ref, w_ref, b_ref, o_ref, *, k, stride, th, wout,
                          cin_pad, cout_pad, chunk_rows):
    # x_ref: (1, slab_h, wp_pad, cin_pad) bf16   input slab for this row tile
    # w_ref: (k*k*cin_pad, cout_pad)      bf16   tap-major flattened weights
    # b_ref: (1, cout_pad)                f32    bias
    # o_ref: (1, th, wout, cout_pad)      bf16   lane-dense output tile
    w = w_ref[...]
    bias = b_ref[...]
    kk_cin = k * k * cin_pad

    for r0 in range(0, th, chunk_rows):            # static, <= ~8 chunks
        ch = min(chunk_rows, th - r0)
        pieces = []
        for ki in range(k):
            for kj in range(k):
                if stride == 1:
                    p = x_ref[0, r0 + ki:r0 + ki + ch, kj:kj + wout, :]
                else:
                    # TODO(synk): phase-split stride>1 host-side so these
                    # loads become unit-stride.
                    p = x_ref[0, pl.ds(r0 * stride + ki, ch, stride),
                              pl.ds(kj, wout, stride), :]
                pieces.append(p)                    # (ch, wout, cin_pad) bf16
        # In-VMEM im2col: taps concatenated along the channel axis.
        cols = jnp.concatenate(pieces, axis=-1)     # (ch, wout, k*k*cin_pad)
        cols = cols.reshape(ch * wout, kk_cin)
        acc = jnp.dot(cols, w, preferred_element_type=jnp.float32)
        acc = acc + bias
        o_ref[0, r0:r0 + ch, :, :] = (
            acc.reshape(ch, wout, cout_pad).astype(o_ref.dtype))


# ----------------------------------------------------------------------------
# Forward pass (PyTorch-equivalent semantics, NCHW in / NCHW out)
# ----------------------------------------------------------------------------
def upsample_conv_forward(x_nchw, weight, bias, *, kernel_size, stride,
                          upsample=None):
    """UpsampleConvLayer.forward.  x: (N,Cin,H,W); weight: (Cout,Cin,k,k)."""
    N, Cin, H, W = x_nchw.shape
    Cout = weight.shape[0]
    k = int(kernel_size)
    s = int(stride)
    scale = int(upsample) if upsample else 1
    H_up, W_up = H * scale, W * scale
    p = k // 2
    if p >= H_up or p >= W_up:
        raise ValueError("reflection padding must be < the (upsampled) "
                         "spatial size (single-reflection assumption)")
    Hp, Wp = H_up + 2 * p, W_up + 2 * p
    Hout = (Hp - k) // s + 1
    Wout = (Wp - k) // s + 1

    cin_pad = _round_up(Cin, 8)                      # aligned K sub-blocks
    # Lane-dense output stores; only pad to 256 when Cout > 128 and the chip
    # has a 256-wide MXU (v6e/v7x) -- keep 128 on v5e.
    cout_align = 128 if (Cout <= 128 or _is_v5e()) else 256
    cout_pad = _round_up(Cout, cout_align)

    wout_pad = _round_up(Wout, 8)                    # view-friendly reshapes
    wp_pad = (wout_pad - 1) * s + k

    vmem_cap = _vmem_capacity_bytes()
    th = _choose_tile_h(Hout, N, wp_pad, wout_pad, cin_pad, cout_pad, k, s,
                        vmem_cap)
    chunk_rows = _chunk_rows(th, wout_pad)
    n_tiles = _cdiv(Hout, th)
    slab_h = (th - 1) * s + k
    M = N * n_tiles

    # --- fused nearest-upsample + reflection-pad + row-tiling: ONE gather ---
    x = jnp.transpose(x_nchw, (0, 2, 3, 1)).astype(jnp.bfloat16)   # NHWC bf16
    x = jnp.pad(x, ((0, 0), (0, 0), (0, 0), (0, cin_pad - Cin)))   # tiny pad
    row_q = jnp.arange(Hp)
    col_q = jnp.minimum(jnp.arange(wp_pad), Wp - 1)                # clamp tail
    row_src = _reflect_index(row_q - p, H_up) // scale             # -> orig H
    col_src = _reflect_index(col_q - p, W_up) // scale             # -> orig W
    slab_rows = (jnp.arange(n_tiles)[:, None] * (th * s)
                 + jnp.arange(slab_h)[None, :])                    # (n_tiles, slab_h)
    slab_rows = jnp.minimum(slab_rows, Hp - 1)                     # clamp tail
    src_rows = row_src[slab_rows]                                  # (n_tiles, slab_h)
    slabs = x[:, src_rows[:, :, None], col_src[None, None, :], :]  # one gather
    slabs = slabs.reshape(M, slab_h, wp_pad, cin_pad)
    # TODO(synk): fully HBM-minimal path would move this gather into the
    # kernel (x kept in pl.ANY + scalar-prefetched row/col index tables).

    # --- weights / bias: tap-major flattened K, channel-padded ---
    wt = jnp.transpose(weight, (2, 3, 1, 0))                       # (k,k,Cin,Cout)
    wt = jnp.pad(wt, ((0, 0), (0, 0), (0, cin_pad - Cin), (0, cout_pad - Cout)))
    wt = wt.reshape(k * k * cin_pad, cout_pad).astype(jnp.bfloat16)
    bm = jnp.pad(bias, (0, cout_pad - Cout)).reshape(1, cout_pad).astype(jnp.float32)

    kernel = functools.partial(_upsample_conv_kernel, k=k, stride=s, th=th,
                               wout=wout_pad, cin_pad=cin_pad,
                               cout_pad=cout_pad, chunk_rows=chunk_rows)

    # Real (sublane/lane-padded), double-buffered working set -> vmem limit.
    in_b = _vmem_block_bytes((1, slab_h, wp_pad, cin_pad), 2)
    out_b = _vmem_block_bytes((1, th, wout_pad, cout_pad), 2)
    w_b = _vmem_block_bytes((k * k * cin_pad, cout_pad), 2)
    b_b = _vmem_block_bytes((1, cout_pad), 4)
    scr = (_vmem_block_bytes((chunk_rows * wout_pad, k * k * cin_pad), 2)
           + 2 * _vmem_block_bytes((chunk_rows * wout_pad, cout_pad), 4))
    working = 2 * (in_b + out_b + w_b + b_b) + scr
    vmem_limit = int(min(max(2 * working + (4 << 20), 32 << 20),
                         (vmem_cap * 3) // 4))

    flops = 2 * M * th * wout_pad * (k * k * cin_pad) * cout_pad
    bytes_accessed = (slabs.size * 2 + wt.size * 2 + bm.size * 4
                      + M * th * wout_pad * cout_pad * 2)

    out = pl.pallas_call(
        kernel,
        out_shape=jax.ShapeDtypeStruct((M, th, wout_pad, cout_pad),
                                       jnp.bfloat16),
        grid=(M,),
        in_specs=[
            pl.BlockSpec((1, slab_h, wp_pad, cin_pad), lambda m: (m, 0, 0, 0)),
            pl.BlockSpec((k * k * cin_pad, cout_pad), lambda m: (0, 0)),
            pl.BlockSpec((1, cout_pad), lambda m: (0, 0)),
        ],
        out_specs=pl.BlockSpec((1, th, wout_pad, cout_pad),
                               lambda m: (m, 0, 0, 0)),
        compiler_params=pltpu.CompilerParams(
            dimension_semantics=("parallel",),
            vmem_limit_bytes=vmem_limit),
        cost_estimate=pl.CostEstimate(flops=int(flops), transcendentals=0,
                                      bytes_accessed=int(bytes_accessed)),
    )(slabs, wt, bm)

    out = out.reshape(N, n_tiles * th, wout_pad, cout_pad)
    out = out[:, :Hout, :Wout, :Cout]              # drop pads before transpose
    return jnp.transpose(out, (0, 3, 1, 2)).astype(x_nchw.dtype)   # -> NCHW


# ----------------------------------------------------------------------------
# Pure-XLA reference (f32) for correctness checking
# ----------------------------------------------------------------------------
def upsample_conv_reference(x_nchw, weight, bias, *, kernel_size, stride,
                            upsample=None):
    x = x_nchw
    if upsample:
        x = jnp.repeat(jnp.repeat(x, upsample, axis=2), upsample, axis=3)
    p = kernel_size // 2
    x = jnp.pad(x, ((0, 0), (0, 0), (p, p), (p, p)), mode="reflect")
    y = jax.lax.conv_general_dilated(
        x, weight, window_strides=(stride, stride), padding="VALID",
        dimension_numbers=("NCHW", "OIHW", "NCHW"))
    return y + bias.reshape(1, -1, 1, 1)


# ----------------------------------------------------------------------------
if __name__ == "__main__":
    key = jax.random.PRNGKey(0)
    kx, kw, kb, kx2, kw2, kb2 = jax.random.split(key, 6)

    # Case 1: nearest-upsample x2 path (typical decoder usage).
    N, Cin, H, W = 2, 4, 16, 16
    Cout, ksize, stride, upsample = 8, 3, 1, 2
    x = jax.random.normal(kx, (N, Cin, H, W), jnp.float32)
    w = jax.random.normal(kw, (Cout, Cin, ksize, ksize),
                          jnp.float32) / math.sqrt(Cin * ksize * ksize)
    b = 0.1 * jax.random.normal(kb, (Cout,), jnp.float32)

    fwd = jax.jit(functools.partial(upsample_conv_forward, kernel_size=ksize,
                                    stride=stride, upsample=upsample))
    out = jax.block_until_ready(fwd(x, w, b))
    assert out.shape == (N, Cout, H * upsample, W * upsample), out.shape
    assert bool(jnp.all(jnp.isfinite(out)))
    ref = upsample_conv_reference(x, w, b, kernel_size=ksize, stride=stride,
                                  upsample=upsample)
    err = float(jnp.max(jnp.abs(out - ref)))
    assert err < 0.1, f"case1 max abs err vs XLA reference: {err}"

    # Case 2: no-upsample path.
    N2, Cin2, H2, W2, Cout2 = 2, 3, 8, 8, 5
    x2 = jax.random.normal(kx2, (N2, Cin2, H2, W2), jnp.float32)
    w2 = jax.random.normal(kw2, (Cout2, Cin2, ksize, ksize),
                           jnp.float32) / math.sqrt(Cin2 * ksize * ksize)
    b2 = 0.1 * jax.random.normal(kb2, (Cout2,), jnp.float32)
    fwd2 = jax.jit(functools.partial(upsample_conv_forward, kernel_size=ksize,
                                     stride=1, upsample=None))
    out2 = jax.block_until_ready(fwd2(x2, w2, b2))
    assert out2.shape == (N2, Cout2, H2, W2), out2.shape
    ref2 = upsample_conv_reference(x2, w2, b2, kernel_size=ksize, stride=1,
                                   upsample=None)
    err2 = float(jnp.max(jnp.abs(out2 - ref2)))
    assert err2 < 0.1, f"case2 max abs err vs XLA reference: {err2}"

    print("KERNEL_OK")
</pallas_src>

<mosaic_0001>
module attributes {stable_mosaic.version = 11 : i64} {
  func.func @_upsample_conv_kernel(%arg0: i32, %arg1: memref<1x18x34x8xbf16, #tpu.memory_space<vmem>>, %arg2: memref<72x128xbf16, #tpu.memory_space<vmem>>, %arg3: memref<1x128xf32, #tpu.memory_space<vmem>>, %arg4: memref<1x16x32x128xbf16, #tpu.memory_space<vmem>>) attributes {dimension_semantics = [#tpu.dimension_semantics<parallel>], iteration_bounds = array<i64: 4>, scalar_prefetch = 0 : i64, scratch_operands = 0 : i64, tpu.core_type = #tpu.core_type<tc>, window_params = [{transform_indices = @transform_0, window_bounds = array<i64: 1, 18, 34, 8>}, {pipeline_mode = #tpu.pipeline_mode<synchronous>, transform_indices = @transform_1, window_bounds = array<i64: 72, 128>}, {pipeline_mode = #tpu.pipeline_mode<synchronous>, transform_indices = @transform_2, window_bounds = array<i64: 1, 128>}, {transform_indices = @transform_3, window_bounds = array<i64: 1, 16, 32, 128>}]} {
    %c0 = arith.constant 0 : index
    %c0_0 = arith.constant 0 : index
    %0 = vector.load %arg2[%c0, %c0_0] : memref<72x128xbf16, #tpu.memory_space<vmem>>, vector<72x128xbf16>
    %c0_1 = arith.constant 0 : index
    %c0_2 = arith.constant 0 : index
    %1 = vector.load %arg3[%c0_1, %c0_2] : memref<1x128xf32, #tpu.memory_space<vmem>>, vector<1x128xf32>
    %c0_3 = arith.constant 0 : index
    %c0_4 = arith.constant 0 : index
    %c0_5 = arith.constant 0 : index
    %c0_6 = arith.constant 0 : index
    %2 = vector.load %arg1[%c0_3, %c0_4, %c0_5, %c0_6] : memref<1x18x34x8xbf16, #tpu.memory_space<vmem>>, vector<1x8x32x8xbf16>
    %3 = vector.shape_cast %2 : vector<1x8x32x8xbf16> to vector<8x32x8xbf16>
    %c0_7 = arith.constant 0 : index
    %c0_8 = arith.constant 0 : index
    %c1 = arith.constant 1 : index
    %c0_9 = arith.constant 0 : index
    %4 = vector.load %arg1[%c0_7, %c0_8, %c1, %c0_9] : memref<1x18x34x8xbf16, #tpu.memory_space<vmem>>, vector<1x8x32x8xbf16>
    %5 = vector.shape_cast %4 : vector<1x8x32x8xbf16> to vector<8x32x8xbf16>
    %c0_10 = arith.constant 0 : index
    %c0_11 = arith.constant 0 : index
    %c2 = arith.constant 2 : index
    %c0_12 = arith.constant 0 : index
    %6 = vector.load %arg1[%c0_10, %c0_11, %c2, %c0_12] : memref<1x18x34x8xbf16, #tpu.memory_space<vmem>>, vector<1x8x32x8xbf16>
    %7 = vector.shape_cast %6 : vector<1x8x32x8xbf16> to vector<8x32x8xbf16>
    %c0_13 = arith.constant 0 : index
    %c1_14 = arith.constant 1 : index
    %c0_15 = arith.constant 0 : index
    %c0_16 = arith.constant 0 : index
    %8 = vector.load %arg1[%c0_13, %c1_14, %c0_15, %c0_16] : memref<1x18x34x8xbf16, #tpu.memory_space<vmem>>, vector<1x8x32x8xbf16>
    %9 = vector.shape_cast %8 : vector<1x8x32x8xbf16> to vector<8x32x8xbf16>
    %c0_17 = arith.constant 0 : index
    %c1_18 = arith.constant 1 : index
    %c1_19 = arith.constant 1 : index
    %c0_20 = arith.constant 0 : index
    %10 = vector.load %arg1[%c0_17, %c1_18, %c1_19, %c0_20] : memref<1x18x34x8xbf16, #tpu.memory_space<vmem>>, vector<1x8x32x8xbf16>
    %11 = vector.shape_cast %10 : vector<1x8x32x8xbf16> to vector<8x32x8xbf16>
    %c0_21 = arith.constant 0 : index
    %c1_22 = arith.constant 1 : index
    %c2_23 = arith.constant 2 : index
    %c0_24 = arith.constant 0 : index
    %12 = vector.load %arg1[%c0_21, %c1_22, %c2_23, %c0_24] : memref<1x18x34x8xbf16, #tpu.memory_space<vmem>>, vector<1x8x32x8xbf16>
    %13 = vector.shape_cast %12 : vector<1x8x32x8xbf16> to vector<8x32x8xbf16>
    %c0_25 = arith.constant 0 : index
    %c2_26 = arith.constant 2 : index
    %c0_27 = arith.constant 0 : index
    %c0_28 = arith.constant 0 : index
    %14 = vector.load %arg1[%c0_25, %c2_26, %c0_27, %c0_28] : memref<1x18x34x8xbf16, #tpu.memory_space<vmem>>, vector<1x8x32x8xbf16>
    %15 = vector.shape_cast %14 : vector<1x8x32x8xbf16> to vector<8x32x8xbf16>
    %c0_29 = arith.constant 0 : index
    %c2_30 = arith.constant 2 : index
    %c1_31 = arith.constant 1 : index
    %c0_32 = arith.constant 0 : index
    %16 = vector.load %arg1[%c0_29, %c2_30, %c1_31, %c0_32] : memref<1x18x34x8xbf16, #tpu.memory_space<vmem>>, vector<1x8x32x8xbf16>
    %17 = vector.shape_cast %16 : vector<1x8x32x8xbf16> to vector<8x32x8xbf16>
    %c0_33 = arith.constant 0 : index
    %c2_34 = arith.constant 2 : index
    %c2_35 = arith.constant 2 : index
    %c0_36 = arith.constant 0 : index
    %18 = vector.load %arg1[%c0_33, %c2_34, %c2_35, %c0_36] : memref<1x18x34x8xbf16, #tpu.memory_space<vmem>>, vector<1x8x32x8xbf16>
    %19 = vector.shape_cast %18 : vector<1x8x32x8xbf16> to vector<8x32x8xbf16>
    %20 = tpu.concatenate %3, %5, %7, %9, %11, %13, %15, %17, %19 in 2 : vector<8x32x8xbf16>, vector<8x32x8xbf16>, vector<8x32x8xbf16>, vector<8x32x8xbf16>, vector<8x32x8xbf16>, vector<8x32x8xbf16>, vector<8x32x8xbf16>, vector<8x32x8xbf16>, vector<8x32x8xbf16> -> vector<8x32x72xbf16>
    %21 = vector.shape_cast %20 : vector<8x32x72xbf16> to vector<256x72xbf16>
    %cst = arith.constant dense<0.000000e+00> : vector<256x128xf32>
    %22 = tpu.matmul %21, %0, %cst {dimension_numbers = #tpu.dot_dimension_numbers<[1], [0], [0], [1], [0, 0, 1, 1], [], []>} : vector<256x72xbf16>, vector<72x128xbf16>, vector<256x128xf32> -> vector<256x128xf32>
    %23 = vector.broadcast %1 : vector<1x128xf32> to vector<256x128xf32>
    %24 = arith.addf %22, %23 : vector<256x128xf32>
    %25 = vector.shape_cast %24 : vector<256x128xf32> to vector<8x32x128xf32>
    %26 = arith.truncf %25 : vector<8x32x128xf32> to vector<8x32x128xbf16>
    %c0_37 = arith.constant 0 : index
    %c0_38 = arith.constant 0 : index
    %c0_39 = arith.constant 0 : index
    %c0_40 = arith.constant 0 : index
    %27 = vector.load %arg4[%c0_37, %c0_38, %c0_39, %c0_40] : memref<1x16x32x128xbf16, #tpu.memory_space<vmem>>, vector<1x8x32x128xbf16>
    %28 = vector.shape_cast %27 : vector<1x8x32x128xbf16> to vector<8x32x128xbf16>
    %29 = vector.shape_cast %26 : vector<8x32x128xbf16> to vector<1x8x32x128xbf16>
    tpu.vector_store %arg4[%c0_37, %c0_38, %c0_39, %c0_40], %29 {strides = array<i32>} : memref<1x16x32x128xbf16, #tpu.memory_space<vmem>>, vector<1x8x32x128xbf16>,
    %c0_41 = arith.constant 0 : index
    %c8 = arith.constant 8 : index
    %c0_42 = arith.constant 0 : index
    %c0_43 = arith.constant 0 : index
    %30 = vector.load %arg1[%c0_41, %c8, %c0_42, %c0_43] : memref<1x18x34x8xbf16, #tpu.memory_space<vmem>>, vector<1x8x32x8xbf16>
    %31 = vector.shape_cast %30 : vector<1x8x32x8xbf16> to vector<8x32x8xbf16>
    %c0_44 = arith.constant 0 : index
    %c8_45 = arith.constant 8 : index
    %c1_46 = arith.constant 1 : index
    %c0_47 = arith.constant 0 : index
    %32 = vector.load %arg1[%c0_44, %c8_45, %c1_46, %c0_47] : memref<1x18x34x8xbf16, #tpu.memory_space<vmem>>, vector<1x8x32x8xbf16>
    %33 = vector.shape_cast %32 : vector<1x8x32x8xbf16> to vector<8x32x8xbf16>
    %c0_48 = arith.constant 0 : index
    %c8_49 = arith.constant 8 : index
    %c2_50 = arith.constant 2 : index
    %c0_51 = arith.constant 0 : index
    %34 = vector.load %arg1[%c0_48, %c8_49, %c2_50, %c0_51] : memref<1x18x34x8xbf16, #tpu.memory_space<vmem>>, vector<1x8x32x8xbf16>
    %35 = vector.shape_cast %34 : vector<1x8x32x8xbf16> to vector<8x32x8xbf16>
    %c0_52 = arith.constant 0 : index
    %c9 = arith.constant 9 : index
    %c0_53 = arith.constant 0 : index
    %c0_54 = arith.constant 0 : index
    %36 = vector.load %arg1[%c0_52, %c9, %c0_53, %c0_54] : memref<1x18x34x8xbf16, #tpu.memory_space<vmem>>, vector<1x8x32x8xbf16>
    %37 = vector.shape_cast %36 : vector<1x8x32x8xbf16> to vector<8x32x8xbf16>
    %c0_55 = arith.constant 0 : index
    %c9_56 = arith.constant 9 : index
    %c1_57 = arith.constant 1 : index
    %c0_58 = arith.constant 0 : index
    %38 = vector.load %arg1[%c0_55, %c9_56, %c1_57, %c0_58] : memref<1x18x34x8xbf16, #tpu.memory_space<vmem>>, vector<1x8x32x8xbf16>
    %39 = vector.shape_cast %38 : vector<1x8x32x8xbf16> to vector<8x32x8xbf16>
    %c0_59 = arith.constant 0 : index
    %c9_60 = arith.constant 9 : index
    %c2_61 = arith.constant 2 : index
    %c0_62 = arith.constant 0 : index
    %40 = vector.load %arg1[%c0_59, %c9_60, %c2_61, %c0_62] : memref<1x18x34x8xbf16, #tpu.memory_space<vmem>>, vector<1x8x32x8xbf16>
    %41 = vector.shape_cast %40 : vector<1x8x32x8xbf16> to vector<8x32x8xbf16>
    %c0_63 = arith.constant 0 : index
    %c10 = arith.constant 10 : index
    %c0_64 = arith.constant 0 : index
    %c0_65 = arith.constant 0 : index
    %42 = vector.load %arg1[%c0_63, %c10, %c0_64, %c0_65] : memref<1x18x34x8xbf16, #tpu.memory_space<vmem>>, vector<1x8x32x8xbf16>
    %43 = vector.shape_cast %42 : vector<1x8x32x8xbf16> to vector<8x32x8xbf16>
    %c0_66 = arith.constant 0 : index
    %c10_67 = arith.constant 10 : index
    %c1_68 = arith.constant 1 : index
    %c0_69 = arith.constant 0 : index
    %44 = vector.load %arg1[%c0_66, %c10_67, %c1_68, %c0_69] : memref<1x18x34x8xbf16, #tpu.memory_space<vmem>>, vector<1x8x32x8xbf16>
    %45 = vector.shape_cast %44 : vector<1x8x32x8xbf16> to vector<8x32x8xbf16>
    %c0_70 = arith.constant 0 : index
    %c10_71 = arith.constant 10 : index
    %c2_72 = arith.constant 2 : index
    %c0_73 = arith.constant 0 : index
    %46 = vector.load %arg1[%c0_70, %c10_71, %c2_72, %c0_73] : memref<1x18x34x8xbf16, #tpu.memory_space<vmem>>, vector<1x8x32x8xbf16>
    %47 = vector.shape_cast %46 : vector<1x8x32x8xbf16> to vector<8x32x8xbf16>
    %48 = tpu.concatenate %31, %33, %35, %37, %39, %41, %43, %45, %47 in 2 : vector<8x32x8xbf16>, vector<8x32x8xbf16>, vector<8x32x8xbf16>, vector<8x32x8xbf16>, vector<8x32x8xbf16>, vector<8x32x8xbf16>, vector<8x32x8xbf16>, vector<8x32x8xbf16>, vector<8x32x8xbf16> -> vector<8x32x72xbf16>
    %49 = vector.shape_cast %48 : vector<8x32x72xbf16> to vector<256x72xbf16>
    %cst_74 = arith.constant dense<0.000000e+00> : vector<256x128xf32>
    %50 = tpu.matmul %49, %0, %cst_74 {dimension_numbers = #tpu.dot_dimension_numbers<[1], [0], [0], [1], [0, 0, 1, 1], [], []>} : vector<256x72xbf16>, vector<72x128xbf16>, vector<256x128xf32> -> vector<256x128xf32>
    %51 = vector.broadcast %1 : vector<1x128xf32> to vector<256x128xf32>
    %52 = arith.addf %50, %51 : vector<256x128xf32>
    %53 = vector.shape_cast %52 : vector<256x128xf32> to vector<8x32x128xf32>
    %54 = arith.truncf %53 : vector<8x32x128xf32> to vector<8x32x128xbf16>
    %c0_75 = arith.constant 0 : index
    %c8_76 = arith.constant 8 : index
    %c0_77 = arith.constant 0 : index
    %c0_78 = arith.constant 0 : index
    %55 = vector.load %arg4[%c0_75, %c8_76, %c0_77, %c0_78] : memref<1x16x32x128xbf16, #tpu.memory_space<vmem>>, vector<1x8x32x128xbf16>
    %56 = vector.shape_cast %55 : vector<1x8x32x128xbf16> to vector<8x32x128xbf16>
    %57 = vector.shape_cast %54 : vector<8x32x128xbf16> to vector<1x8x32x128xbf16>
    tpu.vector_store %arg4[%c0_75, %c8_76, %c0_77, %c0_78], %57 {strides = array<i32>} : memref<1x16x32x128xbf16, #tpu.memory_space<vmem>>, vector<1x8x32x128xbf16>,
    return
  }
  func.func @transform_0(%arg0: i32) -> (i32, i32, i32, i32) {
    %c0_i32 = arith.constant 0 : i32
    %c0_i32_0 = arith.constant 0 : i32
    %c0_i32_1 = arith.constant 0 : i32
    %c0_i32_2 = arith.constant 0 : i32
    return %arg0, %c0_i32, %c0_i32_0, %c0_i32_1 : i32, i32, i32, i32
  }
  func.func @transform_1(%arg0: i32) -> (i32, i32) {
    %c0_i32 = arith.constant 0 : i32
    %c0_i32_0 = arith.constant 0 : i32
    %c0_i32_1 = arith.constant 0 : i32
    return %c0_i32, %c0_i32_0 : i32, i32
  }
  func.func @transform_2(%arg0: i32) -> (i32, i32) {
    %c0_i32 = arith.constant 0 : i32
    %c0_i32_0 = arith.constant 0 : i32
    %c0_i32_1 = arith.constant 0 : i32
    return %c0_i32, %c0_i32_0 : i32, i32
  }
  func.func @transform_3(%arg0: i32) -> (i32, i32, i32, i32) {
    %c0_i32 = arith.constant 0 : i32
    %c0_i32_0 = arith.constant 0 : i32
    %c0_i32_1 = arith.constant 0 : i32
    %c0_i32_2 = arith.constant 0 : i32
    return %arg0, %c0_i32, %c0_i32_0, %c0_i32_1 : i32, i32, i32, i32
  }
}

</mosaic_0001>

<llo_original>
// kernel: upsample_conv_forward.1
$region0: #{upsample_conv_forward.1}
  #allocation0 [shape = 'u32[]', space=smem, size = 0x4, offset = 0x4, fixed_abs, tag = 'smem constant byte address 0x4 - core index']
  #allocation1 [shape = 'u32[144,128]{1,0:T(1,128)}', space=vmem, size = 0x12000, scoped, tag = 'internal scratch']
  %s0 = inlined_call_operand.vmem [shape: bf16[4,18,34,8], index: 0, kind: input, shape index: {}]
  %s1 = inlined_call_operand.vmem [shape: bf16[72,128], index: 1, kind: input, shape index: {}]
  %s2 = inlined_call_operand.vmem [shape: f32[1,128], index: 2, kind: input, shape index: {}]
  %s3 = inlined_call_operand.vmem [shape: bf16[4,16,32,128], index: 3, kind: output, shape index: {}]
  %s4 = sld [smem:[#allocation0]]
  $region45: #{upsample_conv_forward.1} parent=0
    _
  %s6 = ssub.s32 1, %s4
  %s7 = scalar_select 0, %s6, %s4
  loop: start=0, step=1, limit=6
  $region2: #{upsample_conv_forward.1} parent=0 // loop_pre_header
    _
  $region3: #{upsample_conv_forward.1} parent=0 // loop_header
    %s9 = sphi 0, %s13
    %p10 = scmp.ge.s32.totalorder %s9, 6
    %s19 = sphi 0, %s21
    %s22 = sphi 0, %s19
    %s23 = sphi 0, %s22
    %s39 = sphi 0, %s23
    %s43 = sphi 0, %s43
    %s45 = sphi 0, %s43
    %s46 = sphi 0, %s45
    %s60 = sphi 0, %s46
    %s64 = sphi 0, %s64
    %s66 = sphi 0, %s64
    %s67 = sphi 0, %s66
    %s81 = sphi 0, %s67
    %s87 = sphi 0, %s89
    %s90 = sphi 0, %s87
    %s91 = sphi 0, %s90
    %s107 = sphi 0, %s91
  $region4: #{upsample_conv_forward.1} parent=0 // loop_header_branch
    %12 = sbr.rel (%p10) target = $region8
  $region5: #{upsample_conv_forward.1} parent=0 // loop_body
    %s14 = ssub.s32 %s9, 1
    %s15 = ssub.s32 %s9, 2
    %s16 = sadd.s32 %s9, 1
    %s17 = ssub.s32 %s9, %s16
    %p18 = scmp.eq.s32.totalorder %s17, 0
    %s20 = sadd.s32 %s19, 1
    %s21 = scalar_select %p18, %s19, %s20
    %p24 = pneg %p18
    %p25 = scmp.eq.s32.totalorder %s9, 3
    %p26 = por %p24, %p25
    %p27 = scmp.ne.s32.totalorder %s19, %s22
    %p28 = scmp.eq.s32.totalorder %s9, 0
    %p29 = por %p27, %p28
    %p30 = scmp.ne.s32.totalorder %s19, %s22
    %p31 = scmp.eq.s32.totalorder %s14, 3
    %p32 = por %p30, %p31
    %p33 = scmp.ne.s32.totalorder %s22, %s23
    %p34 = scmp.eq.s32.totalorder %s14, 0
    %p35 = por %p33, %p34
    %p36 = scmp.ne.s32.totalorder %s22, %s23
    %p37 = scmp.eq.s32.totalorder %s15, 3
    %p38 = por %p36, %p37
    %p40 = scmp.ne.s32.totalorder %s23, %s39
    %p41 = scmp.eq.s32.totalorder %s15, 0
    %p42 = por %p40, %p41
    %s44 = sadd.s32 %s43, 1
    %p47 = scmp.eq.s32.totalorder %s9, 3
    %p48 = scmp.ne.s32.totalorder %s43, %s45
    %p49 = scmp.eq.s32.totalorder %s9, 0
    %p50 = por %p48, %p49
    %p51 = scmp.ne.s32.totalorder %s43, %s45
    %p52 = scmp.eq.s32.totalorder %s14, 3
    %p53 = por %p51, %p52
    %p54 = scmp.ne.s32.totalorder %s45, %s46
    %p55 = scmp.eq.s32.totalorder %s14, 0
    %p56 = por %p54, %p55
    %p57 = scmp.ne.s32.totalorder %s45, %s46
    %p58 = scmp.eq.s32.totalorder %s15, 3
    %p59 = por %p57, %p58
    %p61 = scmp.ne.s32.totalorder %s46, %s60
    %p62 = scmp.eq.s32.totalorder %s15, 0
    %p63 = por %p61, %p62
    %s65 = sadd.s32 %s64, 1
    %p68 = scmp.eq.s32.totalorder %s9, 3
    %p69 = scmp.ne.s32.totalorder %s64, %s66
    %p70 = scmp.eq.s32.totalorder %s9, 0
    %p71 = por %p69, %p70
    %p72 = scmp.ne.s32.totalorder %s64, %s66
    %p73 = scmp.eq.s32.totalorder %s14, 3
    %p74 = por %p72, %p73
    %p75 = scmp.ne.s32.totalorder %s66, %s67
    %p76 = scmp.eq.s32.totalorder %s14, 0
    %p77 = por %p75, %p76
    %p78 = scmp.ne.s32.totalorder %s66, %s67
    %p79 = scmp.eq.s32.totalorder %s15, 3
    %p80 = por %p78, %p79
    %p82 = scmp.ne.s32.totalorder %s67, %s81
    %p83 = scmp.eq.s32.totalorder %s15, 0
    %p84 = por %p82, %p83
    %s85 = ssub.s32 %s9, %s16
    %p86 = scmp.eq.s32.totalorder %s85, 0
    %s88 = sadd.s32 %s87, 1
    %s89 = scalar_select %p86, %s87, %s88
    %p92 = pneg %p86
    %p93 = scmp.eq.s32.totalorder %s9, 3
    %p94 = por %p92, %p93
    %p95 = scmp.ne.s32.totalorder %s87, %s90
    %p96 = scmp.eq.s32.totalorder %s9, 0
    %p97 = por %p95, %p96
    %p98 = scmp.ne.s32.totalorder %s87, %s90
    %p99 = scmp.eq.s32.totalorder %s14, 3
    %p100 = por %p98, %p99
    %p101 = scmp.ne.s32.totalorder %s90, %s91
    %p102 = scmp.eq.s32.totalorder %s14, 0
    %p103 = por %p101, %p102
    %p104 = scmp.ne.s32.totalorder %s90, %s91
    %p105 = scmp.eq.s32.totalorder %s15, 3
    %p106 = por %p104, %p105
    %p108 = scmp.ne.s32.totalorder %s91, %s107
    %p109 = scmp.eq.s32.totalorder %s15, 0
    %p110 = por %p108, %p109
    %p111 = scmp.le.s32.totalorder 1, %s9
    %p112 = scmp.lt.s32.totalorder %s9, 5
    %p113 = pnand %p111, %p112
    %p114 = pneg %p113
    // Predicated region
    $region9: #{upsample_conv_forward.1} parent=5 // pred_check
      _
    $region10: #{upsample_conv_forward.1} parent=5 // pred_check_branch
      %116 = sbr.rel (%p113) target = $region12
    $region11: #{upsample_conv_forward.1} parent=5 // pred_region
      %s117 = ssub.s32 %s9, 1
      // Predicated region
      $region13: #{upsample_conv_forward.1} parent=11 // pred_check
        %p118 = pneg %p56
      $region14: #{upsample_conv_forward.1} parent=11 // pred_check_branch
        %120 = sbr.rel (%p118) target = $region16
      $region15: #{upsample_conv_forward.1} parent=11 // pred_region
        _
      $region16: #{upsample_conv_forward.1} parent=11 // pred_fallthru
        _
      // Predicated region
      $region17: #{upsample_conv_forward.1} parent=11 // pred_check
        %p121 = pneg %p77
      $region18: #{upsample_conv_forward.1} parent=11 // pred_check_branch
        %123 = sbr.rel (%p121) target = $region20
      $region19: #{upsample_conv_forward.1} parent=11 // pred_region
        _
      $region20: #{upsample_conv_forward.1} parent=11 // pred_fallthru
        _
    $region12: #{upsample_conv_forward.1} parent=5 // pred_fallthru
      _
    %p124 = scmp.lt.s32.totalorder %s9, 4
    // Predicated region
    $region21: #{upsample_conv_forward.1} parent=5 // pred_check
      %p125 = pneg %p124
    $region22: #{upsample_conv_forward.1} parent=5 // pred_check_branch
      %127 = sbr.rel (%p125) target = $region24
    $region23: #{upsample_conv_forward.1} parent=5 // pred_region
      // Predicated region
      $region25: #{upsample_conv_forward.1} parent=23 // pred_check
        %p128 = pneg %p29
      $region26: #{upsample_conv_forward.1} parent=23 // pred_check_branch
        %130 = sbr.rel (%p128) target = $region28
      $region27: #{upsample_conv_forward.1} parent=23 // pred_region
        %p131 = scmp.lt.s32.totalorder %s9, 3
        %s132 = scalar_select %p131, %s9, 3
        %s133 = smul.addr %s132, 90
        %s134 = smul.addr %s133, 4
        %s135 = scalar_lea.vmem %s0, %s134
      $region28: #{upsample_conv_forward.1} parent=23 // pred_fallthru
        _
    $region24: #{upsample_conv_forward.1} parent=5 // pred_fallthru
      _
    %p136 = scmp.le.s32.totalorder 1, %s9
    %p137 = scmp.lt.s32.totalorder %s9, 5
    %p138 = pnand %p136, %p137
    %p139 = pneg %p138
    // Predicated region
    $region29: #{upsample_conv_forward.1} parent=5 // pred_check
      _
    $region30: #{upsample_conv_forward.1} parent=5 // pred_check_branch
      %141 = sbr.rel (%p138) target = $region32
    $region31: #{upsample_conv_forward.1} parent=5 // pred_region
      %s142 = ssub.s32 %s9, 1
      %p143 = scmp.lt.s32.totalorder %s14, 3
      %s144 = scalar_select %p143, %s14, 3
      %s145 = smul.addr %s144, 90
      %s146 = smul.addr %s145, 4
      %s147 = scalar_lea.vmem %s0, %s146
      %p148 = pneg %p35
      %p149 = pneg %p32
      %p150 = pneg %p56
      %p151 = pneg %p53
      %p152 = pneg %p77
      %p153 = pneg %p74
      %p154 = pneg %p103
      %p155 = pneg %p100
      %p156 = scmp.lt.s32.totalorder %s14, 3
      %s157 = scalar_select %p156, %s14, 3
      %s158 = smul.addr %s157, 64
      %s159 = smul.addr %s158, 4
      %s160 = scalar_lea.vmem %s3, %s159
      %p161 = scmp.lt.s32.totalorder %s14, 3
      %s162 = scalar_select %p161, %s14, 3
      %s163 = smul.addr %s162, 90
      %s164 = smul.addr %s163, 4
      %s165 = scalar_lea.vmem %s0, %s164
      %p166 = scmp.lt.s32.totalorder %s14, 3
      %s167 = scalar_select %p166, %s14, 3
      %s168 = smul.addr %s167, 64
      %s169 = smul.addr %s168, 4
      %s170 = scalar_lea.vmem %s3, %s169
      %v172 = vld [vmem:[%s1] sm:$0xf]
      %v173 = vld [vmem:[%s1 + $0x4] sm:$0xf]
      %v174 = vld [vmem:[%s1 + $0x8] sm:$0xf]
      %v175 = vld [vmem:[%s1 + $0xc] sm:$0xf]
      %v176 = vld [vmem:[%s1 + $0x10] sm:$0xf]
      %v177 = vld [vmem:[%s1 + $0x14] sm:$0xf]
      %v178 = vld [vmem:[%s1 + $0x18] sm:$0xf]
      %v179 = vld [vmem:[%s1 + $0x1c] sm:$0xf]
      %v180 = vld [vmem:[%s1 + $0x20] sm:$0xf]
      %v181 = vld [vmem:[%s2] sm:$0x1]
      %v182 = vld [vmem:[%s165] sm:$0xf]
      %v183 = vld [vmem:[%s165 + $0x4] sm:$0xf]
      %v184 = vld [vmem:[%s165 + $0x8] sm:$0xf]
      %v185 = vld [vmem:[%s165 + $0xc] sm:$0xf]
      %v186 = vld [vmem:[%s165 + $0x14] sm:$0xf]
      %v187 = vld [vmem:[%s165 + $0x18] sm:$0xf]
      %v188 = vld [vmem:[%s165 + $0x1c] sm:$0xf]
      %v189 = vld [vmem:[%s165 + $0x20] sm:$0xf]
      %v190 = vld [vmem:[%s165 + $0x28] sm:$0xf]
      %v191 = vld [vmem:[%s165 + $0x2c] sm:$0xf]
      %v192 = vld [vmem:[%s165 + $0x30] sm:$0xf]
      %v193 = vld [vmem:[%s165 + $0x34] sm:$0xf]
      %v194 = vld [vmem:[%s165 + $0x3c] sm:$0xf]
      %v195 = vld [vmem:[%s165 + $0x40] sm:$0xf]
      %v196 = vld [vmem:[%s165 + $0x44] sm:$0xf]
      %v197 = vld [vmem:[%s165 + $0x48] sm:$0xf]
      %v198 = vld [vmem:[%s165 + $0x50] sm:$0xf]
      %v199 = vld [vmem:[%s165 + $0x54] sm:$0xf]
      %v200 = vld [vmem:[%s165 + $0x58] sm:$0xf]
      %v201 = vld [vmem:[%s165 + $0x5c] sm:$0xf]
      %v202 = vld [vmem:[%s165 + $0x64] sm:$0xf]
      %v203 = vld [vmem:[%s165 + $0x68] sm:$0xf]
      %v204 = vld [vmem:[%s165 + $0x6c] sm:$0xf]
      %v205 = vld [vmem:[%s165 + $0x70] sm:$0xf]
      %v206 = vld [vmem:[%s165 + $0x78] sm:$0xf]
      %v207 = vld [vmem:[%s165 + $0x7c] sm:$0xf]
      %v208 = vld [vmem:[%s165 + $0x80] sm:$0xf]
      %v209 = vld [vmem:[%s165 + $0x84] sm:$0xf]
      %v210 = vld [vmem:[%s165 + $0x8c] sm:$0xf]
      %v211 = vld [vmem:[%s165 + $0x90] sm:$0xf]
      %v212 = vld [vmem:[%s165 + $0x94] sm:$0xf]
      %v213 = vld [vmem:[%s165 + $0x98] sm:$0xf]
      %v214 = vld [vmem:[%s165 + $0x10] sm:$0x1]
      %v215 = vld [vmem:[%s165 + $0x24] sm:$0x1]
      %v216 = vld [vmem:[%s165 + $0x38] sm:$0x1]
      %v217 = vld [vmem:[%s165 + $0x4c] sm:$0x1]
      %v218 = vld [vmem:[%s165 + $0x60] sm:$0x1]
      %v219 = vld [vmem:[%s165 + $0x74] sm:$0x1]
      %v220 = vld [vmem:[%s165 + $0x88] sm:$0x1]
      %v221 = vld [vmem:[%s165 + $0x9c] sm:$0x1]
      %v222 = vld [vmem:[%s165] sm:$0xe]
      %v223 = vld [vmem:[%s165 + $0x14] sm:$0xe]
      %v224 = vld [vmem:[%s165 + $0x28] sm:$0xe]
      %v225 = vld [vmem:[%s165 + $0x3c] sm:$0xe]
      %v226 = vld [vmem:[%s165 + $0x50] sm:$0xe]
      %v227 = vld [vmem:[%s165 + $0x64] sm:$0xe]
      %v228 = vld [vmem:[%s165 + $0x78] sm:$0xe]
      %v229 = vld [vmem:[%s165 + $0x8c] sm:$0xe]
      %s230 = scalar_lea.vmem %s165, 20
      %v231 = vld [vmem:[%s230] sm:$0xf]
      %v232 = vld [vmem:[%s230 + $0x4] sm:$0xf]
      %v233 = vld [vmem:[%s230 + $0x8] sm:$0xf]
      %v234 = vld [vmem:[%s230 + $0xc] sm:$0xf]
      %v235 = vld [vmem:[%s230 + $0x14] sm:$0xf]
      %v236 = vld [vmem:[%s230 + $0x18] sm:$0xf]
      %v237 = vld [vmem:[%s230 + $0x1c] sm:$0xf]
      %v238 = vld [vmem:[%s230 + $0x20] sm:$0xf]
      %v239 = vld [vmem:[%s230 + $0x28] sm:$0xf]
      %v240 = vld [vmem:[%s230 + $0x2c] sm:$0xf]
      %v241 = vld [vmem:[%s230 + $0x30] sm:$0xf]
      %v242 = vld [vmem:[%s230 + $0x34] sm:$0xf]
      %v243 = vld [vmem:[%s230 + $0x3c] sm:$0xf]
      %v244 = vld [vmem:[%s230 + $0x40] sm:$0xf]
      %v245 = vld [vmem:[%s230 + $0x44] sm:$0xf]
      %v246 = vld [vmem:[%s230 + $0x48] sm:$0xf]
      %v247 = vld [vmem:[%s230 + $0x50] sm:$0xf]
      %v248 = vld [vmem:[%s230 + $0x54] sm:$0xf]
      %v249 = vld [vmem:[%s230 + $0x58] sm:$0xf]
      %v250 = vld [vmem:[%s230 + $0x5c] sm:$0xf]
      %v251 = vld [vmem:[%s230 + $0x64] sm:$0xf]
      %v252 = vld [vmem:[%s230 + $0x68] sm:$0xf]
      %v253 = vld [vmem:[%s230 + $0x6c] sm:$0xf]
      %v254 = vld [vmem:[%s230 + $0x70] sm:$0xf]
      %v255 = vld [vmem:[%s230 + $0x78] sm:$0xf]
      %v256 = vld [vmem:[%s230 + $0x7c] sm:$0xf]
      %v257 = vld [vmem:[%s230 + $0x80] sm:$0xf]
      %v258 = vld [vmem:[%s230 + $0x84] sm:$0xf]
      %v259 = vld [vmem:[%s230 + $0x8c] sm:$0xf]
      %v260 = vld [vmem:[%s230 + $0x90] sm:$0xf]
      %v261 = vld [vmem:[%s230 + $0x94] sm:$0xf]
      %v262 = vld [vmem:[%s230 + $0x98] sm:$0xf]
      %v263 = vld [vmem:[%s230 + $0x10] sm:$0x1]
      %v264 = vld [vmem:[%s230 + $0x24] sm:$0x1]
      %v265 = vld [vmem:[%s230 + $0x38] sm:$0x1]
      %v266 = vld [vmem:[%s230 + $0x4c] sm:$0x1]
      %v267 = vld [vmem:[%s230 + $0x60] sm:$0x1]
      %v268 = vld [vmem:[%s230 + $0x74] sm:$0x1]
      %v269 = vld [vmem:[%s230 + $0x88] sm:$0x1]
      %v270 = vld [vmem:[%s230 + $0x9c] sm:$0x1]
      %v271 = vld [vmem:[%s230] sm:$0xe]
      %v272 = vld [vmem:[%s230 + $0x14] sm:$0xe]
      %v273 = vld [vmem:[%s230 + $0x28] sm:$0xe]
      %v274 = vld [vmem:[%s230 + $0x3c] sm:$0xe]
      %v275 = vld [vmem:[%s230 + $0x50] sm:$0xe]
      %v276 = vld [vmem:[%s230 + $0x64] sm:$0xe]
      %v277 = vld [vmem:[%s230 + $0x78] sm:$0xe]
      %v278 = vld [vmem:[%s230 + $0x8c] sm:$0xe]
      %s279 = scalar_lea.vmem %s165, 40
      %v280 = vld [vmem:[%s279] sm:$0xf]
      %v281 = vld [vmem:[%s279 + $0x4] sm:$0xf]
      %v282 = vld [vmem:[%s279 + $0x8] sm:$0xf]
      %v283 = vld [vmem:[%s279 + $0xc] sm:$0xf]
      %v284 = vld [vmem:[%s279 + $0x14] sm:$0xf]
      %v285 = vld [vmem:[%s279 + $0x18] sm:$0xf]
      %v286 = vld [vmem:[%s279 + $0x1c] sm:$0xf]
      %v287 = vld [vmem:[%s279 + $0x20] sm:$0xf]
      %v288 = vld [vmem:[%s279 + $0x28] sm:$0xf]
      %v289 = vld [vmem:[%s279 + $0x2c] sm:$0xf]
      %v290 = vld [vmem:[%s279 + $0x30] sm:$0xf]
      %v291 = vld [vmem:[%s279 + $0x34] sm:$0xf]
      %v292 = vld [vmem:[%s279 + $0x3c] sm:$0xf]
      %v293 = vld [vmem:[%s279 + $0x40] sm:$0xf]
      %v294 = vld [vmem:[%s279 + $0x44] sm:$0xf]
      %v295 = vld [vmem:[%s279 + $0x48] sm:$0xf]
      %v296 = vld [vmem:[%s279 + $0x50] sm:$0xf]
      %v297 = vld [vmem:[%s279 + $0x54] sm:$0xf]
      %v298 = vld [vmem:[%s279 + $0x58] sm:$0xf]
      %v299 = vld [vmem:[%s279 + $0x5c] sm:$0xf]
      %v300 = vld [vmem:[%s279 + $0x64] sm:$0xf]
      %v301 = vld [vmem:[%s279 + $0x68] sm:$0xf]
      %v302 = vld [vmem:[%s279 + $0x6c] sm:$0xf]
      %v303 = vld [vmem:[%s279 + $0x70] sm:$0xf]
      %v304 = vld [vmem:[%s279 + $0x78] sm:$0xf]
      %v305 = vld [vmem:[%s279 + $0x7c] sm:$0xf]
      %v306 = vld [vmem:[%s279 + $0x80] sm:$0xf]
      %v307 = vld [vmem:[%s279 + $0x84] sm:$0xf]
      %v308 = vld [vmem:[%s279 + $0x8c] sm:$0xf]
      %v309 = vld [vmem:[%s279 + $0x90] sm:$0xf]
      %v310 = vld [vmem:[%s279 + $0x94] sm:$0xf]
      %v311 = vld [vmem:[%s279 + $0x98] sm:$0xf]
      %v312 = vld [vmem:[%s279 + $0x10] sm:$0x1]
      %v313 = vld [vmem:[%s279 + $0x24] sm:$0x1]
      %v314 = vld [vmem:[%s279 + $0x38] sm:$0x1]
      %v315 = vld [vmem:[%s279 + $0x4c] sm:$0x1]
      %v316 = vld [vmem:[%s279 + $0x60] sm:$0x1]
      %v317 = vld [vmem:[%s279 + $0x74] sm:$0x1]
      %v318 = vld [vmem:[%s279 + $0x88] sm:$0x1]
      %v319 = vld [vmem:[%s279 + $0x9c] sm:$0x1]
      %v320 = vld [vmem:[%s279] sm:$0xe]
      %v321 = vld [vmem:[%s279 + $0x14] sm:$0xe]
      %v322 = vld [vmem:[%s279 + $0x28] sm:$0xe]
      %v323 = vld [vmem:[%s279 + $0x3c] sm:$0xe]
      %v324 = vld [vmem:[%s279 + $0x50] sm:$0xe]
      %v325 = vld [vmem:[%s279 + $0x64] sm:$0xe]
      %v326 = vld [vmem:[%s279 + $0x78] sm:$0xe]
      %v327 = vld [vmem:[%s279 + $0x8c] sm:$0xe]
      %v360 = vunpack.c.l.b16 %v182
      %v361 = vunpack.c.l.b16 %v183
      %v362 = vunpack.c.l.b16 %v184
      %v363 = vunpack.c.l.b16 %v185
      %v364 = vunpack.c.l.b16 %v186
      %v365 = vunpack.c.l.b16 %v187
      %v366 = vunpack.c.l.b16 %v188
      %v367 = vunpack.c.l.b16 %v189
      %v368 = vunpack.c.l.b16 %v190
      %v369 = vunpack.c.l.b16 %v191
      %v370 = vunpack.c.l.b16 %v192
      %v371 = vunpack.c.l.b16 %v193
      %v372 = vunpack.c.l.b16 %v194
      %v373 = vunpack.c.l.b16 %v195
      %v374 = vunpack.c.l.b16 %v196
      %v375 = vunpack.c.l.b16 %v197
      %v376 = vunpack.c.l.b16 %v198
      %v377 = vunpack.c.l.b16 %v199
      %v378 = vunpack.c.l.b16 %v200
      %v379 = vunpack.c.l.b16 %v201
      %v380 = vunpack.c.l.b16 %v202
      %v381 = vunpack.c.l.b16 %v203
      %v382 = vunpack.c.l.b16 %v204
      %v383 = vunpack.c.l.b16 %v205
      %v384 = vunpack.c.l.b16 %v206
      %v385 = vunpack.c.l.b16 %v207
      %v386 = vunpack.c.l.b16 %v208
      %v387 = vunpack.c.l.b16 %v209
      %v388 = vunpack.c.l.b16 %v210
      %v389 = vunpack.c.l.b16 %v211
      %v390 = vunpack.c.l.b16 %v212
      %v391 = vunpack.c.l.b16 %v213
      %v392 = vpack.c.b16 %v361, %v360
      %v393 = vpack.c.b16 %v363, %v362
      %v394 = vpack.c.b16 %v365, %v364
      %v395 = vpack.c.b16 %v367, %v366
      %v396 = vpack.c.b16 %v369, %v368
      %v397 = vpack.c.b16 %v371, %v370
      %v398 = vpack.c.b16 %v373, %v372
      %v399 = vpack.c.b16 %v375, %v374
      %v400 = vpack.c.b16 %v377, %v376
      %v401 = vpack.c.b16 %v379, %v378
      %v402 = vpack.c.b16 %v381, %v380
      %v403 = vpack.c.b16 %v383, %v382
      %v404 = vpack.c.b16 %v385, %v384
      %v405 = vpack.c.b16 %v387, %v386
      %v406 = vpack.c.b16 %v389, %v388
      %v407 = vpack.c.b16 %v391, %v390
      %v416 = vunpack.c.l.b16 %v214
      %v417 = vunpack.c.l.b16 %v215
      %v418 = vunpack.c.l.b16 %v216
      %v419 = vunpack.c.l.b16 %v217
      %v420 = vunpack.c.l.b16 %v218
      %v421 = vunpack.c.l.b16 %v219
      %v422 = vunpack.c.l.b16 %v220
      %v423 = vunpack.c.l.b16 %v221
      %v424 = vpack.c.b16 %v416, %v416
      %v425 = vpack.c.b16 %v417, %v417
      %v426 = vpack.c.b16 %v418, %v418
      %v427 = vpack.c.b16 %v419, %v419
      %v428 = vpack.c.b16 %v420, %v420
      %v429 = vpack.c.b16 %v421, %v421
      %v430 = vpack.c.b16 %v422, %v422
      %v431 = vpack.c.b16 %v423, %v423
      %vm432 = vsmask.f32 7424
      %v434 = vshrl.u32 %v392, 16
      %v436 = vshll.u32 %v392, 16
      %v438 = vrot.slane %v436, 1
      %v439 = vor.u32 %v434, %v438
      %v441 = vshll.u32 %v393, 16
      %v443 = vrot.slane %v441, 1
      %v444 = vsel %vm432, %v439, %v443
      %v445 = vshrl.u32 %v393, 16
      %v447 = vor.u32 %v445, %v443
      %v449 = vshll.u32 %v424, 16
      %v451 = vrot.slane %v449, 1
      %v452 = vsel %vm432, %v447, %v451
      %v454 = vshrl.u32 %v394, 16
      %v456 = vshll.u32 %v394, 16
      %v458 = vrot.slane %v456, 1
      %v459 = vor.u32 %v454, %v458
      %v461 = vshll.u32 %v395, 16
      %v463 = vrot.slane %v461, 1
      %v464 = vsel %vm432, %v459, %v463
      %v465 = vshrl.u32 %v395, 16
      %v467 = vor.u32 %v465, %v463
      %v469 = vshll.u32 %v425, 16
      %v471 = vrot.slane %v469, 1
      %v472 = vsel %vm432, %v467, %v471
      %v474 = vshrl.u32 %v396, 16
      %v476 = vshll.u32 %v396, 16
      %v478 = vrot.slane %v476, 1
      %v479 = vor.u32 %v474, %v478
      %v481 = vshll.u32 %v397, 16
      %v483 = vrot.slane %v481, 1
      %v484 = vsel %vm432, %v479, %v483
      %v485 = vshrl.u32 %v397, 16
      %v487 = vor.u32 %v485, %v483
      %v489 = vshll.u32 %v426, 16
      %v491 = vrot.slane %v489, 1
      %v492 = vsel %vm432, %v487, %v491
      %v494 = vshrl.u32 %v398, 16
      %v496 = vshll.u32 %v398, 16
      %v498 = vrot.slane %v496, 1
      %v499 = vor.u32 %v494, %v498
      %v501 = vshll.u32 %v399, 16
      %v503 = vrot.slane %v501, 1
      %v504 = vsel %vm432, %v499, %v503
      %v505 = vshrl.u32 %v399, 16
      %v507 = vor.u32 %v505, %v503
      %v509 = vshll.u32 %v427, 16
      %v511 = vrot.slane %v509, 1
      %v512 = vsel %vm432, %v507, %v511
      %v514 = vshrl.u32 %v400, 16
      %v516 = vshll.u32 %v400, 16
      %v518 = vrot.slane %v516, 1
      %v519 = vor.u32 %v514, %v518
      %v521 = vshll.u32 %v401, 16
      %v523 = vrot.slane %v521, 1
      %v524 = vsel %vm432, %v519, %v523
      %v525 = vshrl.u32 %v401, 16
      %v527 = vor.u32 %v525, %v523
      %v529 = vshll.u32 %v428, 16
      %v531 = vrot.slane %v529, 1
      %v532 = vsel %vm432, %v527, %v531
      %v534 = vshrl.u32 %v402, 16
      %v536 = vshll.u32 %v402, 16
      %v538 = vrot.slane %v536, 1
      %v539 = vor.u32 %v534, %v538
      %v541 = vshll.u32 %v403, 16
      %v543 = vrot.slane %v541, 1
      %v544 = vsel %vm432, %v539, %v543
      %v545 = vshrl.u32 %v403, 16
      %v547 = vor.u32 %v545, %v543
      %v549 = vshll.u32 %v429, 16
      %v551 = vrot.slane %v549, 1
      %v552 = vsel %vm432, %v547, %v551
      %v554 = vshrl.u32 %v404, 16
      %v556 = vshll.u32 %v404, 16
      %v558 = vrot.slane %v556, 1
      %v559 = vor.u32 %v554, %v558
      %v561 = vshll.u32 %v405, 16
      %v563 = vrot.slane %v561, 1
      %v564 = vsel %vm432, %v559, %v563
      %v565 = vshrl.u32 %v405, 16
      %v567 = vor.u32 %v565, %v563
      %v569 = vshll.u32 %v430, 16
      %v571 = vrot.slane %v569, 1
      %v572 = vsel %vm432, %v567, %v571
      %v574 = vshrl.u32 %v406, 16
      %v576 = vshll.u32 %v406, 16
      %v578 = vrot.slane %v576, 1
      %v579 = vor.u32 %v574, %v578
      %v581 = vshll.u32 %v407, 16
      %v583 = vrot.slane %v581, 1
      %v584 = vsel %vm432, %v579, %v583
      %v585 = vshrl.u32 %v407, 16
      %v587 = vor.u32 %v585, %v583
      %v589 = vshll.u32 %v431, 16
      %v591 = vrot.slane %v589, 1
      %v592 = vsel %vm432, %v587, %v591
      %593 = vrot.lane.b32.xlu0 %v444, 8
      %v594 = vpop.permute.xlu0 %593
      %595 = vrot.lane.b32.xlu0 %v452, 8
      %v596 = vpop.permute.xlu0 %595
      %597 = vrot.lane.b32.xlu0 %v464, 8
      %v598 = vpop.permute.xlu0 %597
      %599 = vrot.lane.b32.xlu0 %v472, 8
      %v600 = vpop.permute.xlu0 %599
      %601 = vrot.lane.b32.xlu0 %v484, 8
      %v602 = vpop.permute.xlu0 %601
      %603 = vrot.lane.b32.xlu0 %v492, 8
      %v604 = vpop.permute.xlu0 %603
      %605 = vrot.lane.b32.xlu0 %v504, 8
      %v606 = vpop.permute.xlu0 %605
      %607 = vrot.lane.b32.xlu0 %v512, 8
      %v608 = vpop.permute.xlu0 %607
      %609 = vrot.lane.b32.xlu0 %v524, 8
      %v610 = vpop.permute.xlu0 %609
      %611 = vrot.lane.b32.xlu0 %v532, 8
      %v612 = vpop.permute.xlu0 %611
      %613 = vrot.lane.b32.xlu0 %v544, 8
      %v614 = vpop.permute.xlu0 %613
      %615 = vrot.lane.b32.xlu0 %v552, 8
      %v616 = vpop.permute.xlu0 %615
      %617 = vrot.lane.b32.xlu0 %v564, 8
      %v618 = vpop.permute.xlu0 %617
      %619 = vrot.lane.b32.xlu0 %v572, 8
      %v620 = vpop.permute.xlu0 %619
      %621 = vrot.lane.b32.xlu0 %v584, 8
      %v622 = vpop.permute.xlu0 %621
      %623 = vrot.lane.b32.xlu0 %v592, 8
      %v624 = vpop.permute.xlu0 %623
      %v633 = vunpack.c.l.b16 %v222
      %v634 = vunpack.c.l.b16 %v223
      %v635 = vunpack.c.l.b16 %v224
      %v636 = vunpack.c.l.b16 %v225
      %v637 = vunpack.c.l.b16 %v226
      %v638 = vunpack.c.l.b16 %v227
      %v639 = vunpack.c.l.b16 %v228
      %v640 = vunpack.c.l.b16 %v229
      %v641 = vpack.c.b16 %v361, %v633
      %v642 = vpack.c.b16 %v365, %v634
      %v643 = vpack.c.b16 %v369, %v635
      %v644 = vpack.c.b16 %v373, %v636
      %v645 = vpack.c.b16 %v377, %v637
      %v646 = vpack.c.b16 %v381, %v638
      %v647 = vpack.c.b16 %v385, %v639
      %v648 = vpack.c.b16 %v389, %v640
      %vm649 = vcmask 1046528
      %v650 = vrot.slane %v641, 1
      %v651 = vrot.slane %v393, 1
      %v652 = vsel %vm649, %v650, %v651
      %v653 = vrot.slane %v424, 1
      %v654 = vsel %vm649, %v651, %v653
      %v655 = vrot.slane %v642, 1
      %v656 = vrot.slane %v395, 1
      %v657 = vsel %vm649, %v655, %v656
      %v658 = vrot.slane %v425, 1
      %v659 = vsel %vm649, %v656, %v658
      %v660 = vrot.slane %v643, 1
      %v661 = vrot.slane %v397, 1
      %v662 = vsel %vm649, %v660, %v661
      %v663 = vrot.slane %v426, 1
      %v664 = vsel %vm649, %v661, %v663
      %v665 = vrot.slane %v644, 1
      %v666 = vrot.slane %v399, 1
      %v667 = vsel %vm649, %v665, %v666
      %v668 = vrot.slane %v427, 1
      %v669 = vsel %vm649, %v666, %v668
      %v670 = vrot.slane %v645, 1
      %v671 = vrot.slane %v401, 1
      %v672 = vsel %vm649, %v670, %v671
      %v673 = vrot.slane %v428, 1
      %v674 = vsel %vm649, %v671, %v673
      %v675 = vrot.slane %v646, 1
      %v676 = vrot.slane %v403, 1
      %v677 = vsel %vm649, %v675, %v676
      %v678 = vrot.slane %v429, 1
      %v679 = vsel %vm649, %v676, %v678
      %v680 = vrot.slane %v647, 1
      %v681 = vrot.slane %v405, 1
      %v682 = vsel %vm649, %v680, %v681
      %v683 = vrot.slane %v430, 1
      %v684 = vsel %vm649, %v681, %v683
      %v685 = vrot.slane %v648, 1
      %v686 = vrot.slane %v407, 1
      %v687 = vsel %vm649, %v685, %v686
      %v688 = vrot.slane %v431, 1
      %v689 = vsel %vm649, %v686, %v688
      %690 = vrot.lane.b32.xlu0 %v652, 16
      %v691 = vpop.permute.xlu0 %690
      %692 = vrot.lane.b32.xlu0 %v654, 16
      %v693 = vpop.permute.xlu0 %692
      %694 = vrot.lane.b32.xlu0 %v657, 16
      %v695 = vpop.permute.xlu0 %694
      %696 = vrot.lane.b32.xlu0 %v659, 16
      %v697 = vpop.permute.xlu0 %696
      %698 = vrot.lane.b32.xlu0 %v662, 16
      %v699 = vpop.permute.xlu0 %698
      %700 = vrot.lane.b32.xlu0 %v664, 16
      %v701 = vpop.permute.xlu0 %700
      %702 = vrot.lane.b32.xlu0 %v667, 16
      %v703 = vpop.permute.xlu0 %702
      %704 = vrot.lane.b32.xlu0 %v669, 16
      %v705 = vpop.permute.xlu0 %704
      %706 = vrot.lane.b32.xlu0 %v672, 16
      %v707 = vpop.permute.xlu0 %706
      %708 = vrot.lane.b32.xlu0 %v674, 16
      %v709 = vpop.permute.xlu0 %708
      %710 = vrot.lane.b32.xlu0 %v677, 16
      %v711 = vpop.permute.xlu0 %710
      %712 = vrot.lane.b32.xlu0 %v679, 16
      %v713 = vpop.permute.xlu0 %712
      %714 = vrot.lane.b32.xlu0 %v682, 16
      %v715 = vpop.permute.xlu0 %714
      %716 = vrot.lane.b32.xlu0 %v684, 16
      %v717 = vpop.permute.xlu0 %716
      %718 = vrot.lane.b32.xlu0 %v687, 16
      %v719 = vpop.permute.xlu0 %718
      %720 = vrot.lane.b32.xlu0 %v689, 16
      %v721 = vpop.permute.xlu0 %720
      %v754 = vunpack.c.l.b16 %v231
      %v755 = vunpack.c.l.b16 %v232
      %v756 = vunpack.c.l.b16 %v233
      %v757 = vunpack.c.l.b16 %v234
      %v758 = vunpack.c.l.b16 %v235
      %v759 = vunpack.c.l.b16 %v236
      %v760 = vunpack.c.l.b16 %v237
      %v761 = vunpack.c.l.b16 %v238
      %v762 = vunpack.c.l.b16 %v239
      %v763 = vunpack.c.l.b16 %v240
      %v764 = vunpack.c.l.b16 %v241
      %v765 = vunpack.c.l.b16 %v242
      %v766 = vunpack.c.l.b16 %v243
      %v767 = vunpack.c.l.b16 %v244
      %v768 = vunpack.c.l.b16 %v245
      %v769 = vunpack.c.l.b16 %v246
      %v770 = vunpack.c.l.b16 %v247
      %v771 = vunpack.c.l.b16 %v248
      %v772 = vunpack.c.l.b16 %v249
      %v773 = vunpack.c.l.b16 %v250
      %v774 = vunpack.c.l.b16 %v251
      %v775 = vunpack.c.l.b16 %v252
      %v776 = vunpack.c.l.b16 %v253
      %v777 = vunpack.c.l.b16 %v254
      %v778 = vunpack.c.l.b16 %v255
      %v779 = vunpack.c.l.b16 %v256
      %v780 = vunpack.c.l.b16 %v257
      %v781 = vunpack.c.l.b16 %v258
      %v782 = vunpack.c.l.b16 %v259
      %v783 = vunpack.c.l.b16 %v260
      %v784 = vunpack.c.l.b16 %v261
      %v785 = vunpack.c.l.b16 %v262
      %v786 = vpack.c.b16 %v755, %v754
      %v787 = vpack.c.b16 %v757, %v756
      %v788 = vpack.c.b16 %v759, %v758
      %v789 = vpack.c.b16 %v761, %v760
      %v790 = vpack.c.b16 %v763, %v762
      %v791 = vpack.c.b16 %v765, %v764
      %v792 = vpack.c.b16 %v767, %v766
      %v793 = vpack.c.b16 %v769, %v768
      %v794 = vpack.c.b16 %v771, %v770
      %v795 = vpack.c.b16 %v773, %v772
      %v796 = vpack.c.b16 %v775, %v774
      %v797 = vpack.c.b16 %v777, %v776
      %v798 = vpack.c.b16 %v779, %v778
      %v799 = vpack.c.b16 %v781, %v780
      %v800 = vpack.c.b16 %v783, %v782
      %v801 = vpack.c.b16 %v785, %v784
      %802 = vrot.lane.b32.xlu0 %v786, 24
      %v803 = vpop.permute.xlu0 %802
      %804 = vrot.lane.b32.xlu0 %v787, 24
      %v805 = vpop.permute.xlu0 %804
      %806 = vrot.lane.b32.xlu0 %v788, 24
      %v807 = vpop.permute.xlu0 %806
      %808 = vrot.lane.b32.xlu0 %v789, 24
      %v809 = vpop.permute.xlu0 %808
      %810 = vrot.lane.b32.xlu0 %v790, 24
      %v811 = vpop.permute.xlu0 %810
      %812 = vrot.lane.b32.xlu0 %v791, 24
      %v813 = vpop.permute.xlu0 %812
      %814 = vrot.lane.b32.xlu0 %v792, 24
      %v815 = vpop.permute.xlu0 %814
      %816 = vrot.lane.b32.xlu0 %v793, 24
      %v817 = vpop.permute.xlu0 %816
      %818 = vrot.lane.b32.xlu0 %v794, 24
      %v819 = vpop.permute.xlu0 %818
      %820 = vrot.lane.b32.xlu0 %v795, 24
      %v821 = vpop.permute.xlu0 %820
      %822 = vrot.lane.b32.xlu0 %v796, 24
      %v823 = vpop.permute.xlu0 %822
      %824 = vrot.lane.b32.xlu0 %v797, 24
      %v825 = vpop.permute.xlu0 %824
      %826 = vrot.lane.b32.xlu0 %v798, 24
      %v827 = vpop.permute.xlu0 %826
      %828 = vrot.lane.b32.xlu0 %v799, 24
      %v829 = vpop.permute.xlu0 %828
      %830 = vrot.lane.b32.xlu0 %v800, 24
      %v831 = vpop.permute.xlu0 %830
      %832 = vrot.lane.b32.xlu0 %v801, 24
      %v833 = vpop.permute.xlu0 %832
      %v842 = vunpack.c.l.b16 %v263
      %v843 = vunpack.c.l.b16 %v264
      %v844 = vunpack.c.l.b16 %v265
      %v845 = vunpack.c.l.b16 %v266
      %v846 = vunpack.c.l.b16 %v267
      %v847 = vunpack.c.l.b16 %v268
      %v848 = vunpack.c.l.b16 %v269
      %v849 = vunpack.c.l.b16 %v270
      %v850 = vpack.c.b16 %v842, %v842
      %v851 = vpack.c.b16 %v843, %v843
      %v852 = vpack.c.b16 %v844, %v844
      %v853 = vpack.c.b16 %v845, %v845
      %v854 = vpack.c.b16 %v846, %v846
      %v855 = vpack.c.b16 %v847, %v847
      %v856 = vpack.c.b16 %v848, %v848
      %v857 = vpack.c.b16 %v849, %v849
      %v859 = vshrl.u32 %v786, 16
      %v861 = vshll.u32 %v786, 16
      %v863 = vrot.slane %v861, 1
      %v864 = vor.u32 %v859, %v863
      %v866 = vshll.u32 %v787, 16
      %v868 = vrot.slane %v866, 1
      %v869 = vsel %vm432, %v864, %v868
      %v870 = vshrl.u32 %v787, 16
      %v872 = vor.u32 %v870, %v868
      %v874 = vshll.u32 %v850, 16
      %v876 = vrot.slane %v874, 1
      %v877 = vsel %vm432, %v872, %v876
      %v879 = vshrl.u32 %v788, 16
      %v881 = vshll.u32 %v788, 16
      %v883 = vrot.slane %v881, 1
      %v884 = vor.u32 %v879, %v883
      %v886 = vshll.u32 %v789, 16
      %v888 = vrot.slane %v886, 1
      %v889 = vsel %vm432, %v884, %v888
      %v890 = vshrl.u32 %v789, 16
      %v892 = vor.u32 %v890, %v888
      %v894 = vshll.u32 %v851, 16
      %v896 = vrot.slane %v894, 1
      %v897 = vsel %vm432, %v892, %v896
      %v899 = vshrl.u32 %v790, 16
      %v901 = vshll.u32 %v790, 16
      %v903 = vrot.slane %v901, 1
      %v904 = vor.u32 %v899, %v903
      %v906 = vshll.u32 %v791, 16
      %v908 = vrot.slane %v906, 1
      %v909 = vsel %vm432, %v904, %v908
      %v910 = vshrl.u32 %v791, 16
      %v912 = vor.u32 %v910, %v908
      %v914 = vshll.u32 %v852, 16
      %v916 = vrot.slane %v914, 1
      %v917 = vsel %vm432, %v912, %v916
      %v919 = vshrl.u32 %v792, 16
      %v921 = vshll.u32 %v792, 16
      %v923 = vrot.slane %v921, 1
      %v924 = vor.u32 %v919, %v923
      %v926 = vshll.u32 %v793, 16
      %v928 = vrot.slane %v926, 1
      %v929 = vsel %vm432, %v924, %v928
      %v930 = vshrl.u32 %v793, 16
      %v932 = vor.u32 %v930, %v928
      %v934 = vshll.u32 %v853, 16
      %v936 = vrot.slane %v934, 1
      %v937 = vsel %vm432, %v932, %v936
      %v939 = vshrl.u32 %v794, 16
      %v941 = vshll.u32 %v794, 16
      %v943 = vrot.slane %v941, 1
      %v944 = vor.u32 %v939, %v943
      %v946 = vshll.u32 %v795, 16
      %v948 = vrot.slane %v946, 1
      %v949 = vsel %vm432, %v944, %v948
      %v950 = vshrl.u32 %v795, 16
      %v952 = vor.u32 %v950, %v948
      %v954 = vshll.u32 %v854, 16
      %v956 = vrot.slane %v954, 1
      %v957 = vsel %vm432, %v952, %v956
      %v959 = vshrl.u32 %v796, 16
      %v961 = vshll.u32 %v796, 16
      %v963 = vrot.slane %v961, 1
      %v964 = vor.u32 %v959, %v963
      %v966 = vshll.u32 %v797, 16
      %v968 = vrot.slane %v966, 1
      %v969 = vsel %vm432, %v964, %v968
      %v970 = vshrl.u32 %v797, 16
      %v972 = vor.u32 %v970, %v968
      %v974 = vshll.u32 %v855, 16
      %v976 = vrot.slane %v974, 1
      %v977 = vsel %vm432, %v972, %v976
      %v979 = vshrl.u32 %v798, 16
      %v981 = vshll.u32 %v798, 16
      %v983 = vrot.slane %v981, 1
      %v984 = vor.u32 %v979, %v983
      %v986 = vshll.u32 %v799, 16
      %v988 = vrot.slane %v986, 1
      %v989 = vsel %vm432, %v984, %v988
      %v990 = vshrl.u32 %v799, 16
      %v992 = vor.u32 %v990, %v988
      %v994 = vshll.u32 %v856, 16
      %v996 = vrot.slane %v994, 1
      %v997 = vsel %vm432, %v992, %v996
      %v999 = vshrl.u32 %v800, 16
      %v1001 = vshll.u32 %v800, 16
      %v1003 = vrot.slane %v1001, 1
      %v1004 = vor.u32 %v999, %v1003
      %v1006 = vshll.u32 %v801, 16
      %v1008 = vrot.slane %v1006, 1
      %v1009 = vsel %vm432, %v1004, %v1008
      %v1010 = vshrl.u32 %v801, 16
      %v1012 = vor.u32 %v1010, %v1008
      %v1014 = vshll.u32 %v857, 16
      %v1016 = vrot.slane %v1014, 1
      %v1017 = vsel %vm432, %v1012, %v1016
      %1018 = vrot.lane.b32.xlu0 %v869, 32
      %v1019 = vpop.permute.xlu0 %1018
      %1020 = vrot.lane.b32.xlu0 %v877, 32
      %v1021 = vpop.permute.xlu0 %1020
      %1022 = vrot.lane.b32.xlu0 %v889, 32
      %v1023 = vpop.permute.xlu0 %1022
      %1024 = vrot.lane.b32.xlu0 %v897, 32
      %v1025 = vpop.permute.xlu0 %1024
      %1026 = vrot.lane.b32.xlu0 %v909, 32
      %v1027 = vpop.permute.xlu0 %1026
      %1028 = vrot.lane.b32.xlu0 %v917, 32
      %v1029 = vpop.permute.xlu0 %1028
      %1030 = vrot.lane.b32.xlu0 %v929, 32
      %v1031 = vpop.permute.xlu0 %1030
      %1032 = vrot.lane.b32.xlu0 %v937, 32
      %v1033 = vpop.permute.xlu0 %1032
      %1034 = vrot.lane.b32.xlu0 %v949, 32
      %v1035 = vpop.permute.xlu0 %1034
      %1036 = vrot.lane.b32.xlu0 %v957, 32
      %v1037 = vpop.permute.xlu0 %1036
      %1038 = vrot.lane.b32.xlu0 %v969, 32
      %v1039 = vpop.permute.xlu0 %1038
      %1040 = vrot.lane.b32.xlu0 %v977, 32
      %v1041 = vpop.permute.xlu0 %1040
      %1042 = vrot.lane.b32.xlu0 %v989, 32
      %v1043 = vpop.permute.xlu0 %1042
      %1044 = vrot.lane.b32.xlu0 %v997, 32
      %v1045 = vpop.permute.xlu0 %1044
      %1046 = vrot.lane.b32.xlu0 %v1009, 32
      %v1047 = vpop.permute.xlu0 %1046
      %1048 = vrot.lane.b32.xlu0 %v1017, 32
      %v1049 = vpop.permute.xlu0 %1048
      %v1058 = vunpack.c.l.b16 %v271
      %v1059 = vunpack.c.l.b16 %v272
      %v1060 = vunpack.c.l.b16 %v273
      %v1061 = vunpack.c.l.b16 %v274
      %v1062 = vunpack.c.l.b16 %v275
      %v1063 = vunpack.c.l.b16 %v276
      %v1064 = vunpack.c.l.b16 %v277
      %v1065 = vunpack.c.l.b16 %v278
      %v1066 = vpack.c.b16 %v755, %v1058
      %v1067 = vpack.c.b16 %v759, %v1059
      %v1068 = vpack.c.b16 %v763, %v1060
      %v1069 = vpack.c.b16 %v767, %v1061
      %v1070 = vpack.c.b16 %v771, %v1062
      %v1071 = vpack.c.b16 %v775, %v1063
      %v1072 = vpack.c.b16 %v779, %v1064
      %v1073 = vpack.c.b16 %v783, %v1065
      %v1074 = vrot.slane %v1066, 1
      %v1075 = vrot.slane %v787, 1
      %v1076 = vsel %vm649, %v1074, %v1075
      %v1077 = vrot.slane %v850, 1
      %v1078 = vsel %vm649, %v1075, %v1077
      %v1079 = vrot.slane %v1067, 1
      %v1080 = vrot.slane %v789, 1
      %v1081 = vsel %vm649, %v1079, %v1080
      %v1082 = vrot.slane %v851, 1
      %v1083 = vsel %vm649, %v1080, %v1082
      %v1084 = vrot.slane %v1068, 1
      %v1085 = vrot.slane %v791, 1
      %v1086 = vsel %vm649, %v1084, %v1085
      %v1087 = vrot.slane %v852, 1
      %v1088 = vsel %vm649, %v1085, %v1087
      %v1089 = vrot.slane %v1069, 1
      %v1090 = vrot.slane %v793, 1
      %v1091 = vsel %vm649, %v1089, %v1090
      %v1092 = vrot.slane %v853, 1
      %v1093 = vsel %vm649, %v1090, %v1092
      %v1094 = vrot.slane %v1070, 1
      %v1095 = vrot.slane %v795, 1
      %v1096 = vsel %vm649, %v1094, %v1095
      %v1097 = vrot.slane %v854, 1
      %v1098 = vsel %vm649, %v1095, %v1097
      %v1099 = vrot.slane %v1071, 1
      %v1100 = vrot.slane %v797, 1
      %v1101 = vsel %vm649, %v1099, %v1100
      %v1102 = vrot.slane %v855, 1
      %v1103 = vsel %vm649, %v1100, %v1102
      %v1104 = vrot.slane %v1072, 1
      %v1105 = vrot.slane %v799, 1
      %v1106 = vsel %vm649, %v1104, %v1105
      %v1107 = vrot.slane %v856, 1
      %v1108 = vsel %vm649, %v1105, %v1107
      %v1109 = vrot.slane %v1073, 1
      %v1110 = vrot.slane %v801, 1
      %v1111 = vsel %vm649, %v1109, %v1110
      %v1112 = vrot.slane %v857, 1
      %v1113 = vsel %vm649, %v1110, %v1112
      %1114 = vrot.lane.b32.xlu0 %v1076, 40
      %v1115 = vpop.permute.xlu0 %1114
      %1116 = vrot.lane.b32.xlu0 %v1078, 40
      %v1117 = vpop.permute.xlu0 %1116
      %1118 = vrot.lane.b32.xlu0 %v1081, 40
      %v1119 = vpop.permute.xlu0 %1118
      %1120 = vrot.lane.b32.xlu0 %v1083, 40
      %v1121 = vpop.permute.xlu0 %1120
      %1122 = vrot.lane.b32.xlu0 %v1086, 40
      %v1123 = vpop.permute.xlu0 %1122
      %1124 = vrot.lane.b32.xlu0 %v1088, 40
      %v1125 = vpop.permute.xlu0 %1124
      %1126 = vrot.lane.b32.xlu0 %v1091, 40
      %v1127 = vpop.permute.xlu0 %1126
      %1128 = vrot.lane.b32.xlu0 %v1093, 40
      %v1129 = vpop.permute.xlu0 %1128
      %1130 = vrot.lane.b32.xlu0 %v1096, 40
      %v1131 = vpop.permute.xlu0 %1130
      %1132 = vrot.lane.b32.xlu0 %v1098, 40
      %v1133 = vpop.permute.xlu0 %1132
      %1134 = vrot.lane.b32.xlu0 %v1101, 40
      %v1135 = vpop.permute.xlu0 %1134
      %1136 = vrot.lane.b32.xlu0 %v1103, 40
      %v1137 = vpop.permute.xlu0 %1136
      %1138 = vrot.lane.b32.xlu0 %v1106, 40
      %v1139 = vpop.permute.xlu0 %1138
      %1140 = vrot.lane.b32.xlu0 %v1108, 40
      %v1141 = vpop.permute.xlu0 %1140
      %1142 = vrot.lane.b32.xlu0 %v1111, 40
      %v1143 = vpop.permute.xlu0 %1142
      %1144 = vrot.lane.b32.xlu0 %v1113, 40
      %v1145 = vpop.permute.xlu0 %1144
      %v1178 = vunpack.c.l.b16 %v280
      %v1179 = vunpack.c.l.b16 %v281
      %v1180 = vunpack.c.l.b16 %v282
      %v1181 = vunpack.c.l.b16 %v283
      %v1182 = vunpack.c.l.b16 %v284
      %v1183 = vunpack.c.l.b16 %v285
      %v1184 = vunpack.c.l.b16 %v286
      %v1185 = vunpack.c.l.b16 %v287
      %v1186 = vunpack.c.l.b16 %v288
      %v1187 = vunpack.c.l.b16 %v289
      %v1188 = vunpack.c.l.b16 %v290
      %v1189 = vunpack.c.l.b16 %v291
      %v1190 = vunpack.c.l.b16 %v292
      %v1191 = vunpack.c.l.b16 %v293
      %v1192 = vunpack.c.l.b16 %v294
      %v1193 = vunpack.c.l.b16 %v295
      %v1194 = vunpack.c.l.b16 %v296
      %v1195 = vunpack.c.l.b16 %v297
      %v1196 = vunpack.c.l.b16 %v298
      %v1197 = vunpack.c.l.b16 %v299
      %v1198 = vunpack.c.l.b16 %v300
      %v1199 = vunpack.c.l.b16 %v301
      %v1200 = vunpack.c.l.b16 %v302
      %v1201 = vunpack.c.l.b16 %v303
      %v1202 = vunpack.c.l.b16 %v304
      %v1203 = vunpack.c.l.b16 %v305
      %v1204 = vunpack.c.l.b16 %v306
      %v1205 = vunpack.c.l.b16 %v307
      %v1206 = vunpack.c.l.b16 %v308
      %v1207 = vunpack.c.l.b16 %v309
      %v1208 = vunpack.c.l.b16 %v310
      %v1209 = vunpack.c.l.b16 %v311
      %v1210 = vpack.c.b16 %v1179, %v1178
      %v1211 = vpack.c.b16 %v1181, %v1180
      %v1212 = vpack.c.b16 %v1183, %v1182
      %v1213 = vpack.c.b16 %v1185, %v1184
      %v1214 = vpack.c.b16 %v1187, %v1186
      %v1215 = vpack.c.b16 %v1189, %v1188
      %v1216 = vpack.c.b16 %v1191, %v1190
      %v1217 = vpack.c.b16 %v1193, %v1192
      %v1218 = vpack.c.b16 %v1195, %v1194
      %v1219 = vpack.c.b16 %v1197, %v1196
      %v1220 = vpack.c.b16 %v1199, %v1198
      %v1221 = vpack.c.b16 %v1201, %v1200
      %v1222 = vpack.c.b16 %v1203, %v1202
      %v1223 = vpack.c.b16 %v1205, %v1204
      %v1224 = vpack.c.b16 %v1207, %v1206
      %v1225 = vpack.c.b16 %v1209, %v1208
      %1226 = vrot.lane.b32.xlu0 %v1210, 48
      %v1227 = vpop.permute.xlu0 %1226
      %1228 = vrot.lane.b32.xlu0 %v1211, 48
      %v1229 = vpop.permute.xlu0 %1228
      %1230 = vrot.lane.b32.xlu0 %v1212, 48
      %v1231 = vpop.permute.xlu0 %1230
      %1232 = vrot.lane.b32.xlu0 %v1213, 48
      %v1233 = vpop.permute.xlu0 %1232
      %1234 = vrot.lane.b32.xlu0 %v1214, 48
      %v1235 = vpop.permute.xlu0 %1234
      %1236 = vrot.lane.b32.xlu0 %v1215, 48
      %v1237 = vpop.permute.xlu0 %1236
      %1238 = vrot.lane.b32.xlu0 %v1216, 48
      %v1239 = vpop.permute.xlu0 %1238
      %1240 = vrot.lane.b32.xlu0 %v1217, 48
      %v1241 = vpop.permute.xlu0 %1240
      %1242 = vrot.lane.b32.xlu0 %v1218, 48
      %v1243 = vpop.permute.xlu0 %1242
      %1244 = vrot.lane.b32.xlu0 %v1219, 48
      %v1245 = vpop.permute.xlu0 %1244
      %1246 = vrot.lane.b32.xlu0 %v1220, 48
      %v1247 = vpop.permute.xlu0 %1246
      %1248 = vrot.lane.b32.xlu0 %v1221, 48
      %v1249 = vpop.permute.xlu0 %1248
      %1250 = vrot.lane.b32.xlu0 %v1222, 48
      %v1251 = vpop.permute.xlu0 %1250
      %1252 = vrot.lane.b32.xlu0 %v1223, 48
      %v1253 = vpop.permute.xlu0 %1252
      %1254 = vrot.lane.b32.xlu0 %v1224, 48
      %v1255 = vpop.permute.xlu0 %1254
      %1256 = vrot.lane.b32.xlu0 %v1225, 48
      %v1257 = vpop.permute.xlu0 %1256
      %v1266 = vunpack.c.l.b16 %v312
      %v1267 = vunpack.c.l.b16 %v313
      %v1268 = vunpack.c.l.b16 %v314
      %v1269 = vunpack.c.l.b16 %v315
      %v1270 = vunpack.c.l.b16 %v316
      %v1271 = vunpack.c.l.b16 %v317
      %v1272 = vunpack.c.l.b16 %v318
      %v1273 = vunpack.c.l.b16 %v319
      %v1274 = vpack.c.b16 %v1266, %v1266
      %v1275 = vpack.c.b16 %v1267, %v1267
      %v1276 = vpack.c.b16 %v1268, %v1268
      %v1277 = vpack.c.b16 %v1269, %v1269
      %v1278 = vpack.c.b16 %v1270, %v1270
      %v1279 = vpack.c.b16 %v1271, %v1271
      %v1280 = vpack.c.b16 %v1272, %v1272
      %v1281 = vpack.c.b16 %v1273, %v1273
      %v1283 = vshrl.u32 %v1210, 16
      %v1285 = vshll.u32 %v1210, 16
      %v1287 = vrot.slane %v1285, 1
      %v1288 = vor.u32 %v1283, %v1287
      %v1290 = vshll.u32 %v1211, 16
      %v1292 = vrot.slane %v1290, 1
      %v1293 = vsel %vm432, %v1288, %v1292
      %v1294 = vshrl.u32 %v1211, 16
      %v1296 = vor.u32 %v1294, %v1292
      %v1298 = vshll.u32 %v1274, 16
      %v1300 = vrot.slane %v1298, 1
      %v1301 = vsel %vm432, %v1296, %v1300
      %v1303 = vshrl.u32 %v1212, 16
      %v1305 = vshll.u32 %v1212, 16
      %v1307 = vrot.slane %v1305, 1
      %v1308 = vor.u32 %v1303, %v1307
      %v1310 = vshll.u32 %v1213, 16
      %v1312 = vrot.slane %v1310, 1
      %v1313 = vsel %vm432, %v1308, %v1312
      %v1314 = vshrl.u32 %v1213, 16
      %v1316 = vor.u32 %v1314, %v1312
      %v1318 = vshll.u32 %v1275, 16
      %v1320 = vrot.slane %v1318, 1
      %v1321 = vsel %vm432, %v1316, %v1320
      %v1323 = vshrl.u32 %v1214, 16
      %v1325 = vshll.u32 %v1214, 16
      %v1327 = vrot.slane %v1325, 1
      %v1328 = vor.u32 %v1323, %v1327
      %v1330 = vshll.u32 %v1215, 16
      %v1332 = vrot.slane %v1330, 1
      %v1333 = vsel %vm432, %v1328, %v1332
      %v1334 = vshrl.u32 %v1215, 16
      %v1336 = vor.u32 %v1334, %v1332
      %v1338 = vshll.u32 %v1276, 16
      %v1340 = vrot.slane %v1338, 1
      %v1341 = vsel %vm432, %v1336, %v1340
      %v1343 = vshrl.u32 %v1216, 16
      %v1345 = vshll.u32 %v1216, 16
      %v1347 = vrot.slane %v1345, 1
      %v1348 = vor.u32 %v1343, %v1347
      %v1350 = vshll.u32 %v1217, 16
      %v1352 = vrot.slane %v1350, 1
      %v1353 = vsel %vm432, %v1348, %v1352
      %v1354 = vshrl.u32 %v1217, 16
      %v1356 = vor.u32 %v1354, %v1352
      %v1358 = vshll.u32 %v1277, 16
      %v1360 = vrot.slane %v1358, 1
      %v1361 = vsel %vm432, %v1356, %v1360
      %v1363 = vshrl.u32 %v1218, 16
      %v1365 = vshll.u32 %v1218, 16
      %v1367 = vrot.slane %v1365, 1
      %v1368 = vor.u32 %v1363, %v1367
      %v1370 = vshll.u32 %v1219, 16
      %v1372 = vrot.slane %v1370, 1
      %v1373 = vsel %vm432, %v1368, %v1372
      %v1374 = vshrl.u32 %v1219, 16
      %v1376 = vor.u32 %v1374, %v1372
      %v1378 = vshll.u32 %v1278, 16
      %v1380 = vrot.slane %v1378, 1
      %v1381 = vsel %vm432, %v1376, %v1380
      %v1383 = vshrl.u32 %v1220, 16
      %v1385 = vshll.u32 %v1220, 16
      %v1387 = vrot.slane %v1385, 1
      %v1388 = vor.u32 %v1383, %v1387
      %v1390 = vshll.u32 %v1221, 16
      %v1392 = vrot.slane %v1390, 1
      %v1393 = vsel %vm432, %v1388, %v1392
      %v1394 = vshrl.u32 %v1221, 16
      %v1396 = vor.u32 %v1394, %v1392
      %v1398 = vshll.u32 %v1279, 16
      %v1400 = vrot.slane %v1398, 1
      %v1401 = vsel %vm432, %v1396, %v1400
      %v1403 = vshrl.u32 %v1222, 16
      %v1405 = vshll.u32 %v1222, 16
      %v1407 = vrot.slane %v1405, 1
      %v1408 = vor.u32 %v1403, %v1407
      %v1410 = vshll.u32 %v1223, 16
      %v1412 = vrot.slane %v1410, 1
      %v1413 = vsel %vm432, %v1408, %v1412
      %v1414 = vshrl.u32 %v1223, 16
      %v1416 = vor.u32 %v1414, %v1412
      %v1418 = vshll.u32 %v1280, 16
      %v1420 = vrot.slane %v1418, 1
      %v1421 = vsel %vm432, %v1416, %v1420
      %v1423 = vshrl.u32 %v1224, 16
      %v1425 = vshll.u32 %v1224, 16
      %v1427 = vrot.slane %v1425, 1
      %v1428 = vor.u32 %v1423, %v1427
      %v1430 = vshll.u32 %v1225, 16
      %v1432 = vrot.slane %v1430, 1
      %v1433 = vsel %vm432, %v1428, %v1432
      %v1434 = vshrl.u32 %v1225, 16
      %v1436 = vor.u32 %v1434, %v1432
      %v1438 = vshll.u32 %v1281, 16
      %v1440 = vrot.slane %v1438, 1
      %v1441 = vsel %vm432, %v1436, %v1440
      %1442 = vrot.lane.b32.xlu0 %v1293, 56
      %v1443 = vpop.permute.xlu0 %1442
      %1444 = vrot.lane.b32.xlu0 %v1301, 56
      %v1445 = vpop.permute.xlu0 %1444
      %1446 = vrot.lane.b32.xlu0 %v1313, 56
      %v1447 = vpop.permute.xlu0 %1446
      %1448 = vrot.lane.b32.xlu0 %v1321, 56
      %v1449 = vpop.permute.xlu0 %1448
      %1450 = vrot.lane.b32.xlu0 %v1333, 56
      %v1451 = vpop.permute.xlu0 %1450
      %1452 = vrot.lane.b32.xlu0 %v1341, 56
      %v1453 = vpop.permute.xlu0 %1452
      %1454 = vrot.lane.b32.xlu0 %v1353, 56
      %v1455 = vpop.permute.xlu0 %1454
      %1456 = vrot.lane.b32.xlu0 %v1361, 56
      %v1457 = vpop.permute.xlu0 %1456
      %1458 = vrot.lane.b32.xlu0 %v1373, 56
      %v1459 = vpop.permute.xlu0 %1458
      %1460 = vrot.lane.b32.xlu0 %v1381, 56
      %v1461 = vpop.permute.xlu0 %1460
      %1462 = vrot.lane.b32.xlu0 %v1393, 56
      %v1463 = vpop.permute.xlu0 %1462
      %1464 = vrot.lane.b32.xlu0 %v1401, 56
      %v1465 = vpop.permute.xlu0 %1464
      %1466 = vrot.lane.b32.xlu0 %v1413, 56
      %v1467 = vpop.permute.xlu0 %1466
      %1468 = vrot.lane.b32.xlu0 %v1421, 56
      %v1469 = vpop.permute.xlu0 %1468
      %1470 = vrot.lane.b32.xlu0 %v1433, 56
      %v1471 = vpop.permute.xlu0 %1470
      %1472 = vrot.lane.b32.xlu0 %v1441, 56
      %v1473 = vpop.permute.xlu0 %1472
      %v1482 = vunpack.c.l.b16 %v320
      %v1483 = vunpack.c.l.b16 %v321
      %v1484 = vunpack.c.l.b16 %v322
      %v1485 = vunpack.c.l.b16 %v323
      %v1486 = vunpack.c.l.b16 %v324
      %v1487 = vunpack.c.l.b16 %v325
      %v1488 = vunpack.c.l.b16 %v326
      %v1489 = vunpack.c.l.b16 %v327
      %v1490 = vpack.c.b16 %v1179, %v1482
      %v1491 = vpack.c.b16 %v1183, %v1483
      %v1492 = vpack.c.b16 %v1187, %v1484
      %v1493 = vpack.c.b16 %v1191, %v1485
      %v1494 = vpack.c.b16 %v1195, %v1486
      %v1495 = vpack.c.b16 %v1199, %v1487
      %v1496 = vpack.c.b16 %v1203, %v1488
      %v1497 = vpack.c.b16 %v1207, %v1489
      %v1498 = vrot.slane %v1490, 1
      %v1499 = vrot.slane %v1211, 1
      %v1500 = vsel %vm649, %v1498, %v1499
      %v1501 = vrot.slane %v1274, 1
      %v1502 = vsel %vm649, %v1499, %v1501
      %v1503 = vrot.slane %v1491, 1
      %v1504 = vrot.slane %v1213, 1
      %v1505 = vsel %vm649, %v1503, %v1504
      %v1506 = vrot.slane %v1275, 1
      %v1507 = vsel %vm649, %v1504, %v1506
      %v1508 = vrot.slane %v1492, 1
      %v1509 = vrot.slane %v1215, 1
      %v1510 = vsel %vm649, %v1508, %v1509
      %v1511 = vrot.slane %v1276, 1
      %v1512 = vsel %vm649, %v1509, %v1511
      %v1513 = vrot.slane %v1493, 1
      %v1514 = vrot.slane %v1217, 1
      %v1515 = vsel %vm649, %v1513, %v1514
      %v1516 = vrot.slane %v1277, 1
      %v1517 = vsel %vm649, %v1514, %v1516
      %v1518 = vrot.slane %v1494, 1
      %v1519 = vrot.slane %v1219, 1
      %v1520 = vsel %vm649, %v1518, %v1519
      %v1521 = vrot.slane %v1278, 1
      %v1522 = vsel %vm649, %v1519, %v1521
      %v1523 = vrot.slane %v1495, 1
      %v1524 = vrot.slane %v1221, 1
      %v1525 = vsel %vm649, %v1523, %v1524
      %v1526 = vrot.slane %v1279, 1
      %v1527 = vsel %vm649, %v1524, %v1526
      %v1528 = vrot.slane %v1496, 1
      %v1529 = vrot.slane %v1223, 1
      %v1530 = vsel %vm649, %v1528, %v1529
      %v1531 = vrot.slane %v1280, 1
      %v1532 = vsel %vm649, %v1529, %v1531
      %v1533 = vrot.slane %v1497, 1
      %v1534 = vrot.slane %v1225, 1
      %v1535 = vsel %vm649, %v1533, %v1534
      %v1536 = vrot.slane %v1281, 1
      %v1537 = vsel %vm649, %v1534, %v1536
      %1538 = vrot.lane.b32.xlu0 %v1500, 64
      %v1539 = vpop.permute.xlu0 %1538
      %1540 = vrot.lane.b32.xlu0 %v1502, 64
      %v1541 = vpop.permute.xlu0 %1540
      %1542 = vrot.lane.b32.xlu0 %v1505, 64
      %v1543 = vpop.permute.xlu0 %1542
      %1544 = vrot.lane.b32.xlu0 %v1507, 64
      %v1545 = vpop.permute.xlu0 %1544
      %1546 = vrot.lane.b32.xlu0 %v1510, 64
      %v1547 = vpop.permute.xlu0 %1546
      %1548 = vrot.lane.b32.xlu0 %v1512, 64
      %v1549 = vpop.permute.xlu0 %1548
      %1550 = vrot.lane.b32.xlu0 %v1515, 64
      %v1551 = vpop.permute.xlu0 %1550
      %1552 = vrot.lane.b32.xlu0 %v1517, 64
      %v1553 = vpop.permute.xlu0 %1552
      %1554 = vrot.lane.b32.xlu0 %v1520, 64
      %v1555 = vpop.permute.xlu0 %1554
      %1556 = vrot.lane.b32.xlu0 %v1522, 64
      %v1557 = vpop.permute.xlu0 %1556
      %1558 = vrot.lane.b32.xlu0 %v1525, 64
      %v1559 = vpop.permute.xlu0 %1558
      %1560 = vrot.lane.b32.xlu0 %v1527, 64
      %v1561 = vpop.permute.xlu0 %1560
      %1562 = vrot.lane.b32.xlu0 %v1530, 64
      %v1563 = vpop.permute.xlu0 %1562
      %1564 = vrot.lane.b32.xlu0 %v1532, 64
      %v1565 = vpop.permute.xlu0 %1564
      %1566 = vrot.lane.b32.xlu0 %v1535, 64
      %v1567 = vpop.permute.xlu0 %1566
      %1568 = vrot.lane.b32.xlu0 %v1537, 64
      %v1569 = vpop.permute.xlu0 %1568
      %vm1570 = vcmask 64512
      %v1572 = vsel %vm1570, %v392, %v594
      %v1574 = vsel %vm1570, %v393, %v596
      %v1576 = vsel %vm1570, %v394, %v598
      %v1578 = vsel %vm1570, %v395, %v600
      %v1580 = vsel %vm1570, %v396, %v602
      %v1582 = vsel %vm1570, %v397, %v604
      %v1584 = vsel %vm1570, %v398, %v606
      %v1586 = vsel %vm1570, %v399, %v608
      %v1588 = vsel %vm1570, %v400, %v610
      %v1590 = vsel %vm1570, %v401, %v612
      %v1592 = vsel %vm1570, %v402, %v614
      %v1594 = vsel %vm1570, %v403, %v616
      %v1596 = vsel %vm1570, %v404, %v618
      %v1598 = vsel %vm1570, %v405, %v620
      %v1600 = vsel %vm1570, %v406, %v622
      %v1602 = vsel %vm1570, %v407, %v624
      %vm1603 = vcmask 130048
      %v1605 = vsel %vm1603, %v1572, %v691
      %v1607 = vsel %vm1603, %v1574, %v693
      %v1609 = vsel %vm1603, %v1576, %v695
      %v1611 = vsel %vm1603, %v1578, %v697
      %v1613 = vsel %vm1603, %v1580, %v699
      %v1615 = vsel %vm1603, %v1582, %v701
      %v1617 = vsel %vm1603, %v1584, %v703
      %v1619 = vsel %vm1603, %v1586, %v705
      %v1621 = vsel %vm1603, %v1588, %v707
      %v1623 = vsel %vm1603, %v1590, %v709
      %v1625 = vsel %vm1603, %v1592, %v711
      %v1627 = vsel %vm1603, %v1594, %v713
      %v1629 = vsel %vm1603, %v1596, %v715
      %v1631 = vsel %vm1603, %v1598, %v717
      %v1633 = vsel %vm1603, %v1600, %v719
      %v1635 = vsel %vm1603, %v1602, %v721
      %vm1636 = vcmask 195584
      %v1638 = vsel %vm1636, %v1605, %v803
      %v1640 = vsel %vm1636, %v1607, %v805
      %v1642 = vsel %vm1636, %v1609, %v807
      %v1644 = vsel %vm1636, %v1611, %v809
      %v1646 = vsel %vm1636, %v1613, %v811
      %v1648 = vsel %vm1636, %v1615, %v813
      %v1650 = vsel %vm1636, %v1617, %v815
      %v1652 = vsel %vm1636, %v1619, %v817
      %v1654 = vsel %vm1636, %v1621, %v819
      %v1656 = vsel %vm1636, %v1623, %v821
      %v1658 = vsel %vm1636, %v1625, %v823
      %v1660 = vsel %vm1636, %v1627, %v825
      %v1662 = vsel %vm1636, %v1629, %v827
      %v1664 = vsel %vm1636, %v1631, %v829
      %v1666 = vsel %vm1636, %v1633, %v831
      %v1668 = vsel %vm1636, %v1635, %v833
      %vm1669 = vcmask 261120
      %v1671 = vsel %vm1669, %v1638, %v1019
      %v1673 = vsel %vm1669, %v1640, %v1021
      %v1675 = vsel %vm1669, %v1642, %v1023
      %v1677 = vsel %vm1669, %v1644, %v1025
      %v1679 = vsel %vm1669, %v1646, %v1027
      %v1681 = vsel %vm1669, %v1648, %v1029
      %v1683 = vsel %vm1669, %v1650, %v1031
      %v1685 = vsel %vm1669, %v1652, %v1033
      %v1687 = vsel %vm1669, %v1654, %v1035
      %v1689 = vsel %vm1669, %v1656, %v1037
      %v1691 = vsel %vm1669, %v1658, %v1039
      %v1693 = vsel %vm1669, %v1660, %v1041
      %v1695 = vsel %vm1669, %v1662, %v1043
      %v1697 = vsel %vm1669, %v1664, %v1045
      %v1699 = vsel %vm1669, %v1666, %v1047
      %v1701 = vsel %vm1669, %v1668, %v1049
      %vm1702 = vcmask 326656
      %v1704 = vsel %vm1702, %v1671, %v1115
      %v1706 = vsel %vm1702, %v1673, %v1117
      %v1708 = vsel %vm1702, %v1675, %v1119
      %v1710 = vsel %vm1702, %v1677, %v1121
      %v1712 = vsel %vm1702, %v1679, %v1123
      %v1714 = vsel %vm1702, %v1681, %v1125
      %v1716 = vsel %vm1702, %v1683, %v1127
      %v1718 = vsel %vm1702, %v1685, %v1129
      %v1720 = vsel %vm1702, %v1687, %v1131
      %v1722 = vsel %vm1702, %v1689, %v1133
      %v1724 = vsel %vm1702, %v1691, %v1135
      %v1726 = vsel %vm1702, %v1693, %v1137
      %v1728 = vsel %vm1702, %v1695, %v1139
      %v1730 = vsel %vm1702, %v1697, %v1141
      %v1732 = vsel %vm1702, %v1699, %v1143
      %v1734 = vsel %vm1702, %v1701, %v1145
      %vm1735 = vcmask 392192
      %v1737 = vsel %vm1735, %v1704, %v1227
      %v1739 = vsel %vm1735, %v1706, %v1229
      %v1741 = vsel %vm1735, %v1708, %v1231
      %v1743 = vsel %vm1735, %v1710, %v1233
      %v1745 = vsel %vm1735, %v1712, %v1235
      %v1747 = vsel %vm1735, %v1714, %v1237
      %v1749 = vsel %vm1735, %v1716, %v1239
      %v1751 = vsel %vm1735, %v1718, %v1241
      %v1753 = vsel %vm1735, %v1720, %v1243
      %v1755 = vsel %vm1735, %v1722, %v1245
      %v1757 = vsel %vm1735, %v1724, %v1247
      %v1759 = vsel %vm1735, %v1726, %v1249
      %v1761 = vsel %vm1735, %v1728, %v1251
      %v1763 = vsel %vm1735, %v1730, %v1253
      %v1765 = vsel %vm1735, %v1732, %v1255
      %v1767 = vsel %vm1735, %v1734, %v1257
      %vm1768 = vcmask 457728
      %v1770 = vsel %vm1768, %v1737, %v1443
      %v1772 = vsel %vm1768, %v1739, %v1445
      %v1774 = vsel %vm1768, %v1741, %v1447
      %v1776 = vsel %vm1768, %v1743, %v1449
      %v1778 = vsel %vm1768, %v1745, %v1451
      %v1780 = vsel %vm1768, %v1747, %v1453
      %v1782 = vsel %vm1768, %v1749, %v1455
      %v1784 = vsel %vm1768, %v1751, %v1457
      %v1786 = vsel %vm1768, %v1753, %v1459
      %v1788 = vsel %vm1768, %v1755, %v1461
      %v1790 = vsel %vm1768, %v1757, %v1463
      %v1792 = vsel %vm1768, %v1759, %v1465
      %v1794 = vsel %vm1768, %v1761, %v1467
      %v1796 = vsel %vm1768, %v1763, %v1469
      %v1798 = vsel %vm1768, %v1765, %v1471
      %v1800 = vsel %vm1768, %v1767, %v1473
      %vm1801 = vcmask 523264
      %v1803 = vsel %vm1801, %v1770, %v1539
      %v1805 = vsel %vm1801, %v1772, %v1541
      %v1807 = vsel %vm1801, %v1774, %v1543
      %v1809 = vsel %vm1801, %v1776, %v1545
      %v1811 = vsel %vm1801, %v1778, %v1547
      %v1813 = vsel %vm1801, %v1780, %v1549
      %v1815 = vsel %vm1801, %v1782, %v1551
      %v1817 = vsel %vm1801, %v1784, %v1553
      %v1819 = vsel %vm1801, %v1786, %v1555
      %v1821 = vsel %vm1801, %v1788, %v1557
      %v1823 = vsel %vm1801, %v1790, %v1559
      %v1825 = vsel %vm1801, %v1792, %v1561
      %v1827 = vsel %vm1801, %v1794, %v1563
      %v1829 = vsel %vm1801, %v1796, %v1565
      %v1831 = vsel %vm1801, %v1798, %v1567
      %v1833 = vsel %vm1801, %v1800, %v1569
      %v1835 = vlaneseq
      %v1836 = vshrl.u32 %v1835, 7
      %v1837 = vsub.s32 0, %v1836
      %v1838 = vrot.slane %v181, %v1837
      %v1849 = vunpack.c.l.b16 %v172
      %v1850 = vunpack.c.l.b16 %v173
      %v1851 = vunpack.c.l.b16 %v174
      %v1852 = vunpack.c.l.b16 %v175
      %v1853 = vunpack.c.l.b16 %v176
      %v1854 = vunpack.c.l.b16 %v177
      %v1855 = vunpack.c.l.b16 %v178
      %v1856 = vunpack.c.l.b16 %v179
      %v1857 = vunpack.c.l.b16 %v180
      %v1858 = vpack.c.b16 %v1850, %v1849
      %v1859 = vpack.c.b16 %v1852, %v1851
      %v1860 = vpack.c.b16 %v1854, %v1853
      %v1861 = vpack.c.b16 %v1856, %v1855
      %v1862 = vpack.c.b16 %v1857, %v1857
      %vm1867 = vcmask 588800
      %v1868 = vsel %vm1867, %v1803, 0
      %v1870 = vsel %vm1867, %v1805, 0
      %v1872 = vsel %vm1867, %v1807, 0
      %v1874 = vsel %vm1867, %v1809, 0
      %v1876 = vsel %vm1867, %v1811, 0
      %v1878 = vsel %vm1867, %v1813, 0
      %v1880 = vsel %vm1867, %v1815, 0
      %v1882 = vsel %vm1867, %v1817, 0
      %v1884 = vsel %vm1867, %v1819, 0
      %v1886 = vsel %vm1867, %v1821, 0
      %v1888 = vsel %vm1867, %v1823, 0
      %v1890 = vsel %vm1867, %v1825, 0
      %v1892 = vsel %vm1867, %v1827, 0
      %v1894 = vsel %vm1867, %v1829, 0
      %v1896 = vsel %vm1867, %v1831, 0
      %v1898 = vsel %vm1867, %v1833, 0
      %vm1900 = vcmask 1043456
      %v1902 = vsel %vm1900, %v1862, 0
      %1904 = vmatprep.subr.bf16.mxu0 0
      %1905 = vmatpush1.bf16.msra.mxu0 0
      %1906 = vmatprep.subr.bf16.mxu0 0
      %1907 = vmatpush1.bf16.msra.mxu0 0
      %1908 = vmatprep.subr.bf16.mxu0 0
      %1909 = vmatpush1.bf16.msra.mxu0 0
      %1910 = vmatprep.subr.bf16.mxu0 0
      %1911 = vmatpush1.bf16.msra.mxu0 %v1902
      %1912 = vmatprep.subr.bf16.mxu0 0
      %1913 = vmatpush1.bf16.msra.mxu0 %v1861
      %1914 = vmatprep.subr.bf16.mxu0 0
      %1915 = vmatpush1.bf16.msra.mxu0 %v1860
      %1916 = vmatprep.subr.bf16.mxu0 0
      %1917 = vmatpush1.bf16.msra.mxu0 %v1859
      %1918 = vmatprep.subr.bf16.mxu0 0
      %1919 = vmatpush1.bf16.msra.mxu0 %v1858
      %1920 = vmatprep.subr.bf16.mxu0 0
      %1921 = vmatpush2.bf16.msra.mxu0 0
      %1922 = vmatprep.subr.bf16.mxu0 0
      %1923 = vmatpush2.bf16.msra.mxu0 0
      %1924 = vmatprep.subr.bf16.mxu0 0
      %1925 = vmatpush2.bf16.msra.mxu0 0
      %1926 = vmatprep.subr.bf16.mxu0 0
      %1927 = vmatpush2.bf16.msra.mxu0 0
      %1928 = vmatprep.subr.bf16.mxu0 0
      %1929 = vmatpush2.bf16.msra.mxu0 0
      %1930 = vmatprep.subr.bf16.mxu0 0
      %1931 = vmatpush2.bf16.msra.mxu0 0
      %1932 = vmatprep.subr.bf16.mxu0 0
      %1933 = vmatpush2.bf16.msra.mxu0 0
      %1934 = vmatprep.subr.bf16.mxu0 0
      %1935 = vmatpush2.bf16.msra.mxu0 0
      %1936 = vmatprep.mubr.bf16.mxu0 0
      %1937 = vmatmul.mubr.bf16.gmra.mxu0 %v1868
      %v1938 = vpop.f32.mrf.mxu0
      %v1939 = vadd.f32 %v1838, %v1938
      %v1940 = vpop.f32.mrf.mxu0
      %v1941 = vpop.f32.mrf.mxu0
      %v1942 = vadd.f32 %v1838, %v1941
      %v1943 = vpop.f32.mrf.mxu0
      %1944 = vmatprep.mubr.bf16.mxu0 0
      %1945 = vmatmul.mubr.bf16.gmra.mxu0 %v1870
      %v1946 = vpop.f32.mrf.mxu0
      %v1947 = vadd.f32 %v1838, %v1946
      %v1948 = vpop.f32.mrf.mxu0
      %v1949 = vpop.f32.mrf.mxu0
      %v1950 = vadd.f32 %v1838, %v1949
      %v1951 = vpop.f32.mrf.mxu0
      %1952 = vmatprep.mubr.bf16.mxu0 0
      %1953 = vmatmul.mubr.bf16.gmra.mxu0 %v1872
      %v1954 = vpop.f32.mrf.mxu0
      %v1955 = vadd.f32 %v1838, %v1954
      %v1956 = vpop.f32.mrf.mxu0
      %v1957 = vpop.f32.mrf.mxu0
      %v1958 = vadd.f32 %v1838, %v1957
      %v1959 = vpop.f32.mrf.mxu0
      %1960 = vmatprep.mubr.bf16.mxu0 0
      %1961 = vmatmul.mubr.bf16.gmra.mxu0 %v1874
      %v1962 = vpop.f32.mrf.mxu0
      %v1963 = vadd.f32 %v1838, %v1962
      %v1964 = vpop.f32.mrf.mxu0
      %v1965 = vpop.f32.mrf.mxu0
      %v1966 = vadd.f32 %v1838, %v1965
      %v1967 = vpop.f32.mrf.mxu0
      %1968 = vmatprep.mubr.bf16.mxu0 0
      %1969 = vmatmul.mubr.bf16.gmra.mxu0 %v1876
      %v1970 = vpop.f32.mrf.mxu0
      %v1971 = vadd.f32 %v1838, %v1970
      %v1972 = vpop.f32.mrf.mxu0
      %v1973 = vpop.f32.mrf.mxu0
      %v1974 = vadd.f32 %v1838, %v1973
      %v1975 = vpop.f32.mrf.mxu0
      %1976 = vmatprep.mubr.bf16.mxu0 0
      %1977 = vmatmul.mubr.bf16.gmra.mxu0 %v1878
      %v1978 = vpop.f32.mrf.mxu0
      %v1979 = vadd.f32 %v1838, %v1978
      %v1980 = vpop.f32.mrf.mxu0
      %v1981 = vpop.f32.mrf.mxu0
      %v1982 = vadd.f32 %v1838, %v1981
      %v1983 = vpop.f32.mrf.mxu0
      %1984 = vmatprep.mubr.bf16.mxu0 0
      %1985 = vmatmul.mubr.bf16.gmra.mxu0 %v1880
      %v1986 = vpop.f32.mrf.mxu0
      %v1987 = vadd.f32 %v1838, %v1986
      %v1988 = vpop.f32.mrf.mxu0
      %v1989 = vpop.f32.mrf.mxu0
      %v1990 = vadd.f32 %v1838, %v1989
      %v1991 = vpop.f32.mrf.mxu0
      %1992 = vmatprep.mubr.bf16.mxu0 0
      %1993 = vmatmul.mubr.bf16.gmra.mxu0 %v1882
      %v1994 = vpop.f32.mrf.mxu0
      %v1995 = vadd.f32 %v1838, %v1994
      %v1996 = vpop.f32.mrf.mxu0
      %v1997 = vpop.f32.mrf.mxu0
      %v1998 = vadd.f32 %v1838, %v1997
      %v1999 = vpop.f32.mrf.mxu0
      %2000 = vmatprep.mubr.bf16.mxu0 0
      %2001 = vmatmul.mubr.bf16.gmra.mxu0 %v1884
      %v2002 = vpop.f32.mrf.mxu0
      %v2003 = vadd.f32 %v1838, %v2002
      %v2004 = vpop.f32.mrf.mxu0
      %v2005 = vpop.f32.mrf.mxu0
      %v2006 = vadd.f32 %v1838, %v2005
      %v2007 = vpop.f32.mrf.mxu0
      %2008 = vmatprep.mubr.bf16.mxu0 0
      %2009 = vmatmul.mubr.bf16.gmra.mxu0 %v1886
      %v2010 = vpop.f32.mrf.mxu0
      %v2011 = vadd.f32 %v1838, %v2010
      %v2012 = vpop.f32.mrf.mxu0
      %v2013 = vpop.f32.mrf.mxu0
      %v2014 = vadd.f32 %v1838, %v2013
      %v2015 = vpop.f32.mrf.mxu0
      %2016 = vmatprep.mubr.bf16.mxu0 0
      %2017 = vmatmul.mubr.bf16.gmra.mxu0 %v1888
      %v2018 = vpop.f32.mrf.mxu0
      %v2019 = vadd.f32 %v1838, %v2018
      %v2020 = vpop.f32.mrf.mxu0
      %v2021 = vpop.f32.mrf.mxu0
      %v2022 = vadd.f32 %v1838, %v2021
      %v2023 = vpop.f32.mrf.mxu0
      %2024 = vmatprep.mubr.bf16.mxu0 0
      %2025 = vmatmul.mubr.bf16.gmra.mxu0 %v1890
      %v2026 = vpop.f32.mrf.mxu0
      %v2027 = vadd.f32 %v1838, %v2026
      %v2028 = vpop.f32.mrf.mxu0
      %v2029 = vpop.f32.mrf.mxu0
      %v2030 = vadd.f32 %v1838, %v2029
      %v2031 = vpop.f32.mrf.mxu0
      %2032 = vmatprep.mubr.bf16.mxu0 0
      %2033 = vmatmul.mubr.bf16.gmra.mxu0 %v1892
      %v2034 = vpop.f32.mrf.mxu0
      %v2035 = vadd.f32 %v1838, %v2034
      %v2036 = vpop.f32.mrf.mxu0
      %v2037 = vpop.f32.mrf.mxu0
      %v2038 = vadd.f32 %v1838, %v2037
      %v2039 = vpop.f32.mrf.mxu0
      %2040 = vmatprep.mubr.bf16.mxu0 0
      %2041 = vmatmul.mubr.bf16.gmra.mxu0 %v1894
      %v2042 = vpop.f32.mrf.mxu0
      %v2043 = vadd.f32 %v1838, %v2042
      %v2044 = vpop.f32.mrf.mxu0
      %v2045 = vpop.f32.mrf.mxu0
      %v2046 = vadd.f32 %v1838, %v2045
      %v2047 = vpop.f32.mrf.mxu0
      %2048 = vmatprep.mubr.bf16.mxu0 0
      %2049 = vmatmul.mubr.bf16.gmra.mxu0 %v1896
      %v2050 = vpop.f32.mrf.mxu0
      %v2051 = vadd.f32 %v1838, %v2050
      %v2052 = vpop.f32.mrf.mxu0
      %v2053 = vpop.f32.mrf.mxu0
      %v2054 = vadd.f32 %v1838, %v2053
      %v2055 = vpop.f32.mrf.mxu0
      %2056 = vmatprep.mubr.bf16.mxu0 0
      %2057 = vmatmul.mubr.bf16.gmra.mxu0 %v1898
      %v2058 = vpop.f32.mrf.mxu0
      %v2059 = vadd.f32 %v1838, %v2058
      %v2060 = vpop.f32.mrf.mxu0
      %v2061 = vpop.f32.mrf.mxu0
      %v2062 = vadd.f32 %v1838, %v2061
      %v2063 = vpop.f32.mrf.mxu0
      %2064 = vdwg.mxu0
      %v2065 = vpack.c.bf16 %v1942, %v1939
      %v2066 = vpack.c.bf16 %v1950, %v1947
      %v2067 = vpack.c.bf16 %v1958, %v1955
      %v2068 = vpack.c.bf16 %v1966, %v1963
      %v2069 = vpack.c.bf16 %v1974, %v1971
      %v2070 = vpack.c.bf16 %v1982, %v1979
      %v2071 = vpack.c.bf16 %v1990, %v1987
      %v2072 = vpack.c.bf16 %v1998, %v1995
      %v2073 = vpack.c.bf16 %v2006, %v2003
      %v2074 = vpack.c.bf16 %v2014, %v2011
      %v2075 = vpack.c.bf16 %v2022, %v2019
      %v2076 = vpack.c.bf16 %v2030, %v2027
      %v2077 = vpack.c.bf16 %v2038, %v2035
      %v2078 = vpack.c.bf16 %v2046, %v2043
      %v2079 = vpack.c.bf16 %v2054, %v2051
      %v2080 = vpack.c.bf16 %v2062, %v2059
      %v2097 = vunpack.c.l.b16 %v2065
      %v2098 = vunpack.c.h.b16 %v2065
      %v2099 = vunpack.c.l.b16 %v2066
      %v2100 = vunpack.c.h.b16 %v2066
      %v2101 = vunpack.c.l.b16 %v2067
      %v2102 = vunpack.c.h.b16 %v2067
      %v2103 = vunpack.c.l.b16 %v2068
      %v2104 = vunpack.c.h.b16 %v2068
      %v2105 = vunpack.c.l.b16 %v2069
      %v2106 = vunpack.c.h.b16 %v2069
      %v2107 = vunpack.c.l.b16 %v2070
      %v2108 = vunpack.c.h.b16 %v2070
      %v2109 = vunpack.c.l.b16 %v2071
      %v2110 = vunpack.c.h.b16 %v2071
      %v2111 = vunpack.c.l.b16 %v2072
      %v2112 = vunpack.c.h.b16 %v2072
      %v2113 = vunpack.c.l.b16 %v2073
      %v2114 = vunpack.c.h.b16 %v2073
      %v2115 = vunpack.c.l.b16 %v2074
      %v2116 = vunpack.c.h.b16 %v2074
      %v2117 = vunpack.c.l.b16 %v2075
      %v2118 = vunpack.c.h.b16 %v2075
      %v2119 = vunpack.c.l.b16 %v2076
      %v2120 = vunpack.c.h.b16 %v2076
      %v2121 = vunpack.c.l.b16 %v2077
      %v2122 = vunpack.c.h.b16 %v2077
      %v2123 = vunpack.c.l.b16 %v2078
      %v2124 = vunpack.c.h.b16 %v2078
      %v2125 = vunpack.c.l.b16 %v2079
      %v2126 = vunpack.c.h.b16 %v2079
      %v2127 = vunpack.c.l.b16 %v2080
      %v2128 = vunpack.c.h.b16 %v2080
      %v2129 = vpack.c.b16 %v2097, %v2097
      %v2130 = vpack.c.b16 %v2098, %v2098
      %v2131 = vpack.c.b16 %v2099, %v2099
      %v2132 = vpack.c.b16 %v2100, %v2100
      %v2133 = vpack.c.b16 %v2101, %v2101
      %v2134 = vpack.c.b16 %v2102, %v2102
      %v2135 = vpack.c.b16 %v2103, %v2103
      %v2136 = vpack.c.b16 %v2104, %v2104
      %v2137 = vpack.c.b16 %v2105, %v2105
      %v2138 = vpack.c.b16 %v2106, %v2106
      %v2139 = vpack.c.b16 %v2107, %v2107
      %v2140 = vpack.c.b16 %v2108, %v2108
      %v2141 = vpack.c.b16 %v2109, %v2109
      %v2142 = vpack.c.b16 %v2110, %v2110
      %v2143 = vpack.c.b16 %v2111, %v2111
      %v2144 = vpack.c.b16 %v2112, %v2112
      %v2145 = vpack.c.b16 %v2113, %v2113
      %v2146 = vpack.c.b16 %v2114, %v2114
      %v2147 = vpack.c.b16 %v2115, %v2115
      %v2148 = vpack.c.b16 %v2116, %v2116
      %v2149 = vpack.c.b16 %v2117, %v2117
      %v2150 = vpack.c.b16 %v2118, %v2118
      %v2151 = vpack.c.b16 %v2119, %v2119
      %v2152 = vpack.c.b16 %v2120, %v2120
      %v2153 = vpack.c.b16 %v2121, %v2121
      %v2154 = vpack.c.b16 %v2122, %v2122
      %v2155 = vpack.c.b16 %v2123, %v2123
      %v2156 = vpack.c.b16 %v2124, %v2124
      %v2157 = vpack.c.b16 %v2125, %v2125
      %v2158 = vpack.c.b16 %v2126, %v2126
      %v2159 = vpack.c.b16 %v2127, %v2127
      %v2160 = vpack.c.b16 %v2128, %v2128
      %2193 = vst [vmem:[%s170] sm:$0xf] %v2129
      %2194 = vst [vmem:[%s170 + $0x4] sm:$0xf] %v2130
      %2195 = vst [vmem:[%s170 + $0x8] sm:$0xf] %v2131
      %2196 = vst [vmem:[%s170 + $0xc] sm:$0xf] %v2132
      %2197 = vst [vmem:[%s170 + $0x10] sm:$0xf] %v2133
      %2198 = vst [vmem:[%s170 + $0x14] sm:$0xf] %v2134
      %2199 = vst [vmem:[%s170 + $0x18] sm:$0xf] %v2135
      %2200 = vst [vmem:[%s170 + $0x1c] sm:$0xf] %v2136
      %2201 = vst [vmem:[%s170 + $0x20] sm:$0xf] %v2137
      %2202 = vst [vmem:[%s170 + $0x24] sm:$0xf] %v2138
      %2203 = vst [vmem:[%s170 + $0x28] sm:$0xf] %v2139
      %2204 = vst [vmem:[%s170 + $0x2c] sm:$0xf] %v2140
      %2205 = vst [vmem:[%s170 + $0x30] sm:$0xf] %v2141
      %2206 = vst [vmem:[%s170 + $0x34] sm:$0xf] %v2142
      %2207 = vst [vmem:[%s170 + $0x38] sm:$0xf] %v2143
      %2208 = vst [vmem:[%s170 + $0x3c] sm:$0xf] %v2144
      %2209 = vst [vmem:[%s170 + $0x40] sm:$0xf] %v2145
      %2210 = vst [vmem:[%s170 + $0x44] sm:$0xf] %v2146
      %2211 = vst [vmem:[%s170 + $0x48] sm:$0xf] %v2147
      %2212 = vst [vmem:[%s170 + $0x4c] sm:$0xf] %v2148
      %2213 = vst [vmem:[%s170 + $0x50] sm:$0xf] %v2149
      %2214 = vst [vmem:[%s170 + $0x54] sm:$0xf] %v2150
      %2215 = vst [vmem:[%s170 + $0x58] sm:$0xf] %v2151
      %2216 = vst [vmem:[%s170 + $0x5c] sm:$0xf] %v2152
      %2217 = vst [vmem:[%s170 + $0x60] sm:$0xf] %v2153
      %2218 = vst [vmem:[%s170 + $0x64] sm:$0xf] %v2154
      %2219 = vst [vmem:[%s170 + $0x68] sm:$0xf] %v2155
      %2220 = vst [vmem:[%s170 + $0x6c] sm:$0xf] %v2156
      %2221 = vst [vmem:[%s170 + $0x70] sm:$0xf] %v2157
      %2222 = vst [vmem:[%s170 + $0x74] sm:$0xf] %v2158
      %2223 = vst [vmem:[%s170 + $0x78] sm:$0xf] %v2159
      %2224 = vst [vmem:[%s170 + $0x7c] sm:$0xf] %v2160
      %s2225 = scalar_lea.vmem %s165, 160
      %v2226 = vld [vmem:[%s2225] sm:$0xf]
      %v2227 = vld [vmem:[%s2225 + $0x4] sm:$0xf]
      %v2228 = vld [vmem:[%s2225 + $0x8] sm:$0xf]
      %v2229 = vld [vmem:[%s2225 + $0xc] sm:$0xf]
      %v2230 = vld [vmem:[%s2225 + $0x14] sm:$0xf]
      %v2231 = vld [vmem:[%s2225 + $0x18] sm:$0xf]
      %v2232 = vld [vmem:[%s2225 + $0x1c] sm:$0xf]
      %v2233 = vld [vmem:[%s2225 + $0x20] sm:$0xf]
      %v2234 = vld [vmem:[%s2225 + $0x28] sm:$0xf]
      %v2235 = vld [vmem:[%s2225 + $0x2c] sm:$0xf]
      %v2236 = vld [vmem:[%s2225 + $0x30] sm:$0xf]
      %v2237 = vld [vmem:[%s2225 + $0x34] sm:$0xf]
      %v2238 = vld [vmem:[%s2225 + $0x3c] sm:$0xf]
      %v2239 = vld [vmem:[%s2225 + $0x40] sm:$0xf]
      %v2240 = vld [vmem:[%s2225 + $0x44] sm:$0xf]
      %v2241 = vld [vmem:[%s2225 + $0x48] sm:$0xf]
      %v2242 = vld [vmem:[%s2225 + $0x50] sm:$0xf]
      %v2243 = vld [vmem:[%s2225 + $0x54] sm:$0xf]
      %v2244 = vld [vmem:[%s2225 + $0x58] sm:$0xf]
      %v2245 = vld [vmem:[%s2225 + $0x5c] sm:$0xf]
      %v2246 = vld [vmem:[%s2225 + $0x64] sm:$0xf]
      %v2247 = vld [vmem:[%s2225 + $0x68] sm:$0xf]
      %v2248 = vld [vmem:[%s2225 + $0x6c] sm:$0xf]
      %v2249 = vld [vmem:[%s2225 + $0x70] sm:$0xf]
      %v2250 = vld [vmem:[%s2225 + $0x78] sm:$0xf]
      %v2251 = vld [vmem:[%s2225 + $0x7c] sm:$0xf]
      %v2252 = vld [vmem:[%s2225 + $0x80] sm:$0xf]
      %v2253 = vld [vmem:[%s2225 + $0x84] sm:$0xf]
      %v2254 = vld [vmem:[%s2225 + $0x8c] sm:$0xf]
      %v2255 = vld [vmem:[%s2225 + $0x90] sm:$0xf]
      %v2256 = vld [vmem:[%s2225 + $0x94] sm:$0xf]
      %v2257 = vld [vmem:[%s2225 + $0x98] sm:$0xf]
      %v2258 = vld [vmem:[%s2225 + $0x10] sm:$0x1]
      %v2259 = vld [vmem:[%s2225 + $0x24] sm:$0x1]
      %v2260 = vld [vmem:[%s2225 + $0x38] sm:$0x1]
      %v2261 = vld [vmem:[%s2225 + $0x4c] sm:$0x1]
      %v2262 = vld [vmem:[%s2225 + $0x60] sm:$0x1]
      %v2263 = vld [vmem:[%s2225 + $0x74] sm:$0x1]
      %v2264 = vld [vmem:[%s2225 + $0x88] sm:$0x1]
      %v2265 = vld [vmem:[%s2225 + $0x9c] sm:$0x1]
      %v2266 = vld [vmem:[%s2225] sm:$0xe]
      %v2267 = vld [vmem:[%s2225 + $0x14] sm:$0xe]
      %v2268 = vld [vmem:[%s2225 + $0x28] sm:$0xe]
      %v2269 = vld [vmem:[%s2225 + $0x3c] sm:$0xe]
      %v2270 = vld [vmem:[%s2225 + $0x50] sm:$0xe]
      %v2271 = vld [vmem:[%s2225 + $0x64] sm:$0xe]
      %v2272 = vld [vmem:[%s2225 + $0x78] sm:$0xe]
      %v2273 = vld [vmem:[%s2225 + $0x8c] sm:$0xe]
      %s2274 = scalar_lea.vmem %s165, 180
      %v2275 = vld [vmem:[%s2274] sm:$0xf]
      %v2276 = vld [vmem:[%s2274 + $0x4] sm:$0xf]
      %v2277 = vld [vmem:[%s2274 + $0x8] sm:$0xf]
      %v2278 = vld [vmem:[%s2274 + $0xc] sm:$0xf]
      %v2279 = vld [vmem:[%s2274 + $0x14] sm:$0xf]
      %v2280 = vld [vmem:[%s2274 + $0x18] sm:$0xf]
      %v2281 = vld [vmem:[%s2274 + $0x1c] sm:$0xf]
      %v2282 = vld [vmem:[%s2274 + $0x20] sm:$0xf]
      %v2283 = vld [vmem:[%s2274 + $0x28] sm:$0xf]
      %v2284 = vld [vmem:[%s2274 + $0x2c] sm:$0xf]
      %v2285 = vld [vmem:[%s2274 + $0x30] sm:$0xf]
      %v2286 = vld [vmem:[%s2274 + $0x34] sm:$0xf]
      %v2287 = vld [vmem:[%s2274 + $0x3c] sm:$0xf]
      %v2288 = vld [vmem:[%s2274 + $0x40] sm:$0xf]
      %v2289 = vld [vmem:[%s2274 + $0x44] sm:$0xf]
      %v2290 = vld [vmem:[%s2274 + $0x48] sm:$0xf]
      %v2291 = vld [vmem:[%s2274 + $0x50] sm:$0xf]
      %v2292 = vld [vmem:[%s2274 + $0x54] sm:$0xf]
      %v2293 = vld [vmem:[%s2274 + $0x58] sm:$0xf]
      %v2294 = vld [vmem:[%s2274 + $0x5c] sm:$0xf]
      %v2295 = vld [vmem:[%s2274 + $0x64] sm:$0xf]
      %v2296 = vld [vmem:[%s2274 + $0x68] sm:$0xf]
      %v2297 = vld [vmem:[%s2274 + $0x6c] sm:$0xf]
      %v2298 = vld [vmem:[%s2274 + $0x70] sm:$0xf]
      %v2299 = vld [vmem:[%s2274 + $0x78] sm:$0xf]
      %v2300 = vld [vmem:[%s2274 + $0x7c] sm:$0xf]
      %v2301 = vld [vmem:[%s2274 + $0x80] sm:$0xf]
      %v2302 = vld [vmem:[%s2274 + $0x84] sm:$0xf]
      %v2303 = vld [vmem:[%s2274 + $0x8c] sm:$0xf]
      %v2304 = vld [vmem:[%s2274 + $0x90] sm:$0xf]
      %v2305 = vld [vmem:[%s2274 + $0x94] sm:$0xf]
      %v2306 = vld [vmem:[%s2274 + $0x98] sm:$0xf]
      %v2307 = vld [vmem:[%s2274 + $0x10] sm:$0x1]
      %v2308 = vld [vmem:[%s2274 + $0x24] sm:$0x1]
      %v2309 = vld [vmem:[%s2274 + $0x38] sm:$0x1]
      %v2310 = vld [vmem:[%s2274 + $0x4c] sm:$0x1]
      %v2311 = vld [vmem:[%s2274 + $0x60] sm:$0x1]
      %v2312 = vld [vmem:[%s2274 + $0x74] sm:$0x1]
      %v2313 = vld [vmem:[%s2274 + $0x88] sm:$0x1]
      %v2314 = vld [vmem:[%s2274 + $0x9c] sm:$0x1]
      %v2315 = vld [vmem:[%s2274] sm:$0xe]
      %v2316 = vld [vmem:[%s2274 + $0x14] sm:$0xe]
      %v2317 = vld [vmem:[%s2274 + $0x28] sm:$0xe]
      %v2318 = vld [vmem:[%s2274 + $0x3c] sm:$0xe]
      %v2319 = vld [vmem:[%s2274 + $0x50] sm:$0xe]
      %v2320 = vld [vmem:[%s2274 + $0x64] sm:$0xe]
      %v2321 = vld [vmem:[%s2274 + $0x78] sm:$0xe]
      %v2322 = vld [vmem:[%s2274 + $0x8c] sm:$0xe]
      %s2323 = scalar_lea.vmem %s165, 200
      %v2324 = vld [vmem:[%s2323] sm:$0xf]
      %v2325 = vld [vmem:[%s2323 + $0x4] sm:$0xf]
      %v2326 = vld [vmem:[%s2323 + $0x8] sm:$0xf]
      %v2327 = vld [vmem:[%s2323 + $0xc] sm:$0xf]
      %v2328 = vld [vmem:[%s2323 + $0x14] sm:$0xf]
      %v2329 = vld [vmem:[%s2323 + $0x18] sm:$0xf]
      %v2330 = vld [vmem:[%s2323 + $0x1c] sm:$0xf]
      %v2331 = vld [vmem:[%s2323 + $0x20] sm:$0xf]
      %v2332 = vld [vmem:[%s2323 + $0x28] sm:$0xf]
      %v2333 = vld [vmem:[%s2323 + $0x2c] sm:$0xf]
      %v2334 = vld [vmem:[%s2323 + $0x30] sm:$0xf]
      %v2335 = vld [vmem:[%s2323 + $0x34] sm:$0xf]
      %v2336 = vld [vmem:[%s2323 + $0x3c] sm:$0xf]
      %v2337 = vld [vmem:[%s2323 + $0x40] sm:$0xf]
      %v2338 = vld [vmem:[%s2323 + $0x44] sm:$0xf]
      %v2339 = vld [vmem:[%s2323 + $0x48] sm:$0xf]
      %v2340 = vld [vmem:[%s2323 + $0x50] sm:$0xf]
      %v2341 = vld [vmem:[%s2323 + $0x54] sm:$0xf]
      %v2342 = vld [vmem:[%s2323 + $0x58] sm:$0xf]
      %v2343 = vld [vmem:[%s2323 + $0x5c] sm:$0xf]
      %v2344 = vld [vmem:[%s2323 + $0x64] sm:$0xf]
      %v2345 = vld [vmem:[%s2323 + $0x68] sm:$0xf]
      %v2346 = vld [vmem:[%s2323 + $0x6c] sm:$0xf]
      %v2347 = vld [vmem:[%s2323 + $0x70] sm:$0xf]
      %v2348 = vld [vmem:[%s2323 + $0x78] sm:$0xf]
      %v2349 = vld [vmem:[%s2323 + $0x7c] sm:$0xf]
      %v2350 = vld [vmem:[%s2323 + $0x80] sm:$0xf]
      %v2351 = vld [vmem:[%s2323 + $0x84] sm:$0xf]
      %v2352 = vld [vmem:[%s2323 + $0x8c] sm:$0xf]
      %v2353 = vld [vmem:[%s2323 + $0x90] sm:$0xf]
      %v2354 = vld [vmem:[%s2323 + $0x94] sm:$0xf]
      %v2355 = vld [vmem:[%s2323 + $0x98] sm:$0xf]
      %v2356 = vld [vmem:[%s2323 + $0x10] sm:$0x1]
      %v2357 = vld [vmem:[%s2323 + $0x24] sm:$0x1]
      %v2358 = vld [vmem:[%s2323 + $0x38] sm:$0x1]
      %v2359 = vld [vmem:[%s2323 + $0x4c] sm:$0x1]
      %v2360 = vld [vmem:[%s2323 + $0x60] sm:$0x1]
      %v2361 = vld [vmem:[%s2323 + $0x74] sm:$0x1]
      %v2362 = vld [vmem:[%s2323 + $0x88] sm:$0x1]
      %v2363 = vld [vmem:[%s2323 + $0x9c] sm:$0x1]
      %v2364 = vld [vmem:[%s2323] sm:$0xe]
      %v2365 = vld [vmem:[%s2323 + $0x14] sm:$0xe]
      %v2366 = vld [vmem:[%s2323 + $0x28] sm:$0xe]
      %v2367 = vld [vmem:[%s2323 + $0x3c] sm:$0xe]
      %v2368 = vld [vmem:[%s2323 + $0x50] sm:$0xe]
      %v2369 = vld [vmem:[%s2323 + $0x64] sm:$0xe]
      %v2370 = vld [vmem:[%s2323 + $0x78] sm:$0xe]
      %v2371 = vld [vmem:[%s2323 + $0x8c] sm:$0xe]
      %v2404 = vunpack.c.l.b16 %v2226
      %v2405 = vunpack.c.l.b16 %v2227
      %v2406 = vunpack.c.l.b16 %v2228
      %v2407 = vunpack.c.l.b16 %v2229
      %v2408 = vunpack.c.l.b16 %v2230
      %v2409 = vunpack.c.l.b16 %v2231
      %v2410 = vunpack.c.l.b16 %v2232
      %v2411 = vunpack.c.l.b16 %v2233
      %v2412 = vunpack.c.l.b16 %v2234
      %v2413 = vunpack.c.l.b16 %v2235
      %v2414 = vunpack.c.l.b16 %v2236
      %v2415 = vunpack.c.l.b16 %v2237
      %v2416 = vunpack.c.l.b16 %v2238
      %v2417 = vunpack.c.l.b16 %v2239
      %v2418 = vunpack.c.l.b16 %v2240
      %v2419 = vunpack.c.l.b16 %v2241
      %v2420 = vunpack.c.l.b16 %v2242
      %v2421 = vunpack.c.l.b16 %v2243
      %v2422 = vunpack.c.l.b16 %v2244
      %v2423 = vunpack.c.l.b16 %v2245
      %v2424 = vunpack.c.l.b16 %v2246
      %v2425 = vunpack.c.l.b16 %v2247
      %v2426 = vunpack.c.l.b16 %v2248
      %v2427 = vunpack.c.l.b16 %v2249
      %v2428 = vunpack.c.l.b16 %v2250
      %v2429 = vunpack.c.l.b16 %v2251
      %v2430 = vunpack.c.l.b16 %v2252
      %v2431 = vunpack.c.l.b16 %v2253
      %v2432 = vunpack.c.l.b16 %v2254
      %v2433 = vunpack.c.l.b16 %v2255
      %v2434 = vunpack.c.l.b16 %v2256
      %v2435 = vunpack.c.l.b16 %v2257
      %v2436 = vpack.c.b16 %v2405, %v2404
      %v2437 = vpack.c.b16 %v2407, %v2406
      %v2438 = vpack.c.b16 %v2409, %v2408
      %v2439 = vpack.c.b16 %v2411, %v2410
      %v2440 = vpack.c.b16 %v2413, %v2412
      %v2441 = vpack.c.b16 %v2415, %v2414
      %v2442 = vpack.c.b16 %v2417, %v2416
      %v2443 = vpack.c.b16 %v2419, %v2418
      %v2444 = vpack.c.b16 %v2421, %v2420
      %v2445 = vpack.c.b16 %v2423, %v2422
      %v2446 = vpack.c.b16 %v2425, %v2424
      %v2447 = vpack.c.b16 %v2427, %v2426
      %v2448 = vpack.c.b16 %v2429, %v2428
      %v2449 = vpack.c.b16 %v2431, %v2430
      %v2450 = vpack.c.b16 %v2433, %v2432
      %v2451 = vpack.c.b16 %v2435, %v2434
      %v2460 = vunpack.c.l.b16 %v2258
      %v2461 = vunpack.c.l.b16 %v2259
      %v2462 = vunpack.c.l.b16 %v2260
      %v2463 = vunpack.c.l.b16 %v2261
      %v2464 = vunpack.c.l.b16 %v2262
      %v2465 = vunpack.c.l.b16 %v2263
      %v2466 = vunpack.c.l.b16 %v2264
      %v2467 = vunpack.c.l.b16 %v2265
      %v2468 = vpack.c.b16 %v2460, %v2460
      %v2469 = vpack.c.b16 %v2461, %v2461
      %v2470 = vpack.c.b16 %v2462, %v2462
      %v2471 = vpack.c.b16 %v2463, %v2463
      %v2472 = vpack.c.b16 %v2464, %v2464
      %v2473 = vpack.c.b16 %v2465, %v2465
      %v2474 = vpack.c.b16 %v2466, %v2466
      %v2475 = vpack.c.b16 %v2467, %v2467
      %v2477 = vshrl.u32 %v2436, 16
      %v2479 = vshll.u32 %v2436, 16
      %v2481 = vrot.slane %v2479, 1
      %v2482 = vor.u32 %v2477, %v2481
      %v2484 = vshll.u32 %v2437, 16
      %v2486 = vrot.slane %v2484, 1
      %v2487 = vsel %vm432, %v2482, %v2486
      %v2488 = vshrl.u32 %v2437, 16
      %v2490 = vor.u32 %v2488, %v2486
      %v2492 = vshll.u32 %v2468, 16
      %v2494 = vrot.slane %v2492, 1
      %v2495 = vsel %vm432, %v2490, %v2494
      %v2497 = vshrl.u32 %v2438, 16
      %v2499 = vshll.u32 %v2438, 16
      %v2501 = vrot.slane %v2499, 1
      %v2502 = vor.u32 %v2497, %v2501
      %v2504 = vshll.u32 %v2439, 16
      %v2506 = vrot.slane %v2504, 1
      %v2507 = vsel %vm432, %v2502, %v2506
      %v2508 = vshrl.u32 %v2439, 16
      %v2510 = vor.u32 %v2508, %v2506
      %v2512 = vshll.u32 %v2469, 16
      %v2514 = vrot.slane %v2512, 1
      %v2515 = vsel %vm432, %v2510, %v2514
      %v2517 = vshrl.u32 %v2440, 16
      %v2519 = vshll.u32 %v2440, 16
      %v2521 = vrot.slane %v2519, 1
      %v2522 = vor.u32 %v2517, %v2521
      %v2524 = vshll.u32 %v2441, 16
      %v2526 = vrot.slane %v2524, 1
      %v2527 = vsel %vm432, %v2522, %v2526
      %v2528 = vshrl.u32 %v2441, 16
      %v2530 = vor.u32 %v2528, %v2526
      %v2532 = vshll.u32 %v2470, 16
      %v2534 = vrot.slane %v2532, 1
      %v2535 = vsel %vm432, %v2530, %v2534
      %v2537 = vshrl.u32 %v2442, 16
      %v2539 = vshll.u32 %v2442, 16
      %v2541 = vrot.slane %v2539, 1
      %v2542 = vor.u32 %v2537, %v2541
      %v2544 = vshll.u32 %v2443, 16
      %v2546 = vrot.slane %v2544, 1
      %v2547 = vsel %vm432, %v2542, %v2546
      %v2548 = vshrl.u32 %v2443, 16
      %v2550 = vor.u32 %v2548, %v2546
      %v2552 = vshll.u32 %v2471, 16
      %v2554 = vrot.slane %v2552, 1
      %v2555 = vsel %vm432, %v2550, %v2554
      %v2557 = vshrl.u32 %v2444, 16
      %v2559 = vshll.u32 %v2444, 16
      %v2561 = vrot.slane %v2559, 1
      %v2562 = vor.u32 %v2557, %v2561
      %v2564 = vshll.u32 %v2445, 16
      %v2566 = vrot.slane %v2564, 1
      %v2567 = vsel %vm432, %v2562, %v2566
      %v2568 = vshrl.u32 %v2445, 16
      %v2570 = vor.u32 %v2568, %v2566
      %v2572 = vshll.u32 %v2472, 16
      %v2574 = vrot.slane %v2572, 1
      %v2575 = vsel %vm432, %v2570, %v2574
      %v2577 = vshrl.u32 %v2446, 16
      %v2579 = vshll.u32 %v2446, 16
      %v2581 = vrot.slane %v2579, 1
      %v2582 = vor.u32 %v2577, %v2581
      %v2584 = vshll.u32 %v2447, 16
      %v2586 = vrot.slane %v2584, 1
      %v2587 = vsel %vm432, %v2582, %v2586
      %v2588 = vshrl.u32 %v2447, 16
      %v2590 = vor.u32 %v2588, %v2586
      %v2592 = vshll.u32 %v2473, 16
      %v2594 = vrot.slane %v2592, 1
      %v2595 = vsel %vm432, %v2590, %v2594
      %v2597 = vshrl.u32 %v2448, 16
      %v2599 = vshll.u32 %v2448, 16
      %v2601 = vrot.slane %v2599, 1
      %v2602 = vor.u32 %v2597, %v2601
      %v2604 = vshll.u32 %v2449, 16
      %v2606 = vrot.slane %v2604, 1
      %v2607 = vsel %vm432, %v2602, %v2606
      %v2608 = vshrl.u32 %v2449, 16
      %v2610 = vor.u32 %v2608, %v2606
      %v2612 = vshll.u32 %v2474, 16
      %v2614 = vrot.slane %v2612, 1
      %v2615 = vsel %vm432, %v2610, %v2614
      %v2617 = vshrl.u32 %v2450, 16
      %v2619 = vshll.u32 %v2450, 16
      %v2621 = vrot.slane %v2619, 1
      %v2622 = vor.u32 %v2617, %v2621
      %v2624 = vshll.u32 %v2451, 16
      %v2626 = vrot.slane %v2624, 1
      %v2627 = vsel %vm432, %v2622, %v2626
      %v2628 = vshrl.u32 %v2451, 16
      %v2630 = vor.u32 %v2628, %v2626
      %v2632 = vshll.u32 %v2475, 16
      %v2634 = vrot.slane %v2632, 1
      %v2635 = vsel %vm432, %v2630, %v2634
      %2636 = vrot.lane.b32.xlu0 %v2487, 8
      %v2637 = vpop.permute.xlu0 %2636
      %2638 = vrot.lane.b32.xlu0 %v2495, 8
      %v2639 = vpop.permute.xlu0 %2638
      %2640 = vrot.lane.b32.xlu0 %v2507, 8
      %v2641 = vpop.permute.xlu0 %2640
      %2642 = vrot.lane.b32.xlu0 %v2515, 8
      %v2643 = vpop.permute.xlu0 %2642
      %2644 = vrot.lane.b32.xlu0 %v2527, 8
      %v2645 = vpop.permute.xlu0 %2644
      %2646 = vrot.lane.b32.xlu0 %v2535, 8
      %v2647 = vpop.permute.xlu0 %2646
      %2648 = vrot.lane.b32.xlu0 %v2547, 8
      %v2649 = vpop.permute.xlu0 %2648
      %2650 = vrot.lane.b32.xlu0 %v2555, 8
      %v2651 = vpop.permute.xlu0 %2650
      %2652 = vrot.lane.b32.xlu0 %v2567, 8
      %v2653 = vpop.permute.xlu0 %2652
      %2654 = vrot.lane.b32.xlu0 %v2575, 8
      %v2655 = vpop.permute.xlu0 %2654
      %2656 = vrot.lane.b32.xlu0 %v2587, 8
      %v2657 = vpop.permute.xlu0 %2656
      %2658 = vrot.lane.b32.xlu0 %v2595, 8
      %v2659 = vpop.permute.xlu0 %2658
      %2660 = vrot.lane.b32.xlu0 %v2607, 8
      %v2661 = vpop.permute.xlu0 %2660
      %2662 = vrot.lane.b32.xlu0 %v2615, 8
      %v2663 = vpop.permute.xlu0 %2662
      %2664 = vrot.lane.b32.xlu0 %v2627, 8
      %v2665 = vpop.permute.xlu0 %2664
      %2666 = vrot.lane.b32.xlu0 %v2635, 8
      %v2667 = vpop.permute.xlu0 %2666
      %v2676 = vunpack.c.l.b16 %v2266
      %v2677 = vunpack.c.l.b16 %v2267
      %v2678 = vunpack.c.l.b16 %v2268
      %v2679 = vunpack.c.l.b16 %v2269
      %v2680 = vunpack.c.l.b16 %v2270
      %v2681 = vunpack.c.l.b16 %v2271
      %v2682 = vunpack.c.l.b16 %v2272
      %v2683 = vunpack.c.l.b16 %v2273
      %v2684 = vpack.c.b16 %v2405, %v2676
      %v2685 = vpack.c.b16 %v2409, %v2677
      %v2686 = vpack.c.b16 %v2413, %v2678
      %v2687 = vpack.c.b16 %v2417, %v2679
      %v2688 = vpack.c.b16 %v2421, %v2680
      %v2689 = vpack.c.b16 %v2425, %v2681
      %v2690 = vpack.c.b16 %v2429, %v2682
      %v2691 = vpack.c.b16 %v2433, %v2683
      %v2692 = vrot.slane %v2684, 1
      %v2693 = vrot.slane %v2437, 1
      %v2694 = vsel %vm649, %v2692, %v2693
      %v2695 = vrot.slane %v2468, 1
      %v2696 = vsel %vm649, %v2693, %v2695
      %v2697 = vrot.slane %v2685, 1
      %v2698 = vrot.slane %v2439, 1
      %v2699 = vsel %vm649, %v2697, %v2698
      %v2700 = vrot.slane %v2469, 1
      %v2701 = vsel %vm649, %v2698, %v2700
      %v2702 = vrot.slane %v2686, 1
      %v2703 = vrot.slane %v2441, 1
      %v2704 = vsel %vm649, %v2702, %v2703
      %v2705 = vrot.slane %v2470, 1
      %v2706 = vsel %vm649, %v2703, %v2705
      %v2707 = vrot.slane %v2687, 1
      %v2708 = vrot.slane %v2443, 1
      %v2709 = vsel %vm649, %v2707, %v2708
      %v2710 = vrot.slane %v2471, 1
      %v2711 = vsel %vm649, %v2708, %v2710
      %v2712 = vrot.slane %v2688, 1
      %v2713 = vrot.slane %v2445, 1
      %v2714 = vsel %vm649, %v2712, %v2713
      %v2715 = vrot.slane %v2472, 1
      %v2716 = vsel %vm649, %v2713, %v2715
      %v2717 = vrot.slane %v2689, 1
      %v2718 = vrot.slane %v2447, 1
      %v2719 = vsel %vm649, %v2717, %v2718
      %v2720 = vrot.slane %v2473, 1
      %v2721 = vsel %vm649, %v2718, %v2720
      %v2722 = vrot.slane %v2690, 1
      %v2723 = vrot.slane %v2449, 1
      %v2724 = vsel %vm649, %v2722, %v2723
      %v2725 = vrot.slane %v2474, 1
      %v2726 = vsel %vm649, %v2723, %v2725
      %v2727 = vrot.slane %v2691, 1
      %v2728 = vrot.slane %v2451, 1
      %v2729 = vsel %vm649, %v2727, %v2728
      %v2730 = vrot.slane %v2475, 1
      %v2731 = vsel %vm649, %v2728, %v2730
      %2732 = vrot.lane.b32.xlu0 %v2694, 16
      %v2733 = vpop.permute.xlu0 %2732
      %2734 = vrot.lane.b32.xlu0 %v2696, 16
      %v2735 = vpop.permute.xlu0 %2734
      %2736 = vrot.lane.b32.xlu0 %v2699, 16
      %v2737 = vpop.permute.xlu0 %2736
      %2738 = vrot.lane.b32.xlu0 %v2701, 16
      %v2739 = vpop.permute.xlu0 %2738
      %2740 = vrot.lane.b32.xlu0 %v2704, 16
      %v2741 = vpop.permute.xlu0 %2740
      %2742 = vrot.lane.b32.xlu0 %v2706, 16
      %v2743 = vpop.permute.xlu0 %2742
      %2744 = vrot.lane.b32.xlu0 %v2709, 16
      %v2745 = vpop.permute.xlu0 %2744
      %2746 = vrot.lane.b32.xlu0 %v2711, 16
      %v2747 = vpop.permute.xlu0 %2746
      %2748 = vrot.lane.b32.xlu0 %v2714, 16
      %v2749 = vpop.permute.xlu0 %2748
      %2750 = vrot.lane.b32.xlu0 %v2716, 16
      %v2751 = vpop.permute.xlu0 %2750
      %2752 = vrot.lane.b32.xlu0 %v2719, 16
      %v2753 = vpop.permute.xlu0 %2752
      %2754 = vrot.lane.b32.xlu0 %v2721, 16
      %v2755 = vpop.permute.xlu0 %2754
      %2756 = vrot.lane.b32.xlu0 %v2724, 16
      %v2757 = vpop.permute.xlu0 %2756
      %2758 = vrot.lane.b32.xlu0 %v2726, 16
      %v2759 = vpop.permute.xlu0 %2758
      %2760 = vrot.lane.b32.xlu0 %v2729, 16
      %v2761 = vpop.permute.xlu0 %2760
      %2762 = vrot.lane.b32.xlu0 %v2731, 16
      %v2763 = vpop.permute.xlu0 %2762
      %v2796 = vunpack.c.l.b16 %v2275
      %v2797 = vunpack.c.l.b16 %v2276
      %v2798 = vunpack.c.l.b16 %v2277
      %v2799 = vunpack.c.l.b16 %v2278
      %v2800 = vunpack.c.l.b16 %v2279
      %v2801 = vunpack.c.l.b16 %v2280
      %v2802 = vunpack.c.l.b16 %v2281
      %v2803 = vunpack.c.l.b16 %v2282
      %v2804 = vunpack.c.l.b16 %v2283
      %v2805 = vunpack.c.l.b16 %v2284
      %v2806 = vunpack.c.l.b16 %v2285
      %v2807 = vunpack.c.l.b16 %v2286
      %v2808 = vunpack.c.l.b16 %v2287
      %v2809 = vunpack.c.l.b16 %v2288
      %v2810 = vunpack.c.l.b16 %v2289
      %v2811 = vunpack.c.l.b16 %v2290
      %v2812 = vunpack.c.l.b16 %v2291
      %v2813 = vunpack.c.l.b16 %v2292
      %v2814 = vunpack.c.l.b16 %v2293
      %v2815 = vunpack.c.l.b16 %v2294
      %v2816 = vunpack.c.l.b16 %v2295
      %v2817 = vunpack.c.l.b16 %v2296
      %v2818 = vunpack.c.l.b16 %v2297
      %v2819 = vunpack.c.l.b16 %v2298
      %v2820 = vunpack.c.l.b16 %v2299
      %v2821 = vunpack.c.l.b16 %v2300
      %v2822 = vunpack.c.l.b16 %v2301
      %v2823 = vunpack.c.l.b16 %v2302
      %v2824 = vunpack.c.l.b16 %v2303
      %v2825 = vunpack.c.l.b16 %v2304
      %v2826 = vunpack.c.l.b16 %v2305
      %v2827 = vunpack.c.l.b16 %v2306
      %v2828 = vpack.c.b16 %v2797, %v2796
      %v2829 = vpack.c.b16 %v2799, %v2798
      %v2830 = vpack.c.b16 %v2801, %v2800
      %v2831 = vpack.c.b16 %v2803, %v2802
      %v2832 = vpack.c.b16 %v2805, %v2804
      %v2833 = vpack.c.b16 %v2807, %v2806
      %v2834 = vpack.c.b16 %v2809, %v2808
      %v2835 = vpack.c.b16 %v2811, %v2810
      %v2836 = vpack.c.b16 %v2813, %v2812
      %v2837 = vpack.c.b16 %v2815, %v2814
      %v2838 = vpack.c.b16 %v2817, %v2816
      %v2839 = vpack.c.b16 %v2819, %v2818
      %v2840 = vpack.c.b16 %v2821, %v2820
      %v2841 = vpack.c.b16 %v2823, %v2822
      %v2842 = vpack.c.b16 %v2825, %v2824
      %v2843 = vpack.c.b16 %v2827, %v2826
      %2844 = vrot.lane.b32.xlu0 %v2828, 24
      %v2845 = vpop.permute.xlu0 %2844
      %2846 = vrot.lane.b32.xlu0 %v2829, 24
      %v2847 = vpop.permute.xlu0 %2846
      %2848 = vrot.lane.b32.xlu0 %v2830, 24
      %v2849 = vpop.permute.xlu0 %2848
      %2850 = vrot.lane.b32.xlu0 %v2831, 24
      %v2851 = vpop.permute.xlu0 %2850
      %2852 = vrot.lane.b32.xlu0 %v2832, 24
      %v2853 = vpop.permute.xlu0 %2852
      %2854 = vrot.lane.b32.xlu0 %v2833, 24
      %v2855 = vpop.permute.xlu0 %2854
      %2856 = vrot.lane.b32.xlu0 %v2834, 24
      %v2857 = vpop.permute.xlu0 %2856
      %2858 = vrot.lane.b32.xlu0 %v2835, 24
      %v2859 = vpop.permute.xlu0 %2858
      %2860 = vrot.lane.b32.xlu0 %v2836, 24
      %v2861 = vpop.permute.xlu0 %2860
      %2862 = vrot.lane.b32.xlu0 %v2837, 24
      %v2863 = vpop.permute.xlu0 %2862
      %2864 = vrot.lane.b32.xlu0 %v2838, 24
      %v2865 = vpop.permute.xlu0 %2864
      %2866 = vrot.lane.b32.xlu0 %v2839, 24
      %v2867 = vpop.permute.xlu0 %2866
      %2868 = vrot.lane.b32.xlu0 %v2840, 24
      %v2869 = vpop.permute.xlu0 %2868
      %2870 = vrot.lane.b32.xlu0 %v2841, 24
      %v2871 = vpop.permute.xlu0 %2870
      %2872 = vrot.lane.b32.xlu0 %v2842, 24
      %v2873 = vpop.permute.xlu0 %2872
      %2874 = vrot.lane.b32.xlu0 %v2843, 24
      %v2875 = vpop.permute.xlu0 %2874
      %v2884 = vunpack.c.l.b16 %v2307
      %v2885 = vunpack.c.l.b16 %v2308
      %v2886 = vunpack.c.l.b16 %v2309
      %v2887 = vunpack.c.l.b16 %v2310
      %v2888 = vunpack.c.l.b16 %v2311
      %v2889 = vunpack.c.l.b16 %v2312
      %v2890 = vunpack.c.l.b16 %v2313
      %v2891 = vunpack.c.l.b16 %v2314
      %v2892 = vpack.c.b16 %v2884, %v2884
      %v2893 = vpack.c.b16 %v2885, %v2885
      %v2894 = vpack.c.b16 %v2886, %v2886
      %v2895 = vpack.c.b16 %v2887, %v2887
      %v2896 = vpack.c.b16 %v2888, %v2888
      %v2897 = vpack.c.b16 %v2889, %v2889
      %v2898 = vpack.c.b16 %v2890, %v2890
      %v2899 = vpack.c.b16 %v2891, %v2891
      %v2901 = vshrl.u32 %v2828, 16
      %v2903 = vshll.u32 %v2828, 16
      %v2905 = vrot.slane %v2903, 1
      %v2906 = vor.u32 %v2901, %v2905
      %v2908 = vshll.u32 %v2829, 16
      %v2910 = vrot.slane %v2908, 1
      %v2911 = vsel %vm432, %v2906, %v2910
      %v2912 = vshrl.u32 %v2829, 16
      %v2914 = vor.u32 %v2912, %v2910
      %v2916 = vshll.u32 %v2892, 16
      %v2918 = vrot.slane %v2916, 1
      %v2919 = vsel %vm432, %v2914, %v2918
      %v2921 = vshrl.u32 %v2830, 16
      %v2923 = vshll.u32 %v2830, 16
      %v2925 = vrot.slane %v2923, 1
      %v2926 = vor.u32 %v2921, %v2925
      %v2928 = vshll.u32 %v2831, 16
      %v2930 = vrot.slane %v2928, 1
      %v2931 = vsel %vm432, %v2926, %v2930
      %v2932 = vshrl.u32 %v2831, 16
      %v2934 = vor.u32 %v2932, %v2930
      %v2936 = vshll.u32 %v2893, 16
      %v2938 = vrot.slane %v2936, 1
      %v2939 = vsel %vm432, %v2934, %v2938
      %v2941 = vshrl.u32 %v2832, 16
      %v2943 = vshll.u32 %v2832, 16
      %v2945 = vrot.slane %v2943, 1
      %v2946 = vor.u32 %v2941, %v2945
      %v2948 = vshll.u32 %v2833, 16
      %v2950 = vrot.slane %v2948, 1
      %v2951 = vsel %vm432, %v2946, %v2950
      %v2952 = vshrl.u32 %v2833, 16
      %v2954 = vor.u32 %v2952, %v2950
      %v2956 = vshll.u32 %v2894, 16
      %v2958 = vrot.slane %v2956, 1
      %v2959 = vsel %vm432, %v2954, %v2958
      %v2961 = vshrl.u32 %v2834, 16
      %v2963 = vshll.u32 %v2834, 16
      %v2965 = vrot.slane %v2963, 1
      %v2966 = vor.u32 %v2961, %v2965
      %v2968 = vshll.u32 %v2835, 16
      %v2970 = vrot.slane %v2968, 1
      %v2971 = vsel %vm432, %v2966, %v2970
      %v2972 = vshrl.u32 %v2835, 16
      %v2974 = vor.u32 %v2972, %v2970
      %v2976 = vshll.u32 %v2895, 16
      %v2978 = vrot.slane %v2976, 1
      %v2979 = vsel %vm432, %v2974, %v2978
      %v2981 = vshrl.u32 %v2836, 16
      %v2983 = vshll.u32 %v2836, 16
      %v2985 = vrot.slane %v2983, 1
      %v2986 = vor.u32 %v2981, %v2985
      %v2988 = vshll.u32 %v2837, 16
      %v2990 = vrot.slane %v2988, 1
      %v2991 = vsel %vm432, %v2986, %v2990
      %v2992 = vshrl.u32 %v2837, 16
      %v2994 = vor.u32 %v2992, %v2990
      %v2996 = vshll.u32 %v2896, 16
      %v2998 = vrot.slane %v2996, 1
      %v2999 = vsel %vm432, %v2994, %v2998
      %v3001 = vshrl.u32 %v2838, 16
      %v3003 = vshll.u32 %v2838, 16
      %v3005 = vrot.slane %v3003, 1
      %v3006 = vor.u32 %v3001, %v3005
      %v3008 = vshll.u32 %v2839, 16
      %v3010 = vrot.slane %v3008, 1
      %v3011 = vsel %vm432, %v3006, %v3010
      %v3012 = vshrl.u32 %v2839, 16
      %v3014 = vor.u32 %v3012, %v3010
      %v3016 = vshll.u32 %v2897, 16
      %v3018 = vrot.slane %v3016, 1
      %v3019 = vsel %vm432, %v3014, %v3018
      %v3021 = vshrl.u32 %v2840, 16
      %v3023 = vshll.u32 %v2840, 16
      %v3025 = vrot.slane %v3023, 1
      %v3026 = vor.u32 %v3021, %v3025
      %v3028 = vshll.u32 %v2841, 16
      %v3030 = vrot.slane %v3028, 1
      %v3031 = vsel %vm432, %v3026, %v3030
      %v3032 = vshrl.u32 %v2841, 16
      %v3034 = vor.u32 %v3032, %v3030
      %v3036 = vshll.u32 %v2898, 16
      %v3038 = vrot.slane %v3036, 1
      %v3039 = vsel %vm432, %v3034, %v3038
      %v3041 = vshrl.u32 %v2842, 16
      %v3043 = vshll.u32 %v2842, 16
      %v3045 = vrot.slane %v3043, 1
      %v3046 = vor.u32 %v3041, %v3045
      %v3048 = vshll.u32 %v2843, 16
      %v3050 = vrot.slane %v3048, 1
      %v3051 = vsel %vm432, %v3046, %v3050
      %v3052 = vshrl.u32 %v2843, 16
      %v3054 = vor.u32 %v3052, %v3050
      %v3056 = vshll.u32 %v2899, 16
      %v3058 = vrot.slane %v3056, 1
      %v3059 = vsel %vm432, %v3054, %v3058
      %3060 = vrot.lane.b32.xlu0 %v2911, 32
      %v3061 = vpop.permute.xlu0 %3060
      %3062 = vrot.lane.b32.xlu0 %v2919, 32
      %v3063 = vpop.permute.xlu0 %3062
      %3064 = vrot.lane.b32.xlu0 %v2931, 32
      %v3065 = vpop.permute.xlu0 %3064
      %3066 = vrot.lane.b32.xlu0 %v2939, 32
      %v3067 = vpop.permute.xlu0 %3066
      %3068 = vrot.lane.b32.xlu0 %v2951, 32
      %v3069 = vpop.permute.xlu0 %3068
      %3070 = vrot.lane.b32.xlu0 %v2959, 32
      %v3071 = vpop.permute.xlu0 %3070
      %3072 = vrot.lane.b32.xlu0 %v2971, 32
      %v3073 = vpop.permute.xlu0 %3072
      %3074 = vrot.lane.b32.xlu0 %v2979, 32
      %v3075 = vpop.permute.xlu0 %3074
      %3076 = vrot.lane.b32.xlu0 %v2991, 32
      %v3077 = vpop.permute.xlu0 %3076
      %3078 = vrot.lane.b32.xlu0 %v2999, 32
      %v3079 = vpop.permute.xlu0 %3078
      %3080 = vrot.lane.b32.xlu0 %v3011, 32
      %v3081 = vpop.permute.xlu0 %3080
      %3082 = vrot.lane.b32.xlu0 %v3019, 32
      %v3083 = vpop.permute.xlu0 %3082
      %3084 = vrot.lane.b32.xlu0 %v3031, 32
      %v3085 = vpop.permute.xlu0 %3084
      %3086 = vrot.lane.b32.xlu0 %v3039, 32
      %v3087 = vpop.permute.xlu0 %3086
      %3088 = vrot.lane.b32.xlu0 %v3051, 32
      %v3089 = vpop.permute.xlu0 %3088
      %3090 = vrot.lane.b32.xlu0 %v3059, 32
      %v3091 = vpop.permute.xlu0 %3090
      %v3100 = vunpack.c.l.b16 %v2315
      %v3101 = vunpack.c.l.b16 %v2316
      %v3102 = vunpack.c.l.b16 %v2317
      %v3103 = vunpack.c.l.b16 %v2318
      %v3104 = vunpack.c.l.b16 %v2319
      %v3105 = vunpack.c.l.b16 %v2320
      %v3106 = vunpack.c.l.b16 %v2321
      %v3107 = vunpack.c.l.b16 %v2322
      %v3108 = vpack.c.b16 %v2797, %v3100
      %v3109 = vpack.c.b16 %v2801, %v3101
      %v3110 = vpack.c.b16 %v2805, %v3102
      %v3111 = vpack.c.b16 %v2809, %v3103
      %v3112 = vpack.c.b16 %v2813, %v3104
      %v3113 = vpack.c.b16 %v2817, %v3105
      %v3114 = vpack.c.b16 %v2821, %v3106
      %v3115 = vpack.c.b16 %v2825, %v3107
      %v3116 = vrot.slane %v3108, 1
      %v3117 = vrot.slane %v2829, 1
      %v3118 = vsel %vm649, %v3116, %v3117
      %v3119 = vrot.slane %v2892, 1
      %v3120 = vsel %vm649, %v3117, %v3119
      %v3121 = vrot.slane %v3109, 1
      %v3122 = vrot.slane %v2831, 1
      %v3123 = vsel %vm649, %v3121, %v3122
      %v3124 = vrot.slane %v2893, 1
      %v3125 = vsel %vm649, %v3122, %v3124
      %v3126 = vrot.slane %v3110, 1
      %v3127 = vrot.slane %v2833, 1
      %v3128 = vsel %vm649, %v3126, %v3127
      %v3129 = vrot.slane %v2894, 1
      %v3130 = vsel %vm649, %v3127, %v3129
      %v3131 = vrot.slane %v3111, 1
      %v3132 = vrot.slane %v2835, 1
      %v3133 = vsel %vm649, %v3131, %v3132
      %v3134 = vrot.slane %v2895, 1
      %v3135 = vsel %vm649, %v3132, %v3134
      %v3136 = vrot.slane %v3112, 1
      %v3137 = vrot.slane %v2837, 1
      %v3138 = vsel %vm649, %v3136, %v3137
      %v3139 = vrot.slane %v2896, 1
      %v3140 = vsel %vm649, %v3137, %v3139
      %v3141 = vrot.slane %v3113, 1
      %v3142 = vrot.slane %v2839, 1
      %v3143 = vsel %vm649, %v3141, %v3142
      %v3144 = vrot.slane %v2897, 1
      %v3145 = vsel %vm649, %v3142, %v3144
      %v3146 = vrot.slane %v3114, 1
      %v3147 = vrot.slane %v2841, 1
      %v3148 = vsel %vm649, %v3146, %v3147
      %v3149 = vrot.slane %v2898, 1
      %v3150 = vsel %vm649, %v3147, %v3149
      %v3151 = vrot.slane %v3115, 1
      %v3152 = vrot.slane %v2843, 1
      %v3153 = vsel %vm649, %v3151, %v3152
      %v3154 = vrot.slane %v2899, 1
      %v3155 = vsel %vm649, %v3152, %v3154
      %3156 = vrot.lane.b32.xlu0 %v3118, 40
      %v3157 = vpop.permute.xlu0 %3156
      %3158 = vrot.lane.b32.xlu0 %v3120, 40
      %v3159 = vpop.permute.xlu0 %3158
      %3160 = vrot.lane.b32.xlu0 %v3123, 40
      %v3161 = vpop.permute.xlu0 %3160
      %3162 = vrot.lane.b32.xlu0 %v3125, 40
      %v3163 = vpop.permute.xlu0 %3162
      %3164 = vrot.lane.b32.xlu0 %v3128, 40
      %v3165 = vpop.permute.xlu0 %3164
      %3166 = vrot.lane.b32.xlu0 %v3130, 40
      %v3167 = vpop.permute.xlu0 %3166
      %3168 = vrot.lane.b32.xlu0 %v3133, 40
      %v3169 = vpop.permute.xlu0 %3168
      %3170 = vrot.lane.b32.xlu0 %v3135, 40
      %v3171 = vpop.permute.xlu0 %3170
      %3172 = vrot.lane.b32.xlu0 %v3138, 40
      %v3173 = vpop.permute.xlu0 %3172
      %3174 = vrot.lane.b32.xlu0 %v3140, 40
      %v3175 = vpop.permute.xlu0 %3174
      %3176 = vrot.lane.b32.xlu0 %v3143, 40
      %v3177 = vpop.permute.xlu0 %3176
      %3178 = vrot.lane.b32.xlu0 %v3145, 40
      %v3179 = vpop.permute.xlu0 %3178
      %3180 = vrot.lane.b32.xlu0 %v3148, 40
      %v3181 = vpop.permute.xlu0 %3180
      %3182 = vrot.lane.b32.xlu0 %v3150, 40
      %v3183 = vpop.permute.xlu0 %3182
      %3184 = vrot.lane.b32.xlu0 %v3153, 40
      %v3185 = vpop.permute.xlu0 %3184
      %3186 = vrot.lane.b32.xlu0 %v3155, 40
      %v3187 = vpop.permute.xlu0 %3186
      %v3220 = vunpack.c.l.b16 %v2324
      %v3221 = vunpack.c.l.b16 %v2325
      %v3222 = vunpack.c.l.b16 %v2326
      %v3223 = vunpack.c.l.b16 %v2327
      %v3224 = vunpack.c.l.b16 %v2328
      %v3225 = vunpack.c.l.b16 %v2329
      %v3226 = vunpack.c.l.b16 %v2330
      %v3227 = vunpack.c.l.b16 %v2331
      %v3228 = vunpack.c.l.b16 %v2332
      %v3229 = vunpack.c.l.b16 %v2333
      %v3230 = vunpack.c.l.b16 %v2334
      %v3231 = vunpack.c.l.b16 %v2335
      %v3232 = vunpack.c.l.b16 %v2336
      %v3233 = vunpack.c.l.b16 %v2337
      %v3234 = vunpack.c.l.b16 %v2338
      %v3235 = vunpack.c.l.b16 %v2339
      %v3236 = vunpack.c.l.b16 %v2340
      %v3237 = vunpack.c.l.b16 %v2341
      %v3238 = vunpack.c.l.b16 %v2342
      %v3239 = vunpack.c.l.b16 %v2343
      %v3240 = vunpack.c.l.b16 %v2344
      %v3241 = vunpack.c.l.b16 %v2345
      %v3242 = vunpack.c.l.b16 %v2346
      %v3243 = vunpack.c.l.b16 %v2347
      %v3244 = vunpack.c.l.b16 %v2348
      %v3245 = vunpack.c.l.b16 %v2349
      %v3246 = vunpack.c.l.b16 %v2350
      %v3247 = vunpack.c.l.b16 %v2351
      %v3248 = vunpack.c.l.b16 %v2352
      %v3249 = vunpack.c.l.b16 %v2353
      %v3250 = vunpack.c.l.b16 %v2354
      %v3251 = vunpack.c.l.b16 %v2355
      %v3252 = vpack.c.b16 %v3221, %v3220
      %v3253 = vpack.c.b16 %v3223, %v3222
      %v3254 = vpack.c.b16 %v3225, %v3224
      %v3255 = vpack.c.b16 %v3227, %v3226
      %v3256 = vpack.c.b16 %v3229, %v3228
      %v3257 = vpack.c.b16 %v3231, %v3230
      %v3258 = vpack.c.b16 %v3233, %v3232
      %v3259 = vpack.c.b16 %v3235, %v3234
      %v3260 = vpack.c.b16 %v3237, %v3236
      %v3261 = vpack.c.b16 %v3239, %v3238
      %v3262 = vpack.c.b16 %v3241, %v3240
      %v3263 = vpack.c.b16 %v3243, %v3242
      %v3264 = vpack.c.b16 %v3245, %v3244
      %v3265 = vpack.c.b16 %v3247, %v3246
      %v3266 = vpack.c.b16 %v3249, %v3248
      %v3267 = vpack.c.b16 %v3251, %v3250
      %3268 = vrot.lane.b32.xlu0 %v3252, 48
      %v3269 = vpop.permute.xlu0 %3268
      %3270 = vrot.lane.b32.xlu0 %v3253, 48
      %v3271 = vpop.permute.xlu0 %3270
      %3272 = vrot.lane.b32.xlu0 %v3254, 48
      %v3273 = vpop.permute.xlu0 %3272
      %3274 = vrot.lane.b32.xlu0 %v3255, 48
      %v3275 = vpop.permute.xlu0 %3274
      %3276 = vrot.lane.b32.xlu0 %v3256, 48
      %v3277 = vpop.permute.xlu0 %3276
      %3278 = vrot.lane.b32.xlu0 %v3257, 48
      %v3279 = vpop.permute.xlu0 %3278
      %3280 = vrot.lane.b32.xlu0 %v3258, 48
      %v3281 = vpop.permute.xlu0 %3280
      %3282 = vrot.lane.b32.xlu0 %v3259, 48
      %v3283 = vpop.permute.xlu0 %3282
      %3284 = vrot.lane.b32.xlu0 %v3260, 48
      %v3285 = vpop.permute.xlu0 %3284
      %3286 = vrot.lane.b32.xlu0 %v3261, 48
      %v3287 = vpop.permute.xlu0 %3286
      %3288 = vrot.lane.b32.xlu0 %v3262, 48
      %v3289 = vpop.permute.xlu0 %3288
      %3290 = vrot.lane.b32.xlu0 %v3263, 48
      %v3291 = vpop.permute.xlu0 %3290
      %3292 = vrot.lane.b32.xlu0 %v3264, 48
      %v3293 = vpop.permute.xlu0 %3292
      %3294 = vrot.lane.b32.xlu0 %v3265, 48
      %v3295 = vpop.permute.xlu0 %3294
      %3296 = vrot.lane.b32.xlu0 %v3266, 48
      %v3297 = vpop.permute.xlu0 %3296
      %3298 = vrot.lane.b32.xlu0 %v3267, 48
      %v3299 = vpop.permute.xlu0 %3298
      %v3308 = vunpack.c.l.b16 %v2356
      %v3309 = vunpack.c.l.b16 %v2357
      %v3310 = vunpack.c.l.b16 %v2358
      %v3311 = vunpack.c.l.b16 %v2359
      %v3312 = vunpack.c.l.b16 %v2360
      %v3313 = vunpack.c.l.b16 %v2361
      %v3314 = vunpack.c.l.b16 %v2362
      %v3315 = vunpack.c.l.b16 %v2363
      %v3316 = vpack.c.b16 %v3308, %v3308
      %v3317 = vpack.c.b16 %v3309, %v3309
      %v3318 = vpack.c.b16 %v3310, %v3310
      %v3319 = vpack.c.b16 %v3311, %v3311
      %v3320 = vpack.c.b16 %v3312, %v3312
      %v3321 = vpack.c.b16 %v3313, %v3313
      %v3322 = vpack.c.b16 %v3314, %v3314
      %v3323 = vpack.c.b16 %v3315, %v3315
      %v3325 = vshrl.u32 %v3252, 16
      %v3327 = vshll.u32 %v3252, 16
      %v3329 = vrot.slane %v3327, 1
      %v3330 = vor.u32 %v3325, %v3329
      %v3332 = vshll.u32 %v3253, 16
      %v3334 = vrot.slane %v3332, 1
      %v3335 = vsel %vm432, %v3330, %v3334
      %v3336 = vshrl.u32 %v3253, 16
      %v3338 = vor.u32 %v3336, %v3334
      %v3340 = vshll.u32 %v3316, 16
      %v3342 = vrot.slane %v3340, 1
      %v3343 = vsel %vm432, %v3338, %v3342
      %v3345 = vshrl.u32 %v3254, 16
      %v3347 = vshll.u32 %v3254, 16
      %v3349 = vrot.slane %v3347, 1
      %v3350 = vor.u32 %v3345, %v3349
      %v3352 = vshll.u32 %v3255, 16
      %v3354 = vrot.slane %v3352, 1
      %v3355 = vsel %vm432, %v3350, %v3354
      %v3356 = vshrl.u32 %v3255, 16
      %v3358 = vor.u32 %v3356, %v3354
      %v3360 = vshll.u32 %v3317, 16
      %v3362 = vrot.slane %v3360, 1
      %v3363 = vsel %vm432, %v3358, %v3362
      %v3365 = vshrl.u32 %v3256, 16
      %v3367 = vshll.u32 %v3256, 16
      %v3369 = vrot.slane %v3367, 1
      %v3370 = vor.u32 %v3365, %v3369
      %v3372 = vshll.u32 %v3257, 16
      %v3374 = vrot.slane %v3372, 1
      %v3375 = vsel %vm432, %v3370, %v3374
      %v3376 = vshrl.u32 %v3257, 16
      %v3378 = vor.u32 %v3376, %v3374
      %v3380 = vshll.u32 %v3318, 16
      %v3382 = vrot.slane %v3380, 1
      %v3383 = vsel %vm432, %v3378, %v3382
      %v3385 = vshrl.u32 %v3258, 16
      %v3387 = vshll.u32 %v3258, 16
      %v3389 = vrot.slane %v3387, 1
      %v3390 = vor.u32 %v3385, %v3389
      %v3392 = vshll.u32 %v3259, 16
      %v3394 = vrot.slane %v3392, 1
      %v3395 = vsel %vm432, %v3390, %v3394
      %v3396 = vshrl.u32 %v3259, 16
      %v3398 = vor.u32 %v3396, %v3394
      %v3400 = vshll.u32 %v3319, 16
      %v3402 = vrot.slane %v3400, 1
      %v3403 = vsel %vm432, %v3398, %v3402
      %v3405 = vshrl.u32 %v3260, 16
      %v3407 = vshll.u32 %v3260, 16
      %v3409 = vrot.slane %v3407, 1
      %v3410 = vor.u32 %v3405, %v3409
      %v3412 = vshll.u32 %v3261, 16
      %v3414 = vrot.slane %v3412, 1
      %v3415 = vsel %vm432, %v3410, %v3414
      %v3416 = vshrl.u32 %v3261, 16
      %v3418 = vor.u32 %v3416, %v3414
      %v3420 = vshll.u32 %v3320, 16
      %v3422 = vrot.slane %v3420, 1
      %v3423 = vsel %vm432, %v3418, %v3422
      %v3425 = vshrl.u32 %v3262, 16
      %v3427 = vshll.u32 %v3262, 16
      %v3429 = vrot.slane %v3427, 1
      %v3430 = vor.u32 %v3425, %v3429
      %v3432 = vshll.u32 %v3263, 16
      %v3434 = vrot.slane %v3432, 1
      %v3435 = vsel %vm432, %v3430, %v3434
      %v3436 = vshrl.u32 %v3263, 16
      %v3438 = vor.u32 %v3436, %v3434
      %v3440 = vshll.u32 %v3321, 16
      %v3442 = vrot.slane %v3440, 1
      %v3443 = vsel %vm432, %v3438, %v3442
      %v3445 = vshrl.u32 %v3264, 16
      %v3447 = vshll.u32 %v3264, 16
      %v3449 = vrot.slane %v3447, 1
      %v3450 = vor.u32 %v3445, %v3449
      %v3452 = vshll.u32 %v3265, 16
      %v3454 = vrot.slane %v3452, 1
      %v3455 = vsel %vm432, %v3450, %v3454
      %v3456 = vshrl.u32 %v3265, 16
      %v3458 = vor.u32 %v3456, %v3454
      %v3460 = vshll.u32 %v3322, 16
      %v3462 = vrot.slane %v3460, 1
      %v3463 = vsel %vm432, %v3458, %v3462
      %v3465 = vshrl.u32 %v3266, 16
      %v3467 = vshll.u32 %v3266, 16
      %v3469 = vrot.slane %v3467, 1
      %v3470 = vor.u32 %v3465, %v3469
      %v3472 = vshll.u32 %v3267, 16
      %v3474 = vrot.slane %v3472, 1
      %v3475 = vsel %vm432, %v3470, %v3474
      %v3476 = vshrl.u32 %v3267, 16
      %v3478 = vor.u32 %v3476, %v3474
      %v3480 = vshll.u32 %v3323, 16
      %v3482 = vrot.slane %v3480, 1
      %v3483 = vsel %vm432, %v3478, %v3482
      %3484 = vrot.lane.b32.xlu0 %v3335, 56
      %v3485 = vpop.permute.xlu0 %3484
      %3486 = vrot.lane.b32.xlu0 %v3343, 56
      %v3487 = vpop.permute.xlu0 %3486
      %3488 = vrot.lane.b32.xlu0 %v3355, 56
      %v3489 = vpop.permute.xlu0 %3488
      %3490 = vrot.lane.b32.xlu0 %v3363, 56
      %v3491 = vpop.permute.xlu0 %3490
      %3492 = vrot.lane.b32.xlu0 %v3375, 56
      %v3493 = vpop.permute.xlu0 %3492
      %3494 = vrot.lane.b32.xlu0 %v3383, 56
      %v3495 = vpop.permute.xlu0 %3494
      %3496 = vrot.lane.b32.xlu0 %v3395, 56
      %v3497 = vpop.permute.xlu0 %3496
      %3498 = vrot.lane.b32.xlu0 %v3403, 56
      %v3499 = vpop.permute.xlu0 %3498
      %3500 = vrot.lane.b32.xlu0 %v3415, 56
      %v3501 = vpop.permute.xlu0 %3500
      %3502 = vrot.lane.b32.xlu0 %v3423, 56
      %v3503 = vpop.permute.xlu0 %3502
      %3504 = vrot.lane.b32.xlu0 %v3435, 56
      %v3505 = vpop.permute.xlu0 %3504
      %3506 = vrot.lane.b32.xlu0 %v3443, 56
      %v3507 = vpop.permute.xlu0 %3506
      %3508 = vrot.lane.b32.xlu0 %v3455, 56
      %v3509 = vpop.permute.xlu0 %3508
      %3510 = vrot.lane.b32.xlu0 %v3463, 56
      %v3511 = vpop.permute.xlu0 %3510
      %3512 = vrot.lane.b32.xlu0 %v3475, 56
      %v3513 = vpop.permute.xlu0 %3512
      %3514 = vrot.lane.b32.xlu0 %v3483, 56
      %v3515 = vpop.permute.xlu0 %3514
      %v3524 = vunpack.c.l.b16 %v2364
      %v3525 = vunpack.c.l.b16 %v2365
      %v3526 = vunpack.c.l.b16 %v2366
      %v3527 = vunpack.c.l.b16 %v2367
      %v3528 = vunpack.c.l.b16 %v2368
      %v3529 = vunpack.c.l.b16 %v2369
      %v3530 = vunpack.c.l.b16 %v2370
      %v3531 = vunpack.c.l.b16 %v2371
      %v3532 = vpack.c.b16 %v3221, %v3524
      %v3533 = vpack.c.b16 %v3225, %v3525
      %v3534 = vpack.c.b16 %v3229, %v3526
      %v3535 = vpack.c.b16 %v3233, %v3527
      %v3536 = vpack.c.b16 %v3237, %v3528
      %v3537 = vpack.c.b16 %v3241, %v3529
      %v3538 = vpack.c.b16 %v3245, %v3530
      %v3539 = vpack.c.b16 %v3249, %v3531
      %v3540 = vrot.slane %v3532, 1
      %v3541 = vrot.slane %v3253, 1
      %v3542 = vsel %vm649, %v3540, %v3541
      %v3543 = vrot.slane %v3316, 1
      %v3544 = vsel %vm649, %v3541, %v3543
      %v3545 = vrot.slane %v3533, 1
      %v3546 = vrot.slane %v3255, 1
      %v3547 = vsel %vm649, %v3545, %v3546
      %v3548 = vrot.slane %v3317, 1
      %v3549 = vsel %vm649, %v3546, %v3548
      %v3550 = vrot.slane %v3534, 1
      %v3551 = vrot.slane %v3257, 1
      %v3552 = vsel %vm649, %v3550, %v3551
      %v3553 = vrot.slane %v3318, 1
      %v3554 = vsel %vm649, %v3551, %v3553
      %v3555 = vrot.slane %v3535, 1
      %v3556 = vrot.slane %v3259, 1
      %v3557 = vsel %vm649, %v3555, %v3556
      %v3558 = vrot.slane %v3319, 1
      %v3559 = vsel %vm649, %v3556, %v3558
      %v3560 = vrot.slane %v3536, 1
      %v3561 = vrot.slane %v3261, 1
      %v3562 = vsel %vm649, %v3560, %v3561
      %v3563 = vrot.slane %v3320, 1
      %v3564 = vsel %vm649, %v3561, %v3563
      %v3565 = vrot.slane %v3537, 1
      %v3566 = vrot.slane %v3263, 1
      %v3567 = vsel %vm649, %v3565, %v3566
      %v3568 = vrot.slane %v3321, 1
      %v3569 = vsel %vm649, %v3566, %v3568
      %v3570 = vrot.slane %v3538, 1
      %v3571 = vrot.slane %v3265, 1
      %v3572 = vsel %vm649, %v3570, %v3571
      %v3573 = vrot.slane %v3322, 1
      %v3574 = vsel %vm649, %v3571, %v3573
      %v3575 = vrot.slane %v3539, 1
      %v3576 = vrot.slane %v3267, 1
      %v3577 = vsel %vm649, %v3575, %v3576
      %v3578 = vrot.slane %v3323, 1
      %v3579 = vsel %vm649, %v3576, %v3578
      %3580 = vrot.lane.b32.xlu0 %v3542, 64
      %v3581 = vpop.permute.xlu0 %3580
      %3582 = vrot.lane.b32.xlu0 %v3544, 64
      %v3583 = vpop.permute.xlu0 %3582
      %3584 = vrot.lane.b32.xlu0 %v3547, 64
      %v3585 = vpop.permute.xlu0 %3584
      %3586 = vrot.lane.b32.xlu0 %v3549, 64
      %v3587 = vpop.permute.xlu0 %3586
      %3588 = vrot.lane.b32.xlu0 %v3552, 64
      %v3589 = vpop.permute.xlu0 %3588
      %3590 = vrot.lane.b32.xlu0 %v3554, 64
      %v3591 = vpop.permute.xlu0 %3590
      %3592 = vrot.lane.b32.xlu0 %v3557, 64
      %v3593 = vpop.permute.xlu0 %3592
      %3594 = vrot.lane.b32.xlu0 %v3559, 64
      %v3595 = vpop.permute.xlu0 %3594
      %3596 = vrot.lane.b32.xlu0 %v3562, 64
      %v3597 = vpop.permute.xlu0 %3596
      %3598 = vrot.lane.b32.xlu0 %v3564, 64
      %v3599 = vpop.permute.xlu0 %3598
      %3600 = vrot.lane.b32.xlu0 %v3567, 64
      %v3601 = vpop.permute.xlu0 %3600
      %3602 = vrot.lane.b32.xlu0 %v3569, 64
      %v3603 = vpop.permute.xlu0 %3602
      %3604 = vrot.lane.b32.xlu0 %v3572, 64
      %v3605 = vpop.permute.xlu0 %3604
      %3606 = vrot.lane.b32.xlu0 %v3574, 64
      %v3607 = vpop.permute.xlu0 %3606
      %3608 = vrot.lane.b32.xlu0 %v3577, 64
      %v3609 = vpop.permute.xlu0 %3608
      %3610 = vrot.lane.b32.xlu0 %v3579, 64
      %v3611 = vpop.permute.xlu0 %3610
      %v3613 = vsel %vm1570, %v2436, %v2637
      %v3615 = vsel %vm1570, %v2437, %v2639
      %v3617 = vsel %vm1570, %v2438, %v2641
      %v3619 = vsel %vm1570, %v2439, %v2643
      %v3621 = vsel %vm1570, %v2440, %v2645
      %v3623 = vsel %vm1570, %v2441, %v2647
      %v3625 = vsel %vm1570, %v2442, %v2649
      %v3627 = vsel %vm1570, %v2443, %v2651
      %v3629 = vsel %vm1570, %v2444, %v2653
      %v3631 = vsel %vm1570, %v2445, %v2655
      %v3633 = vsel %vm1570, %v2446, %v2657
      %v3635 = vsel %vm1570, %v2447, %v2659
      %v3637 = vsel %vm1570, %v2448, %v2661
      %v3639 = vsel %vm1570, %v2449, %v2663
      %v3641 = vsel %vm1570, %v2450, %v2665
      %v3643 = vsel %vm1570, %v2451, %v2667
      %v3645 = vsel %vm1603, %v3613, %v2733
      %v3647 = vsel %vm1603, %v3615, %v2735
      %v3649 = vsel %vm1603, %v3617, %v2737
      %v3651 = vsel %vm1603, %v3619, %v2739
      %v3653 = vsel %vm1603, %v3621, %v2741
      %v3655 = vsel %vm1603, %v3623, %v2743
      %v3657 = vsel %vm1603, %v3625, %v2745
      %v3659 = vsel %vm1603, %v3627, %v2747
      %v3661 = vsel %vm1603, %v3629, %v2749
      %v3663 = vsel %vm1603, %v3631, %v2751
      %v3665 = vsel %vm1603, %v3633, %v2753
      %v3667 = vsel %vm1603, %v3635, %v2755
      %v3669 = vsel %vm1603, %v3637, %v2757
      %v3671 = vsel %vm1603, %v3639, %v2759
      %v3673 = vsel %vm1603, %v3641, %v2761
      %v3675 = vsel %vm1603, %v3643, %v2763
      %v3677 = vsel %vm1636, %v3645, %v2845
      %v3679 = vsel %vm1636, %v3647, %v2847
      %v3681 = vsel %vm1636, %v3649, %v2849
      %v3683 = vsel %vm1636, %v3651, %v2851
      %v3685 = vsel %vm1636, %v3653, %v2853
      %v3687 = vsel %vm1636, %v3655, %v2855
      %v3689 = vsel %vm1636, %v3657, %v2857
      %v3691 = vsel %vm1636, %v3659, %v2859
      %v3693 = vsel %vm1636, %v3661, %v2861
      %v3695 = vsel %vm1636, %v3663, %v2863
      %v3697 = vsel %vm1636, %v3665, %v2865
      %v3699 = vsel %vm1636, %v3667, %v2867
      %v3701 = vsel %vm1636, %v3669, %v2869
      %v3703 = vsel %vm1636, %v3671, %v2871
      %v3705 = vsel %vm1636, %v3673, %v2873
      %v3707 = vsel %vm1636, %v3675, %v2875
      %v3709 = vsel %vm1669, %v3677, %v3061
      %v3711 = vsel %vm1669, %v3679, %v3063
      %v3713 = vsel %vm1669, %v3681, %v3065
      %v3715 = vsel %vm1669, %v3683, %v3067
      %v3717 = vsel %vm1669, %v3685, %v3069
      %v3719 = vsel %vm1669, %v3687, %v3071
      %v3721 = vsel %vm1669, %v3689, %v3073
      %v3723 = vsel %vm1669, %v3691, %v3075
      %v3725 = vsel %vm1669, %v3693, %v3077
      %v3727 = vsel %vm1669, %v3695, %v3079
      %v3729 = vsel %vm1669, %v3697, %v3081
      %v3731 = vsel %vm1669, %v3699, %v3083
      %v3733 = vsel %vm1669, %v3701, %v3085
      %v3735 = vsel %vm1669, %v3703, %v3087
      %v3737 = vsel %vm1669, %v3705, %v3089
      %v3739 = vsel %vm1669, %v3707, %v3091
      %v3741 = vsel %vm1702, %v3709, %v3157
      %v3743 = vsel %vm1702, %v3711, %v3159
      %v3745 = vsel %vm1702, %v3713, %v3161
      %v3747 = vsel %vm1702, %v3715, %v3163
      %v3749 = vsel %vm1702, %v3717, %v3165
      %v3751 = vsel %vm1702, %v3719, %v3167
      %v3753 = vsel %vm1702, %v3721, %v3169
      %v3755 = vsel %vm1702, %v3723, %v3171
      %v3757 = vsel %vm1702, %v3725, %v3173
      %v3759 = vsel %vm1702, %v3727, %v3175
      %v3761 = vsel %vm1702, %v3729, %v3177
      %v3763 = vsel %vm1702, %v3731, %v3179
      %v3765 = vsel %vm1702, %v3733, %v3181
      %v3767 = vsel %vm1702, %v3735, %v3183
      %v3769 = vsel %vm1702, %v3737, %v3185
      %v3771 = vsel %vm1702, %v3739, %v3187
      %v3773 = vsel %vm1735, %v3741, %v3269
      %v3775 = vsel %vm1735, %v3743, %v3271
      %v3777 = vsel %vm1735, %v3745, %v3273
      %v3779 = vsel %vm1735, %v3747, %v3275
      %v3781 = vsel %vm1735, %v3749, %v3277
      %v3783 = vsel %vm1735, %v3751, %v3279
      %v3785 = vsel %vm1735, %v3753, %v3281
      %v3787 = vsel %vm1735, %v3755, %v3283
      %v3789 = vsel %vm1735, %v3757, %v3285
      %v3791 = vsel %vm1735, %v3759, %v3287
      %v3793 = vsel %vm1735, %v3761, %v3289
      %v3795 = vsel %vm1735, %v3763, %v3291
      %v3797 = vsel %vm1735, %v3765, %v3293
      %v3799 = vsel %vm1735, %v3767, %v3295
      %v3801 = vsel %vm1735, %v3769, %v3297
      %v3803 = vsel %vm1735, %v3771, %v3299
      %v3805 = vsel %vm1768, %v3773, %v3485
      %v3807 = vsel %vm1768, %v3775, %v3487
      %v3809 = vsel %vm1768, %v3777, %v3489
      %v3811 = vsel %vm1768, %v3779, %v3491
      %v3813 = vsel %vm1768, %v3781, %v3493
      %v3815 = vsel %vm1768, %v3783, %v3495
      %v3817 = vsel %vm1768, %v3785, %v3497
      %v3819 = vsel %vm1768, %v3787, %v3499
      %v3821 = vsel %vm1768, %v3789, %v3501
      %v3823 = vsel %vm1768, %v3791, %v3503
      %v3825 = vsel %vm1768, %v3793, %v3505
      %v3827 = vsel %vm1768, %v3795, %v3507
      %v3829 = vsel %vm1768, %v3797, %v3509
      %v3831 = vsel %vm1768, %v3799, %v3511
      %v3833 = vsel %vm1768, %v3801, %v3513
      %v3835 = vsel %vm1768, %v3803, %v3515
      %v3837 = vsel %vm1801, %v3805, %v3581
      %v3839 = vsel %vm1801, %v3807, %v3583
      %v3841 = vsel %vm1801, %v3809, %v3585
      %v3843 = vsel %vm1801, %v3811, %v3587
      %v3845 = vsel %vm1801, %v3813, %v3589
      %v3847 = vsel %vm1801, %v3815, %v3591
      %v3849 = vsel %vm1801, %v3817, %v3593
      %v3851 = vsel %vm1801, %v3819, %v3595
      %v3853 = vsel %vm1801, %v3821, %v3597
      %v3855 = vsel %vm1801, %v3823, %v3599
      %v3857 = vsel %vm1801, %v3825, %v3601
      %v3859 = vsel %vm1801, %v3827, %v3603
      %v3861 = vsel %vm1801, %v3829, %v3605
      %v3863 = vsel %vm1801, %v3831, %v3607
      %v3865 = vsel %vm1801, %v3833, %v3609
      %v3867 = vsel %vm1801, %v3835, %v3611
      %v3868 = vsel %vm1867, %v3837, 0
      %v3870 = vsel %vm1867, %v3839, 0
      %v3872 = vsel %vm1867, %v3841, 0
      %v3874 = vsel %vm1867, %v3843, 0
      %v3876 = vsel %vm1867, %v3845, 0
      %v3878 = vsel %vm1867, %v3847, 0
      %v3880 = vsel %vm1867, %v3849, 0
      %v3882 = vsel %vm1867, %v3851, 0
      %v3884 = vsel %vm1867, %v3853, 0
      %v3886 = vsel %vm1867, %v3855, 0
      %v3888 = vsel %vm1867, %v3857, 0
      %v3890 = vsel %vm1867, %v3859, 0
      %v3892 = vsel %vm1867, %v3861, 0
      %v3894 = vsel %vm1867, %v3863, 0
      %v3896 = vsel %vm1867, %v3865, 0
      %v3898 = vsel %vm1867, %v3867, 0
      %3900 = vmatprep.subr.bf16.mxu0 0
      %3901 = vmatpush1.bf16.msra.mxu0 0
      %3902 = vmatprep.subr.bf16.mxu0 0
      %3903 = vmatpush1.bf16.msra.mxu0 0
      %3904 = vmatprep.subr.bf16.mxu0 0
      %3905 = vmatpush1.bf16.msra.mxu0 0
      %3906 = vmatprep.subr.bf16.mxu0 0
      %3907 = vmatpush1.bf16.msra.mxu0 %v1902
      %3908 = vmatprep.subr.bf16.mxu0 0
      %3909 = vmatpush1.bf16.msra.mxu0 %v1861
      %3910 = vmatprep.subr.bf16.mxu0 0
      %3911 = vmatpush1.bf16.msra.mxu0 %v1860
      %3912 = vmatprep.subr.bf16.mxu0 0
      %3913 = vmatpush1.bf16.msra.mxu0 %v1859
      %3914 = vmatprep.subr.bf16.mxu0 0
      %3915 = vmatpush1.bf16.msra.mxu0 %v1858
      %3916 = vmatprep.subr.bf16.mxu0 0
      %3917 = vmatpush2.bf16.msra.mxu0 0
      %3918 = vmatprep.subr.bf16.mxu0 0
      %3919 = vmatpush2.bf16.msra.mxu0 0
      %3920 = vmatprep.subr.bf16.mxu0 0
      %3921 = vmatpush2.bf16.msra.mxu0 0
      %3922 = vmatprep.subr.bf16.mxu0 0
      %3923 = vmatpush2.bf16.msra.mxu0 0
      %3924 = vmatprep.subr.bf16.mxu0 0
      %3925 = vmatpush2.bf16.msra.mxu0 0
      %3926 = vmatprep.subr.bf16.mxu0 0
      %3927 = vmatpush2.bf16.msra.mxu0 0
      %3928 = vmatprep.subr.bf16.mxu0 0
      %3929 = vmatpush2.bf16.msra.mxu0 0
      %3930 = vmatprep.subr.bf16.mxu0 0
      %3931 = vmatpush2.bf16.msra.mxu0 0
      %3932 = vmatprep.mubr.bf16.mxu0 0
      %3933 = vmatmul.mubr.bf16.gmra.mxu0 %v3868
      %v3934 = vpop.f32.mrf.mxu0
      %v3935 = vadd.f32 %v1838, %v3934
      %v3936 = vpop.f32.mrf.mxu0
      %v3937 = vpop.f32.mrf.mxu0
      %v3938 = vadd.f32 %v1838, %v3937
      %v3939 = vpop.f32.mrf.mxu0
      %3940 = vmatprep.mubr.bf16.mxu0 0
      %3941 = vmatmul.mubr.bf16.gmra.mxu0 %v3870
      %v3942 = vpop.f32.mrf.mxu0
      %v3943 = vadd.f32 %v1838, %v3942
      %v3944 = vpop.f32.mrf.mxu0
      %v3945 = vpop.f32.mrf.mxu0
      %v3946 = vadd.f32 %v1838, %v3945
      %v3947 = vpop.f32.mrf.mxu0
      %3948 = vmatprep.mubr.bf16.mxu0 0
      %3949 = vmatmul.mubr.bf16.gmra.mxu0 %v3872
      %v3950 = vpop.f32.mrf.mxu0
      %v3951 = vadd.f32 %v1838, %v3950
      %v3952 = vpop.f32.mrf.mxu0
      %v3953 = vpop.f32.mrf.mxu0
      %v3954 = vadd.f32 %v1838, %v3953
      %v3955 = vpop.f32.mrf.mxu0
      %3956 = vmatprep.mubr.bf16.mxu0 0
      %3957 = vmatmul.mubr.bf16.gmra.mxu0 %v3874
      %v3958 = vpop.f32.mrf.mxu0
      %v3959 = vadd.f32 %v1838, %v3958
      %v3960 = vpop.f32.mrf.mxu0
      %v3961 = vpop.f32.mrf.mxu0
      %v3962 = vadd.f32 %v1838, %v3961
      %v3963 = vpop.f32.mrf.mxu0
      %3964 = vmatprep.mubr.bf16.mxu0 0
      %3965 = vmatmul.mubr.bf16.gmra.mxu0 %v3876
      %v3966 = vpop.f32.mrf.mxu0
      %v3967 = vadd.f32 %v1838, %v3966
      %v3968 = vpop.f32.mrf.mxu0
      %v3969 = vpop.f32.mrf.mxu0
      %v3970 = vadd.f32 %v1838, %v3969
      %v3971 = vpop.f32.mrf.mxu0
      %3972 = vmatprep.mubr.bf16.mxu0 0
      %3973 = vmatmul.mubr.bf16.gmra.mxu0 %v3878
      %v3974 = vpop.f32.mrf.mxu0
      %v3975 = vadd.f32 %v1838, %v3974
      %v3976 = vpop.f32.mrf.mxu0
      %v3977 = vpop.f32.mrf.mxu0
      %v3978 = vadd.f32 %v1838, %v3977
      %v3979 = vpop.f32.mrf.mxu0
      %3980 = vmatprep.mubr.bf16.mxu0 0
      %3981 = vmatmul.mubr.bf16.gmra.mxu0 %v3880
      %v3982 = vpop.f32.mrf.mxu0
      %v3983 = vadd.f32 %v1838, %v3982
      %v3984 = vpop.f32.mrf.mxu0
      %v3985 = vpop.f32.mrf.mxu0
      %v3986 = vadd.f32 %v1838, %v3985
      %v3987 = vpop.f32.mrf.mxu0
      %3988 = vmatprep.mubr.bf16.mxu0 0
      %3989 = vmatmul.mubr.bf16.gmra.mxu0 %v3882
      %v3990 = vpop.f32.mrf.mxu0
      %v3991 = vadd.f32 %v1838, %v3990
      %v3992 = vpop.f32.mrf.mxu0
      %v3993 = vpop.f32.mrf.mxu0
      %v3994 = vadd.f32 %v1838, %v3993
      %v3995 = vpop.f32.mrf.mxu0
      %3996 = vmatprep.mubr.bf16.mxu0 0
      %3997 = vmatmul.mubr.bf16.gmra.mxu0 %v3884
      %v3998 = vpop.f32.mrf.mxu0
      %v3999 = vadd.f32 %v1838, %v3998
      %v4000 = vpop.f32.mrf.mxu0
      %v4001 = vpop.f32.mrf.mxu0
      %v4002 = vadd.f32 %v1838, %v4001
      %v4003 = vpop.f32.mrf.mxu0
      %4004 = vmatprep.mubr.bf16.mxu0 0
      %4005 = vmatmul.mubr.bf16.gmra.mxu0 %v3886
      %v4006 = vpop.f32.mrf.mxu0
      %v4007 = vadd.f32 %v1838, %v4006
      %v4008 = vpop.f32.mrf.mxu0
      %v4009 = vpop.f32.mrf.mxu0
      %v4010 = vadd.f32 %v1838, %v4009
      %v4011 = vpop.f32.mrf.mxu0
      %4012 = vmatprep.mubr.bf16.mxu0 0
      %4013 = vmatmul.mubr.bf16.gmra.mxu0 %v3888
      %v4014 = vpop.f32.mrf.mxu0
      %v4015 = vadd.f32 %v1838, %v4014
      %v4016 = vpop.f32.mrf.mxu0
      %v4017 = vpop.f32.mrf.mxu0
      %v4018 = vadd.f32 %v1838, %v4017
      %v4019 = vpop.f32.mrf.mxu0
      %4020 = vmatprep.mubr.bf16.mxu0 0
      %4021 = vmatmul.mubr.bf16.gmra.mxu0 %v3890
      %v4022 = vpop.f32.mrf.mxu0
      %v4023 = vadd.f32 %v1838, %v4022
      %v4024 = vpop.f32.mrf.mxu0
      %v4025 = vpop.f32.mrf.mxu0
      %v4026 = vadd.f32 %v1838, %v4025
      %v4027 = vpop.f32.mrf.mxu0
      %4028 = vmatprep.mubr.bf16.mxu0 0
      %4029 = vmatmul.mubr.bf16.gmra.mxu0 %v3892
      %v4030 = vpop.f32.mrf.mxu0
      %v4031 = vadd.f32 %v1838, %v4030
      %v4032 = vpop.f32.mrf.mxu0
      %v4033 = vpop.f32.mrf.mxu0
      %v4034 = vadd.f32 %v1838, %v4033
      %v4035 = vpop.f32.mrf.mxu0
      %4036 = vmatprep.mubr.bf16.mxu0 0
      %4037 = vmatmul.mubr.bf16.gmra.mxu0 %v3894
      %v4038 = vpop.f32.mrf.mxu0
      %v4039 = vadd.f32 %v1838, %v4038
      %v4040 = vpop.f32.mrf.mxu0
      %v4041 = vpop.f32.mrf.mxu0
      %v4042 = vadd.f32 %v1838, %v4041
      %v4043 = vpop.f32.mrf.mxu0
      %4044 = vmatprep.mubr.bf16.mxu0 0
      %4045 = vmatmul.mubr.bf16.gmra.mxu0 %v3896
      %v4046 = vpop.f32.mrf.mxu0
      %v4047 = vadd.f32 %v1838, %v4046
      %v4048 = vpop.f32.mrf.mxu0
      %v4049 = vpop.f32.mrf.mxu0
      %v4050 = vadd.f32 %v1838, %v4049
      %v4051 = vpop.f32.mrf.mxu0
      %4052 = vmatprep.mubr.bf16.mxu0 0
      %4053 = vmatmul.mubr.bf16.gmra.mxu0 %v3898
      %v4054 = vpop.f32.mrf.mxu0
      %v4055 = vadd.f32 %v1838, %v4054
      %v4056 = vpop.f32.mrf.mxu0
      %v4057 = vpop.f32.mrf.mxu0
      %v4058 = vadd.f32 %v1838, %v4057
      %v4059 = vpop.f32.mrf.mxu0
      %4060 = vdwg.mxu0
      %v4061 = vpack.c.bf16 %v3938, %v3935
      %v4062 = vpack.c.bf16 %v3946, %v3943
      %v4063 = vpack.c.bf16 %v3954, %v3951
      %v4064 = vpack.c.bf16 %v3962, %v3959
      %v4065 = vpack.c.bf16 %v3970, %v3967
      %v4066 = vpack.c.bf16 %v3978, %v3975
      %v4067 = vpack.c.bf16 %v3986, %v3983
      %v4068 = vpack.c.bf16 %v3994, %v3991
      %v4069 = vpack.c.bf16 %v4002, %v3999
      %v4070 = vpack.c.bf16 %v4010, %v4007
      %v4071 = vpack.c.bf16 %v4018, %v4015
      %v4072 = vpack.c.bf16 %v4026, %v4023
      %v4073 = vpack.c.bf16 %v4034, %v4031
      %v4074 = vpack.c.bf16 %v4042, %v4039
      %v4075 = vpack.c.bf16 %v4050, %v4047
      %v4076 = vpack.c.bf16 %v4058, %v4055
      %v4093 = vunpack.c.l.b16 %v4061
      %v4094 = vunpack.c.h.b16 %v4061
      %v4095 = vunpack.c.l.b16 %v4062
      %v4096 = vunpack.c.h.b16 %v4062
      %v4097 = vunpack.c.l.b16 %v4063
      %v4098 = vunpack.c.h.b16 %v4063
      %v4099 = vunpack.c.l.b16 %v4064
      %v4100 = vunpack.c.h.b16 %v4064
      %v4101 = vunpack.c.l.b16 %v4065
      %v4102 = vunpack.c.h.b16 %v4065
      %v4103 = vunpack.c.l.b16 %v4066
      %v4104 = vunpack.c.h.b16 %v4066
      %v4105 = vunpack.c.l.b16 %v4067
      %v4106 = vunpack.c.h.b16 %v4067
      %v4107 = vunpack.c.l.b16 %v4068
      %v4108 = vunpack.c.h.b16 %v4068
      %v4109 = vunpack.c.l.b16 %v4069
      %v4110 = vunpack.c.h.b16 %v4069
      %v4111 = vunpack.c.l.b16 %v4070
      %v4112 = vunpack.c.h.b16 %v4070
      %v4113 = vunpack.c.l.b16 %v4071
      %v4114 = vunpack.c.h.b16 %v4071
      %v4115 = vunpack.c.l.b16 %v4072
      %v4116 = vunpack.c.h.b16 %v4072
      %v4117 = vunpack.c.l.b16 %v4073
      %v4118 = vunpack.c.h.b16 %v4073
      %v4119 = vunpack.c.l.b16 %v4074
      %v4120 = vunpack.c.h.b16 %v4074
      %v4121 = vunpack.c.l.b16 %v4075
      %v4122 = vunpack.c.h.b16 %v4075
      %v4123 = vunpack.c.l.b16 %v4076
      %v4124 = vunpack.c.h.b16 %v4076
      %v4125 = vpack.c.b16 %v4093, %v4093
      %v4126 = vpack.c.b16 %v4094, %v4094
      %v4127 = vpack.c.b16 %v4095, %v4095
      %v4128 = vpack.c.b16 %v4096, %v4096
      %v4129 = vpack.c.b16 %v4097, %v4097
      %v4130 = vpack.c.b16 %v4098, %v4098
      %v4131 = vpack.c.b16 %v4099, %v4099
      %v4132 = vpack.c.b16 %v4100, %v4100
      %v4133 = vpack.c.b16 %v4101, %v4101
      %v4134 = vpack.c.b16 %v4102, %v4102
      %v4135 = vpack.c.b16 %v4103, %v4103
      %v4136 = vpack.c.b16 %v4104, %v4104
      %v4137 = vpack.c.b16 %v4105, %v4105
      %v4138 = vpack.c.b16 %v4106, %v4106
      %v4139 = vpack.c.b16 %v4107, %v4107
      %v4140 = vpack.c.b16 %v4108, %v4108
      %v4141 = vpack.c.b16 %v4109, %v4109
      %v4142 = vpack.c.b16 %v4110, %v4110
      %v4143 = vpack.c.b16 %v4111, %v4111
      %v4144 = vpack.c.b16 %v4112, %v4112
      %v4145 = vpack.c.b16 %v4113, %v4113
      %v4146 = vpack.c.b16 %v4114, %v4114
      %v4147 = vpack.c.b16 %v4115, %v4115
      %v4148 = vpack.c.b16 %v4116, %v4116
      %v4149 = vpack.c.b16 %v4117, %v4117
      %v4150 = vpack.c.b16 %v4118, %v4118
      %v4151 = vpack.c.b16 %v4119, %v4119
      %v4152 = vpack.c.b16 %v4120, %v4120
      %v4153 = vpack.c.b16 %v4121, %v4121
      %v4154 = vpack.c.b16 %v4122, %v4122
      %v4155 = vpack.c.b16 %v4123, %v4123
      %v4156 = vpack.c.b16 %v4124, %v4124
      %s4189 = scalar_lea.vmem %s170, 128
      %4190 = vst [vmem:[%s4189] sm:$0xf] %v4125
      %4191 = vst [vmem:[%s4189 + $0x4] sm:$0xf] %v4126
      %4192 = vst [vmem:[%s4189 + $0x8] sm:$0xf] %v4127
      %4193 = vst [vmem:[%s4189 + $0xc] sm:$0xf] %v4128
      %4194 = vst [vmem:[%s4189 + $0x10] sm:$0xf] %v4129
      %4195 = vst [vmem:[%s4189 + $0x14] sm:$0xf] %v4130
      %4196 = vst [vmem:[%s4189 + $0x18] sm:$0xf] %v4131
      %4197 = vst [vmem:[%s4189 + $0x1c] sm:$0xf] %v4132
      %4198 = vst [vmem:[%s4189 + $0x20] sm:$0xf] %v4133
      %4199 = vst [vmem:[%s4189 + $0x24] sm:$0xf] %v4134
      %4200 = vst [vmem:[%s4189 + $0x28] sm:$0xf] %v4135
      %4201 = vst [vmem:[%s4189 + $0x2c] sm:$0xf] %v4136
      %4202 = vst [vmem:[%s4189 + $0x30] sm:$0xf] %v4137
      %4203 = vst [vmem:[%s4189 + $0x34] sm:$0xf] %v4138
      %4204 = vst [vmem:[%s4189 + $0x38] sm:$0xf] %v4139
      %4205 = vst [vmem:[%s4189 + $0x3c] sm:$0xf] %v4140
      %4206 = vst [vmem:[%s4189 + $0x40] sm:$0xf] %v4141
      %4207 = vst [vmem:[%s4189 + $0x44] sm:$0xf] %v4142
      %4208 = vst [vmem:[%s4189 + $0x48] sm:$0xf] %v4143
      %4209 = vst [vmem:[%s4189 + $0x4c] sm:$0xf] %v4144
      %4210 = vst [vmem:[%s4189 + $0x50] sm:$0xf] %v4145
      %4211 = vst [vmem:[%s4189 + $0x54] sm:$0xf] %v4146
      %4212 = vst [vmem:[%s4189 + $0x58] sm:$0xf] %v4147
      %4213 = vst [vmem:[%s4189 + $0x5c] sm:$0xf] %v4148
      %4214 = vst [vmem:[%s4189 + $0x60] sm:$0xf] %v4149
      %4215 = vst [vmem:[%s4189 + $0x64] sm:$0xf] %v4150
      %4216 = vst [vmem:[%s4189 + $0x68] sm:$0xf] %v4151
      %4217 = vst [vmem:[%s4189 + $0x6c] sm:$0xf] %v4152
      %4218 = vst [vmem:[%s4189 + $0x70] sm:$0xf] %v4153
      %4219 = vst [vmem:[%s4189 + $0x74] sm:$0xf] %v4154
      %4220 = vst [vmem:[%s4189 + $0x78] sm:$0xf] %v4155
      %4221 = vst [vmem:[%s4189 + $0x7c] sm:$0xf] %v4156
      %p4222 = scmp.lt.s32.totalorder %s14, 3
      %s4223 = scalar_select %p4222, %s14, 3
      %s4224 = smul.addr %s4223, 64
      %s4225 = smul.addr %s4224, 4
      %s4226 = scalar_lea.vmem %s3, %s4225
      // Predicated region
      $region33: #{upsample_conv_forward.1} parent=31 // pred_check
        %p4227 = pneg %p100
      $region34: #{upsample_conv_forward.1} parent=31 // pred_check_branch
        %4229 = sbr.rel (%p4227) target = $region36
      $region35: #{upsample_conv_forward.1} parent=31 // pred_region
        _
      $region36: #{upsample_conv_forward.1} parent=31 // pred_fallthru
        _
    $region32: #{upsample_conv_forward.1} parent=5 // pred_fallthru
      _
    %p4230 = scmp.le.s32.totalorder 2, %s9
    // Predicated region
    $region37: #{upsample_conv_forward.1} parent=5 // pred_check
      %p4231 = pneg %p4230
    $region38: #{upsample_conv_forward.1} parent=5 // pred_check_branch
      %4233 = sbr.rel (%p4231) target = $region40
    $region39: #{upsample_conv_forward.1} parent=5 // pred_region
      %s4234 = ssub.s32 %s9, 2
      // Predicated region
      $region41: #{upsample_conv_forward.1} parent=39 // pred_check
        %p4235 = pneg %p106
      $region42: #{upsample_conv_forward.1} parent=39 // pred_check_branch
        %4237 = sbr.rel (%p4235) target = $region44
      $region43: #{upsample_conv_forward.1} parent=39 // pred_region
        %p4238 = scmp.lt.s32.totalorder %s15, 3
        %s4239 = scalar_select %p4238, %s15, 3
        %s4240 = smul.addr %s4239, 64
        %s4241 = smul.addr %s4240, 4
        %s4242 = scalar_lea.vmem %s3, %s4241
      $region44: #{upsample_conv_forward.1} parent=39 // pred_fallthru
        _
    $region40: #{upsample_conv_forward.1} parent=5 // pred_fallthru
      _
  $region6: #{upsample_conv_forward.1} parent=0 // loop_footer
    %s13 = sadd.s32 1, %s9
  $region7: #{upsample_conv_forward.1} parent=0 // loop_footer_branch
    %8 = sbr.rel target = $region3
  $region8: #{upsample_conv_forward.1} parent=0 // loop_exit
    _

</llo_original>
